<compile_context>
chip_gen: v7x
topology: tpu7x:2x2x1
jax: 0.10.0
libtpu: 0.0.40
codegen_flags: <defaults>
</compile_context>

<pallas_src>
import jax
import jax.numpy as jnp
from jax.experimental import pallas as pl
from jax.experimental.pallas import tpu as pltpu

IN_DIM = 32 * 32          # 1024
H1 = 512
H2 = 64
LATENT = 10
LATENT2 = 2 * LATENT      # 20 (raw encoder head width)
LATENT_PAD = 128          # latent path padded to one full lane register

# Batch tile: 256 suits v6e/v7x; drop to 128 on v5e (4x128^2 MXU saturates at 128 rows).
MAX_BLOCK_B = 256


def vae_kernel(
    x_ref, eps_ref,
    w1_ref, b1_ref, w2_ref, b2_ref,                     # encoder trunk
    w3mu_ref, b3mu_ref, w3lv_ref, b3lv_ref,             # encoder heads (padded to 128 lanes)
    w4_ref, b4_ref, w5_ref, b5_ref, w6_ref, b6_ref,     # decoder
    recon_ref, mu_ref, logvar_ref,
):
    # Weights arrive as bf16; matmuls accumulate in f32 on the MXU; epilogues in f32 on VPU/EUP.
    x = x_ref[...].astype(jnp.bfloat16)                                   # (TB, 1024)

    h = jnp.dot(x, w1_ref[...], preferred_element_type=jnp.float32) + b1_ref[...]
    h = jnp.maximum(h, 0.0).astype(jnp.bfloat16)                          # (TB, 512)
    h = jnp.dot(h, w2_ref[...], preferred_element_type=jnp.float32) + b2_ref[...]
    h = jnp.maximum(h, 0.0).astype(jnp.bfloat16)                          # (TB, 64)

    # chunk(encoded, 2, dim=1) done via host-split heads: lane-contiguous, no XLU shuffle.
    mu = jnp.dot(h, w3mu_ref[...], preferred_element_type=jnp.float32) + b3mu_ref[...]
    logvar = jnp.dot(h, w3lv_ref[...], preferred_element_type=jnp.float32) + b3lv_ref[...]
    # (TB, 128) each; lanes 10..127 are exactly zero (zero-padded weights/biases).

    # reparameterize: z = mu + eps * exp(0.5 * logvar)
    std = jnp.exp(0.5 * logvar)
    z = (mu + eps_ref[...] * std).astype(jnp.bfloat16)                    # (TB, 128)

    # decoder (w4 rows 10..127 are zero, so the padded lanes contribute nothing)
    d = jnp.dot(z, w4_ref[...], preferred_element_type=jnp.float32) + b4_ref[...]
    d = jnp.maximum(d, 0.0).astype(jnp.bfloat16)                          # (TB, 64)
    d = jnp.dot(d, w5_ref[...], preferred_element_type=jnp.float32) + b5_ref[...]
    d = jnp.maximum(d, 0.0).astype(jnp.bfloat16)                          # (TB, 512)
    logits = jnp.dot(d, w6_ref[...], preferred_element_type=jnp.float32) + b6_ref[...]

    # sigmoid: exp + approximate reciprocal both land on the (otherwise idle) EUP slot.
    recon_ref[...] = pl.reciprocal(1.0 + jnp.exp(-logits), approx=True)   # (TB, 1024)
    mu_ref[...] = mu
    logvar_ref[...] = logvar


def _block_b(batch):
    b8 = ((batch + 7) // 8) * 8          # f32 sublane tile is 8 rows
    return min(b8, MAX_BLOCK_B)


@jax.jit
def vae_forward(x, eps, kparams):
    """x: (B, 1024) f32, eps: (B, 10) f32, kparams: output of prepare_params()."""
    B = x.shape[0]
    (w1, b1, w2, b2, w3mu, b3mu, w3lv, b3lv, w4, b4, w5, b5, w6, b6) = kparams

    tb = _block_b(B)
    b_pad = ((B + tb - 1) // tb) * tb
    x_p = jnp.pad(x, ((0, b_pad - B), (0, 0)))
    eps_p = jnp.pad(eps, ((0, b_pad - B), (0, LATENT_PAD - LATENT)))

    row = lambda i: (i, 0)       # batch-blocked activations
    const = lambda i: (0, 0)     # weights resident in VMEM across batch tiles

    flops = 2 * b_pad * (IN_DIM * H1 + H1 * H2 + 2 * H2 * LATENT_PAD
                         + LATENT_PAD * H2 + H2 * H1 + H1 * IN_DIM)
    transcendentals = b_pad * (LATENT_PAD + 2 * IN_DIM)
    weight_bytes = sum(int(p.size) * p.dtype.itemsize for p in kparams)
    io_bytes = 4 * (x_p.size + eps_p.size + b_pad * (IN_DIM + 2 * LATENT_PAD))

    recon, mu_p, logvar_p = pl.pallas_call(
        vae_kernel,
        out_shape=(
            jax.ShapeDtypeStruct((b_pad, IN_DIM), jnp.float32),
            jax.ShapeDtypeStruct((b_pad, LATENT_PAD), jnp.float32),
            jax.ShapeDtypeStruct((b_pad, LATENT_PAD), jnp.float32),
        ),
        grid_spec=pltpu.PrefetchScalarGridSpec(
            num_scalar_prefetch=0,
            grid=(b_pad // tb,),
            in_specs=[
                pl.BlockSpec((tb, IN_DIM), row),
                pl.BlockSpec((tb, LATENT_PAD), row),
                pl.BlockSpec((IN_DIM, H1), const), pl.BlockSpec((1, H1), const),
                pl.BlockSpec((H1, H2), const), pl.BlockSpec((1, H2), const),
                pl.BlockSpec((H2, LATENT_PAD), const), pl.BlockSpec((1, LATENT_PAD), const),
                pl.BlockSpec((H2, LATENT_PAD), const), pl.BlockSpec((1, LATENT_PAD), const),
                pl.BlockSpec((LATENT_PAD, H2), const), pl.BlockSpec((1, H2), const),
                pl.BlockSpec((H2, H1), const), pl.BlockSpec((1, H1), const),
                pl.BlockSpec((H1, IN_DIM), const), pl.BlockSpec((1, IN_DIM), const),
            ],
            out_specs=(
                pl.BlockSpec((tb, IN_DIM), row),
                pl.BlockSpec((tb, LATENT_PAD), row),
                pl.BlockSpec((tb, LATENT_PAD), row),
            ),
        ),
        compiler_params=pltpu.CompilerParams(
            dimension_semantics=("parallel",),   # v7x: batch tiles shard across 2 TCs
        ),
        cost_estimate=pl.CostEstimate(
            flops=flops, transcendentals=transcendentals,
            bytes_accessed=weight_bytes + io_bytes),
    )(x_p, eps_p, w1, b1, w2, b2, w3mu, b3mu, w3lv, b3lv, w4, b4, w5, b5, w6, b6)

    return recon[:B], mu_p[:B, :LATENT], logvar_p[:B, :LATENT]


# ------------------------- parameter construction (host side) -------------------------

def init_linear(key, in_dim, out_dim):
    """PyTorch nn.Linear default init: U(-1/sqrt(in), 1/sqrt(in)).
    Weight stored as (in, out) so y = x @ W + b matches x @ W_pt.T + b."""
    kw, kb = jax.random.split(key)
    bound = 1.0 / jnp.sqrt(jnp.float32(in_dim))
    w = jax.random.uniform(kw, (in_dim, out_dim), jnp.float32, -bound, bound)
    b = jax.random.uniform(kb, (1, out_dim), jnp.float32, -bound, bound)
    return w, b


def init_params(key):
    keys = jax.random.split(key, 6)
    w1, b1 = init_linear(keys[0], IN_DIM, H1)     # Linear(1024, 512)
    w2, b2 = init_linear(keys[1], H1, H2)         # Linear(512, 64)
    w3, b3 = init_linear(keys[2], H2, LATENT2)    # Linear(64, 20)
    w4, b4 = init_linear(keys[3], LATENT, H2)     # Linear(10, 64)
    w5, b5 = init_linear(keys[4], H2, H1)         # Linear(64, 512)
    w6, b6 = init_linear(keys[5], H1, IN_DIM)     # Linear(512, 1024)
    return (w1, b1, w2, b2, w3, b3, w4, b4, w5, b5, w6, b6)


def prepare_params(params):
    """Host-side packing for the kernel: split the 20-wide encoder head into mu/logvar
    heads, zero-pad the latent path to 128 lanes, cast weights to bf16 (biases stay f32;
    all matmuls accumulate in f32 on the MXU)."""
    (w1, b1, w2, b2, w3, b3, w4, b4, w5, b5, w6, b6) = params
    bf16 = jnp.bfloat16

    def pad_cols(a, to):
        return jnp.pad(a, ((0, 0), (0, to - a.shape[1])))

    w3mu = pad_cols(w3[:, :LATENT], LATENT_PAD).astype(bf16)
    w3lv = pad_cols(w3[:, LATENT:], LATENT_PAD).astype(bf16)
    b3mu = pad_cols(b3[:, :LATENT], LATENT_PAD)
    b3lv = pad_cols(b3[:, LATENT:], LATENT_PAD)
    w4p = jnp.pad(w4, ((0, LATENT_PAD - LATENT), (0, 0))).astype(bf16)

    return (w1.astype(bf16), b1, w2.astype(bf16), b2,
            w3mu, b3mu, w3lv, b3lv,
            w4p, b4, w5.astype(bf16), b5, w6.astype(bf16), b6)


if __name__ == "__main__":
    key = jax.random.PRNGKey(0)
    k_params, k_x, k_eps = jax.random.split(key, 3)

    B = 8
    params = init_params(k_params)
    kparams = prepare_params(params)
    x = jax.random.uniform(k_x, (B, IN_DIM), jnp.float32)        # flattened 32x32 "images"
    eps = jax.random.normal(k_eps, (B, LATENT), jnp.float32)     # reparameterization noise

    recon, mu, logvar = vae_forward(x, eps, kparams)
    jax.block_until_ready((recon, mu, logvar))

    assert recon.shape == (B, IN_DIM)
    assert mu.shape == (B, LATENT) and logvar.shape == (B, LATENT)

    # Plain-JAX reference with the same bf16-weight / f32-accumulate numerics (exact sigmoid).
    def ref(x, eps, params):
        (w1, b1, w2, b2, w3, b3, w4, b4, w5, b5, w6, b6) = params

        def lin(a, w, b):
            return jnp.dot(a.astype(jnp.bfloat16), w.astype(jnp.bfloat16),
                           preferred_element_type=jnp.float32) + b

        h = jnp.maximum(lin(x, w1, b1), 0.0)
        h = jnp.maximum(lin(h, w2, b2), 0.0)
        enc = lin(h, w3, b3)
        mu_r, lv_r = enc[:, :LATENT], enc[:, LATENT:]
        z = mu_r + eps * jnp.exp(0.5 * lv_r)
        d = jnp.maximum(lin(z, w4, b4), 0.0)
        d = jnp.maximum(lin(d, w5, b5), 0.0)
        return jax.nn.sigmoid(lin(d, w6, b6)), mu_r, lv_r

    r_ref, mu_ref_v, lv_ref_v = ref(x, eps, params)
    assert jnp.allclose(mu, mu_ref_v, atol=1e-3, rtol=1e-3)
    assert jnp.allclose(logvar, lv_ref_v, atol=1e-3, rtol=1e-3)
    # recon uses the EUP approximate reciprocal; allow a slightly looser tolerance.
    assert jnp.allclose(recon, r_ref, atol=1e-2, rtol=1e-2)

    print("KERNEL_OK")
</pallas_src>

<mosaic_0001>
module attributes {stable_mosaic.version = 11 : i64} {
  func.func @vae_kernel(%arg0: i32, %arg1: memref<8x1024xf32, #tpu.memory_space<vmem>>, %arg2: memref<8x128xf32, #tpu.memory_space<vmem>>, %arg3: memref<1024x512xbf16, #tpu.memory_space<vmem>>, %arg4: memref<1x512xf32, #tpu.memory_space<vmem>>, %arg5: memref<512x64xbf16, #tpu.memory_space<vmem>>, %arg6: memref<1x64xf32, #tpu.memory_space<vmem>>, %arg7: memref<64x128xbf16, #tpu.memory_space<vmem>>, %arg8: memref<1x128xf32, #tpu.memory_space<vmem>>, %arg9: memref<64x128xbf16, #tpu.memory_space<vmem>>, %arg10: memref<1x128xf32, #tpu.memory_space<vmem>>, %arg11: memref<128x64xbf16, #tpu.memory_space<vmem>>, %arg12: memref<1x64xf32, #tpu.memory_space<vmem>>, %arg13: memref<64x512xbf16, #tpu.memory_space<vmem>>, %arg14: memref<1x512xf32, #tpu.memory_space<vmem>>, %arg15: memref<512x1024xbf16, #tpu.memory_space<vmem>>, %arg16: memref<1x1024xf32, #tpu.memory_space<vmem>>, %arg17: memref<8x1024xf32, #tpu.memory_space<vmem>>, %arg18: memref<8x128xf32, #tpu.memory_space<vmem>>, %arg19: memref<8x128xf32, #tpu.memory_space<vmem>>) attributes {dimension_semantics = [#tpu.dimension_semantics<parallel>], iteration_bounds = array<i64: 1>, scalar_prefetch = 0 : i64, scratch_operands = 0 : i64, tpu.core_type = #tpu.core_type<tc>, window_params = [{transform_indices = @transform_0, window_bounds = array<i64: 8, 1024>}, {transform_indices = @transform_1, window_bounds = array<i64: 8, 128>}, {pipeline_mode = #tpu.pipeline_mode<synchronous>, transform_indices = @transform_2, window_bounds = array<i64: 1024, 512>}, {pipeline_mode = #tpu.pipeline_mode<synchronous>, transform_indices = @transform_3, window_bounds = array<i64: 1, 512>}, {pipeline_mode = #tpu.pipeline_mode<synchronous>, transform_indices = @transform_4, window_bounds = array<i64: 512, 64>}, {pipeline_mode = #tpu.pipeline_mode<synchronous>, transform_indices = @transform_5, window_bounds = array<i64: 1, 64>}, {pipeline_mode = #tpu.pipeline_mode<synchronous>, transform_indices = @transform_6, window_bounds = array<i64: 64, 128>}, {pipeline_mode = #tpu.pipeline_mode<synchronous>, transform_indices = @transform_7, window_bounds = array<i64: 1, 128>}, {pipeline_mode = #tpu.pipeline_mode<synchronous>, transform_indices = @transform_8, window_bounds = array<i64: 64, 128>}, {pipeline_mode = #tpu.pipeline_mode<synchronous>, transform_indices = @transform_9, window_bounds = array<i64: 1, 128>}, {pipeline_mode = #tpu.pipeline_mode<synchronous>, transform_indices = @transform_10, window_bounds = array<i64: 128, 64>}, {pipeline_mode = #tpu.pipeline_mode<synchronous>, transform_indices = @transform_11, window_bounds = array<i64: 1, 64>}, {pipeline_mode = #tpu.pipeline_mode<synchronous>, transform_indices = @transform_12, window_bounds = array<i64: 64, 512>}, {pipeline_mode = #tpu.pipeline_mode<synchronous>, transform_indices = @transform_13, window_bounds = array<i64: 1, 512>}, {pipeline_mode = #tpu.pipeline_mode<synchronous>, transform_indices = @transform_14, window_bounds = array<i64: 512, 1024>}, {pipeline_mode = #tpu.pipeline_mode<synchronous>, transform_indices = @transform_15, window_bounds = array<i64: 1, 1024>}, {transform_indices = @transform_16, window_bounds = array<i64: 8, 1024>}, {transform_indices = @transform_17, window_bounds = array<i64: 8, 128>}, {transform_indices = @transform_18, window_bounds = array<i64: 8, 128>}]} {
    %c0 = arith.constant 0 : index
    %c0_0 = arith.constant 0 : index
    %0 = vector.load %arg1[%c0, %c0_0] : memref<8x1024xf32, #tpu.memory_space<vmem>>, vector<8x1024xf32>
    %1 = arith.truncf %0 : vector<8x1024xf32> to vector<8x1024xbf16>
    %c0_1 = arith.constant 0 : index
    %c0_2 = arith.constant 0 : index
    %2 = vector.load %arg3[%c0_1, %c0_2] : memref<1024x512xbf16, #tpu.memory_space<vmem>>, vector<1024x512xbf16>
    %cst = arith.constant dense<0.000000e+00> : vector<8x512xf32>
    %3 = tpu.matmul %1, %2, %cst {dimension_numbers = #tpu.dot_dimension_numbers<[1], [0], [0], [1], [0, 0, 1, 1], [], []>} : vector<8x1024xbf16>, vector<1024x512xbf16>, vector<8x512xf32> -> vector<8x512xf32>
    %c0_3 = arith.constant 0 : index
    %c0_4 = arith.constant 0 : index
    %4 = vector.load %arg4[%c0_3, %c0_4] : memref<1x512xf32, #tpu.memory_space<vmem>>, vector<1x512xf32>
    %5 = vector.broadcast %4 : vector<1x512xf32> to vector<8x512xf32>
    %6 = arith.addf %3, %5 : vector<8x512xf32>
    %cst_5 = arith.constant 0.000000e+00 : f32
    %7 = vector.broadcast %cst_5 : f32 to vector<8x512xf32>
    %8 = arith.maximumf %6, %7 : vector<8x512xf32>
    %9 = arith.truncf %8 : vector<8x512xf32> to vector<8x512xbf16>
    %c0_6 = arith.constant 0 : index
    %c0_7 = arith.constant 0 : index
    %10 = vector.load %arg5[%c0_6, %c0_7] : memref<512x64xbf16, #tpu.memory_space<vmem>>, vector<512x64xbf16>
    %cst_8 = arith.constant dense<0.000000e+00> : vector<8x64xf32>
    %11 = tpu.matmul %9, %10, %cst_8 {dimension_numbers = #tpu.dot_dimension_numbers<[1], [0], [0], [1], [0, 0, 1, 1], [], []>} : vector<8x512xbf16>, vector<512x64xbf16>, vector<8x64xf32> -> vector<8x64xf32>
    %c0_9 = arith.constant 0 : index
    %c0_10 = arith.constant 0 : index
    %12 = vector.load %arg6[%c0_9, %c0_10] : memref<1x64xf32, #tpu.memory_space<vmem>>, vector<1x64xf32>
    %13 = vector.broadcast %12 : vector<1x64xf32> to vector<8x64xf32>
    %14 = arith.addf %11, %13 : vector<8x64xf32>
    %cst_11 = arith.constant 0.000000e+00 : f32
    %15 = vector.broadcast %cst_11 : f32 to vector<8x64xf32>
    %16 = arith.maximumf %14, %15 : vector<8x64xf32>
    %17 = arith.truncf %16 : vector<8x64xf32> to vector<8x64xbf16>
    %c0_12 = arith.constant 0 : index
    %c0_13 = arith.constant 0 : index
    %18 = vector.load %arg7[%c0_12, %c0_13] : memref<64x128xbf16, #tpu.memory_space<vmem>>, vector<64x128xbf16>
    %cst_14 = arith.constant dense<0.000000e+00> : vector<8x128xf32>
    %19 = tpu.matmul %17, %18, %cst_14 {dimension_numbers = #tpu.dot_dimension_numbers<[1], [0], [0], [1], [0, 0, 1, 1], [], []>} : vector<8x64xbf16>, vector<64x128xbf16>, vector<8x128xf32> -> vector<8x128xf32>
    %c0_15 = arith.constant 0 : index
    %c0_16 = arith.constant 0 : index
    %20 = vector.load %arg8[%c0_15, %c0_16] : memref<1x128xf32, #tpu.memory_space<vmem>>, vector<1x128xf32>
    %21 = vector.broadcast %20 : vector<1x128xf32> to vector<8x128xf32>
    %22 = arith.addf %19, %21 : vector<8x128xf32>
    %c0_17 = arith.constant 0 : index
    %c0_18 = arith.constant 0 : index
    %23 = vector.load %arg9[%c0_17, %c0_18] : memref<64x128xbf16, #tpu.memory_space<vmem>>, vector<64x128xbf16>
    %cst_19 = arith.constant dense<0.000000e+00> : vector<8x128xf32>
    %24 = tpu.matmul %17, %23, %cst_19 {dimension_numbers = #tpu.dot_dimension_numbers<[1], [0], [0], [1], [0, 0, 1, 1], [], []>} : vector<8x64xbf16>, vector<64x128xbf16>, vector<8x128xf32> -> vector<8x128xf32>
    %c0_20 = arith.constant 0 : index
    %c0_21 = arith.constant 0 : index
    %25 = vector.load %arg10[%c0_20, %c0_21] : memref<1x128xf32, #tpu.memory_space<vmem>>, vector<1x128xf32>
    %26 = vector.broadcast %25 : vector<1x128xf32> to vector<8x128xf32>
    %27 = arith.addf %24, %26 : vector<8x128xf32>
    %cst_22 = arith.constant 5.000000e-01 : f32
    %28 = vector.broadcast %cst_22 : f32 to vector<8x128xf32>
    %29 = arith.mulf %28, %27 : vector<8x128xf32>
    %30 = math.exp %29 : vector<8x128xf32>
    %c0_23 = arith.constant 0 : index
    %c0_24 = arith.constant 0 : index
    %31 = vector.load %arg2[%c0_23, %c0_24] : memref<8x128xf32, #tpu.memory_space<vmem>>, vector<8x128xf32>
    %32 = arith.mulf %31, %30 : vector<8x128xf32>
    %33 = arith.addf %22, %32 : vector<8x128xf32>
    %34 = arith.truncf %33 : vector<8x128xf32> to vector<8x128xbf16>
    %c0_25 = arith.constant 0 : index
    %c0_26 = arith.constant 0 : index
    %35 = vector.load %arg11[%c0_25, %c0_26] : memref<128x64xbf16, #tpu.memory_space<vmem>>, vector<128x64xbf16>
    %cst_27 = arith.constant dense<0.000000e+00> : vector<8x64xf32>
    %36 = tpu.matmul %34, %35, %cst_27 {dimension_numbers = #tpu.dot_dimension_numbers<[1], [0], [0], [1], [0, 0, 1, 1], [], []>} : vector<8x128xbf16>, vector<128x64xbf16>, vector<8x64xf32> -> vector<8x64xf32>
    %c0_28 = arith.constant 0 : index
    %c0_29 = arith.constant 0 : index
    %37 = vector.load %arg12[%c0_28, %c0_29] : memref<1x64xf32, #tpu.memory_space<vmem>>, vector<1x64xf32>
    %38 = vector.broadcast %37 : vector<1x64xf32> to vector<8x64xf32>
    %39 = arith.addf %36, %38 : vector<8x64xf32>
    %cst_30 = arith.constant 0.000000e+00 : f32
    %40 = vector.broadcast %cst_30 : f32 to vector<8x64xf32>
    %41 = arith.maximumf %39, %40 : vector<8x64xf32>
    %42 = arith.truncf %41 : vector<8x64xf32> to vector<8x64xbf16>
    %c0_31 = arith.constant 0 : index
    %c0_32 = arith.constant 0 : index
    %43 = vector.load %arg13[%c0_31, %c0_32] : memref<64x512xbf16, #tpu.memory_space<vmem>>, vector<64x512xbf16>
    %cst_33 = arith.constant dense<0.000000e+00> : vector<8x512xf32>
    %44 = tpu.matmul %42, %43, %cst_33 {dimension_numbers = #tpu.dot_dimension_numbers<[1], [0], [0], [1], [0, 0, 1, 1], [], []>} : vector<8x64xbf16>, vector<64x512xbf16>, vector<8x512xf32> -> vector<8x512xf32>
    %c0_34 = arith.constant 0 : index
    %c0_35 = arith.constant 0 : index
    %45 = vector.load %arg14[%c0_34, %c0_35] : memref<1x512xf32, #tpu.memory_space<vmem>>, vector<1x512xf32>
    %46 = vector.broadcast %45 : vector<1x512xf32> to vector<8x512xf32>
    %47 = arith.addf %44, %46 : vector<8x512xf32>
    %cst_36 = arith.constant 0.000000e+00 : f32
    %48 = vector.broadcast %cst_36 : f32 to vector<8x512xf32>
    %49 = arith.maximumf %47, %48 : vector<8x512xf32>
    %50 = arith.truncf %49 : vector<8x512xf32> to vector<8x512xbf16>
    %c0_37 = arith.constant 0 : index
    %c0_38 = arith.constant 0 : index
    %51 = vector.load %arg15[%c0_37, %c0_38] : memref<512x1024xbf16, #tpu.memory_space<vmem>>, vector<512x1024xbf16>
    %cst_39 = arith.constant dense<0.000000e+00> : vector<8x1024xf32>
    %52 = tpu.matmul %50, %51, %cst_39 {dimension_numbers = #tpu.dot_dimension_numbers<[1], [0], [0], [1], [0, 0, 1, 1], [], []>} : vector<8x512xbf16>, vector<512x1024xbf16>, vector<8x1024xf32> -> vector<8x1024xf32>
    %c0_40 = arith.constant 0 : index
    %c0_41 = arith.constant 0 : index
    %53 = vector.load %arg16[%c0_40, %c0_41] : memref<1x1024xf32, #tpu.memory_space<vmem>>, vector<1x1024xf32>
    %54 = vector.broadcast %53 : vector<1x1024xf32> to vector<8x1024xf32>
    %55 = arith.addf %52, %54 : vector<8x1024xf32>
    %cst_42 = arith.constant 0.000000e+00 : f32
    %56 = vector.broadcast %cst_42 : f32 to vector<8x1024xf32>
    %57 = arith.subf %56, %55 : vector<8x1024xf32>
    %58 = math.exp %57 : vector<8x1024xf32>
    %cst_43 = arith.constant 1.000000e+00 : f32
    %59 = vector.broadcast %cst_43 : f32 to vector<8x1024xf32>
    %60 = arith.addf %59, %58 : vector<8x1024xf32>
    %61 = tpu.reciprocal %60 {approx = true} : vector<8x1024xf32> -> vector<8x1024xf32>
    %c0_44 = arith.constant 0 : index
    %c0_45 = arith.constant 0 : index
    %62 = vector.load %arg17[%c0_44, %c0_45] : memref<8x1024xf32, #tpu.memory_space<vmem>>, vector<8x1024xf32>
    tpu.vector_store %arg17[%c0_44, %c0_45], %61 {strides = array<i32>} : memref<8x1024xf32, #tpu.memory_space<vmem>>, vector<8x1024xf32>,
    %c0_46 = arith.constant 0 : index
    %c0_47 = arith.constant 0 : index
    %63 = vector.load %arg18[%c0_46, %c0_47] : memref<8x128xf32, #tpu.memory_space<vmem>>, vector<8x128xf32>
    tpu.vector_store %arg18[%c0_46, %c0_47], %22 {strides = array<i32>} : memref<8x128xf32, #tpu.memory_space<vmem>>, vector<8x128xf32>,
    %c0_48 = arith.constant 0 : index
    %c0_49 = arith.constant 0 : index
    %64 = vector.load %arg19[%c0_48, %c0_49] : memref<8x128xf32, #tpu.memory_space<vmem>>, vector<8x128xf32>
    tpu.vector_store %arg19[%c0_48, %c0_49], %27 {strides = array<i32>} : memref<8x128xf32, #tpu.memory_space<vmem>>, vector<8x128xf32>,
    return
  }
  func.func @transform_0(%arg0: i32) -> (i32, i32) {
    %c0_i32 = arith.constant 0 : i32
    %c0_i32_0 = arith.constant 0 : i32
    return %arg0, %c0_i32 : i32, i32
  }
  func.func @transform_1(%arg0: i32) -> (i32, i32) {
    %c0_i32 = arith.constant 0 : i32
    %c0_i32_0 = arith.constant 0 : i32
    return %arg0, %c0_i32 : i32, i32
  }
  func.func @transform_2(%arg0: i32) -> (i32, i32) {
    %c0_i32 = arith.constant 0 : i32
    %c0_i32_0 = arith.constant 0 : i32
    %c0_i32_1 = arith.constant 0 : i32
    return %c0_i32, %c0_i32_0 : i32, i32
  }
  func.func @transform_3(%arg0: i32) -> (i32, i32) {
    %c0_i32 = arith.constant 0 : i32
    %c0_i32_0 = arith.constant 0 : i32
    %c0_i32_1 = arith.constant 0 : i32
    return %c0_i32, %c0_i32_0 : i32, i32
  }
  func.func @transform_4(%arg0: i32) -> (i32, i32) {
    %c0_i32 = arith.constant 0 : i32
    %c0_i32_0 = arith.constant 0 : i32
    %c0_i32_1 = arith.constant 0 : i32
    return %c0_i32, %c0_i32_0 : i32, i32
  }
  func.func @transform_5(%arg0: i32) -> (i32, i32) {
    %c0_i32 = arith.constant 0 : i32
    %c0_i32_0 = arith.constant 0 : i32
    %c0_i32_1 = arith.constant 0 : i32
    return %c0_i32, %c0_i32_0 : i32, i32
  }
  func.func @transform_6(%arg0: i32) -> (i32, i32) {
    %c0_i32 = arith.constant 0 : i32
    %c0_i32_0 = arith.constant 0 : i32
    %c0_i32_1 = arith.constant 0 : i32
    return %c0_i32, %c0_i32_0 : i32, i32
  }
  func.func @transform_7(%arg0: i32) -> (i32, i32) {
    %c0_i32 = arith.constant 0 : i32
    %c0_i32_0 = arith.constant 0 : i32
    %c0_i32_1 = arith.constant 0 : i32
    return %c0_i32, %c0_i32_0 : i32, i32
  }
  func.func @transform_8(%arg0: i32) -> (i32, i32) {
    %c0_i32 = arith.constant 0 : i32
    %c0_i32_0 = arith.constant 0 : i32
    %c0_i32_1 = arith.constant 0 : i32
    return %c0_i32, %c0_i32_0 : i32, i32
  }
  func.func @transform_9(%arg0: i32) -> (i32, i32) {
    %c0_i32 = arith.constant 0 : i32
    %c0_i32_0 = arith.constant 0 : i32
    %c0_i32_1 = arith.constant 0 : i32
    return %c0_i32, %c0_i32_0 : i32, i32
  }
  func.func @transform_10(%arg0: i32) -> (i32, i32) {
    %c0_i32 = arith.constant 0 : i32
    %c0_i32_0 = arith.constant 0 : i32
    %c0_i32_1 = arith.constant 0 : i32
    return %c0_i32, %c0_i32_0 : i32, i32
  }
  func.func @transform_11(%arg0: i32) -> (i32, i32) {
    %c0_i32 = arith.constant 0 : i32
    %c0_i32_0 = arith.constant 0 : i32
    %c0_i32_1 = arith.constant 0 : i32
    return %c0_i32, %c0_i32_0 : i32, i32
  }
  func.func @transform_12(%arg0: i32) -> (i32, i32) {
    %c0_i32 = arith.constant 0 : i32
    %c0_i32_0 = arith.constant 0 : i32
    %c0_i32_1 = arith.constant 0 : i32
    return %c0_i32, %c0_i32_0 : i32, i32
  }
  func.func @transform_13(%arg0: i32) -> (i32, i32) {
    %c0_i32 = arith.constant 0 : i32
    %c0_i32_0 = arith.constant 0 : i32
    %c0_i32_1 = arith.constant 0 : i32
    return %c0_i32, %c0_i32_0 : i32, i32
  }
  func.func @transform_14(%arg0: i32) -> (i32, i32) {
    %c0_i32 = arith.constant 0 : i32
    %c0_i32_0 = arith.constant 0 : i32
    %c0_i32_1 = arith.constant 0 : i32
    return %c0_i32, %c0_i32_0 : i32, i32
  }
  func.func @transform_15(%arg0: i32) -> (i32, i32) {
    %c0_i32 = arith.constant 0 : i32
    %c0_i32_0 = arith.constant 0 : i32
    %c0_i32_1 = arith.constant 0 : i32
    return %c0_i32, %c0_i32_0 : i32, i32
  }
  func.func @transform_16(%arg0: i32) -> (i32, i32) {
    %c0_i32 = arith.constant 0 : i32
    %c0_i32_0 = arith.constant 0 : i32
    return %arg0, %c0_i32 : i32, i32
  }
  func.func @transform_17(%arg0: i32) -> (i32, i32) {
    %c0_i32 = arith.constant 0 : i32
    %c0_i32_0 = arith.constant 0 : i32
    return %arg0, %c0_i32 : i32, i32
  }
  func.func @transform_18(%arg0: i32) -> (i32, i32) {
    %c0_i32 = arith.constant 0 : i32
    %c0_i32_0 = arith.constant 0 : i32
    return %arg0, %c0_i32 : i32, i32
  }
}

</mosaic_0001>

<llo_original>
// kernel: vae_forward.1
$region0: #{vae_forward.1}
  #allocation0 [shape = 'u32[]', space=smem, size = 0x4, offset = 0x4, fixed_abs, tag = 'smem constant byte address 0x4 - core index']
  #allocation1 [shape = 'u32[144,128]{1,0:T(1,128)}', space=vmem, size = 0x12000, scoped, tag = 'internal scratch']
  %s0 = inlined_call_operand.vmem [shape: f32[8,1024], index: 0, kind: input, shape index: {}]
  %s1 = inlined_call_operand.vmem [shape: f32[8,128], index: 1, kind: input, shape index: {}]
  %s2 = inlined_call_operand.hbm [shape: bf16[1024,512], index: 2, kind: input, shape index: {}]
  %s3 = inlined_call_operand.vmem [shape: f32[1,512], index: 3, kind: input, shape index: {}]
  %s4 = inlined_call_operand.vmem [shape: bf16[512,64], index: 4, kind: input, shape index: {}]
  %s5 = inlined_call_operand.vmem [shape: f32[1,64], index: 5, kind: input, shape index: {}]
  %s6 = inlined_call_operand.vmem [shape: bf16[64,128], index: 6, kind: input, shape index: {}]
  %s7 = inlined_call_operand.vmem [shape: f32[1,128], index: 7, kind: input, shape index: {}]
  %s8 = inlined_call_operand.vmem [shape: bf16[64,128], index: 8, kind: input, shape index: {}]
  %s9 = inlined_call_operand.vmem [shape: f32[1,128], index: 9, kind: input, shape index: {}]
  %s10 = inlined_call_operand.vmem [shape: bf16[128,64], index: 10, kind: input, shape index: {}]
  %s11 = inlined_call_operand.vmem [shape: f32[1,64], index: 11, kind: input, shape index: {}]
  %s12 = inlined_call_operand.vmem [shape: bf16[64,512], index: 12, kind: input, shape index: {}]
  %s13 = inlined_call_operand.vmem [shape: f32[1,512], index: 13, kind: input, shape index: {}]
  %s14 = inlined_call_operand.hbm [shape: bf16[512,1024], index: 14, kind: input, shape index: {}]
  %s15 = inlined_call_operand.vmem [shape: f32[1,1024], index: 15, kind: input, shape index: {}]
  %s16 = inlined_call_operand.hbm [shape: f32[8,1024], index: 16, kind: output, shape index: {0}]
  %s17 = inlined_call_operand.hbm [shape: f32[8,128], index: 17, kind: output, shape index: {1}]
  %s18 = inlined_call_operand.hbm [shape: f32[8,128], index: 18, kind: output, shape index: {2}]
  %19 = xla_tuple %s16, %s17, %s18
  %s20 = sld [smem:[#allocation0]]
  $region98: #{vae_forward.1} parent=0
    _
  %s22 = ssub.s32 1, %s20
  %s23 = scalar_select 0, %s22, %s20
  $region1: #{vae_forward.1} parent=0
    #allocation2 [shape = 'u8[1048576]{0}', space=vmem, size = 0x100000, scoped, tag = 'input window, operand 2, single buffered']
    #allocation3 [shape = 's32[1]{0}', space=sflag, size = 0x4, scoped, tag = 'scoped memory for vae_forward.1']
    #allocation4 [shape = 's32[1]{0}', space=sflag, size = 0x4, scoped, tag = 'scoped memory for vae_forward.1']
    #allocation5 [shape = 'u8[1048576]{0}', space=vmem, size = 0x100000, scoped, tag = 'input window, operand 14, single buffered']
    #allocation6 [shape = 's32[1]{0}', space=sflag, size = 0x4, scoped, tag = 'scoped memory for vae_forward.1']
    #allocation7 [shape = 'u8[32768]{0}', space=vmem, size = 0x8000, scoped, tag = 'output window, operand 0, single buffered']
    #allocation8 [shape = 'u8[4096]{0}', space=vmem, size = 0x1000, scoped, tag = 'output window, operand 1, single buffered']
    #allocation9 [shape = 's32[1]{0}', space=sflag, size = 0x4, scoped, tag = 'scoped memory for vae_forward.1']
    #allocation10 [shape = 'u8[4096]{0}', space=vmem, size = 0x1000, scoped, tag = 'output window, operand 2, single buffered']
    %24 = vsyncpa [#allocation3], 0
    %25 = vsyncpa [#allocation6], 0
    %26 = vsyncpa [#allocation4], 0
    %27 = vsyncpa [#allocation9], 0
    // Predicated region
    $region2: #{vae_forward.1} parent=1 // pred_check
      _
    $region3: #{vae_forward.1} parent=1 // pred_check_branch
      %29 = sbr.rel (0) target = $region5
    $region4: #{vae_forward.1} parent=1 // pred_region
      _
    $region5: #{vae_forward.1} parent=1 // pred_fallthru
      _
    // Predicated region
    $region6: #{vae_forward.1} parent=1 // pred_check
      _
    $region7: #{vae_forward.1} parent=1 // pred_check_branch
      %31 = sbr.rel (0) target = $region9
    $region8: #{vae_forward.1} parent=1 // pred_region
      _
    $region9: #{vae_forward.1} parent=1 // pred_fallthru
      _
    // Predicated region
    $region10: #{vae_forward.1} parent=1 // pred_check
      _
    $region11: #{vae_forward.1} parent=1 // pred_check_branch
      %33 = sbr.rel (0) target = $region13
    $region12: #{vae_forward.1} parent=1 // pred_region
      %s35 = ssub.s32 32768, 32768
      %36 = vsyncadd [#allocation3], %s35
      %s37 = sshll.u32 [#allocation2], 4
      %s38 = int_to_ptr.vmem [resolvable:$true] %s37
      %43 = dma.hbm_to_vmem [thread:$0]  %s2, 32768, %s38, [#allocation3], 256, 256, 16
    $region13: #{vae_forward.1} parent=1 // pred_fallthru
      _
    // Predicated region
    $region14: #{vae_forward.1} parent=1 // pred_check
      _
    $region15: #{vae_forward.1} parent=1 // pred_check_branch
      %45 = sbr.rel (0) target = $region17
    $region16: #{vae_forward.1} parent=1 // pred_region
      _
    $region17: #{vae_forward.1} parent=1 // pred_fallthru
      _
    // Predicated region
    $region18: #{vae_forward.1} parent=1 // pred_check
      _
    $region19: #{vae_forward.1} parent=1 // pred_check_branch
      %47 = sbr.rel (0) target = $region21
    $region20: #{vae_forward.1} parent=1 // pred_region
      _
    $region21: #{vae_forward.1} parent=1 // pred_fallthru
      _
    // Predicated region
    $region22: #{vae_forward.1} parent=1 // pred_check
      _
    $region23: #{vae_forward.1} parent=1 // pred_check_branch
      %49 = sbr.rel (0) target = $region25
    $region24: #{vae_forward.1} parent=1 // pred_region
      _
    $region25: #{vae_forward.1} parent=1 // pred_fallthru
      _
    // Predicated region
    $region26: #{vae_forward.1} parent=1 // pred_check
      _
    $region27: #{vae_forward.1} parent=1 // pred_check_branch
      %51 = sbr.rel (0) target = $region29
    $region28: #{vae_forward.1} parent=1 // pred_region
      _
    $region29: #{vae_forward.1} parent=1 // pred_fallthru
      _
    // Predicated region
    $region30: #{vae_forward.1} parent=1 // pred_check
      _
    $region31: #{vae_forward.1} parent=1 // pred_check_branch
      %53 = sbr.rel (0) target = $region33
    $region32: #{vae_forward.1} parent=1 // pred_region
      _
    $region33: #{vae_forward.1} parent=1 // pred_fallthru
      _
    // Predicated region
    $region34: #{vae_forward.1} parent=1 // pred_check
      _
    $region35: #{vae_forward.1} parent=1 // pred_check_branch
      %55 = sbr.rel (0) target = $region37
    $region36: #{vae_forward.1} parent=1 // pred_region
      _
    $region37: #{vae_forward.1} parent=1 // pred_fallthru
      _
    // Predicated region
    $region38: #{vae_forward.1} parent=1 // pred_check
      _
    $region39: #{vae_forward.1} parent=1 // pred_check_branch
      %57 = sbr.rel (0) target = $region41
    $region40: #{vae_forward.1} parent=1 // pred_region
      _
    $region41: #{vae_forward.1} parent=1 // pred_fallthru
      _
    // Predicated region
    $region42: #{vae_forward.1} parent=1 // pred_check
      _
    $region43: #{vae_forward.1} parent=1 // pred_check_branch
      %59 = sbr.rel (0) target = $region45
    $region44: #{vae_forward.1} parent=1 // pred_region
      _
    $region45: #{vae_forward.1} parent=1 // pred_fallthru
      _
    // Predicated region
    $region46: #{vae_forward.1} parent=1 // pred_check
      _
    $region47: #{vae_forward.1} parent=1 // pred_check_branch
      %61 = sbr.rel (0) target = $region49
    $region48: #{vae_forward.1} parent=1 // pred_region
      _
    $region49: #{vae_forward.1} parent=1 // pred_fallthru
      _
    // Predicated region
    $region50: #{vae_forward.1} parent=1 // pred_check
      _
    $region51: #{vae_forward.1} parent=1 // pred_check_branch
      %63 = sbr.rel (0) target = $region53
    $region52: #{vae_forward.1} parent=1 // pred_region
      _
    $region53: #{vae_forward.1} parent=1 // pred_fallthru
      _
    // Predicated region
    $region54: #{vae_forward.1} parent=1 // pred_check
      _
    $region55: #{vae_forward.1} parent=1 // pred_check_branch
      %65 = sbr.rel (0) target = $region57
    $region56: #{vae_forward.1} parent=1 // pred_region
      _
    $region57: #{vae_forward.1} parent=1 // pred_fallthru
      _
    // Predicated region
    $region58: #{vae_forward.1} parent=1 // pred_check
      _
    $region59: #{vae_forward.1} parent=1 // pred_check_branch
      %67 = sbr.rel (0) target = $region61
    $region60: #{vae_forward.1} parent=1 // pred_region
      %s69 = ssub.s32 32768, 32768
      %70 = vsyncadd [#allocation6], %s69
      %s71 = sshll.u32 [#allocation5], 4
      %s72 = int_to_ptr.vmem [resolvable:$true] %s71
      %77 = dma.hbm_to_vmem [thread:$0]  %s14, 32768, %s72, [#allocation6], 512, 512, 32
    $region61: #{vae_forward.1} parent=1 // pred_fallthru
      _
    // Predicated region
    $region62: #{vae_forward.1} parent=1 // pred_check
      _
    $region63: #{vae_forward.1} parent=1 // pred_check_branch
      %79 = sbr.rel (0) target = $region65
    $region64: #{vae_forward.1} parent=1 // pred_region
      _
    $region65: #{vae_forward.1} parent=1 // pred_fallthru
      _
    // Predicated region
    $region66: #{vae_forward.1} parent=1 // pred_check
      _
    $region67: #{vae_forward.1} parent=1 // pred_check_branch
      %81 = sbr.rel (0) target = $region69
    $region68: #{vae_forward.1} parent=1 // pred_region
      %82 = dma.done [#allocation3], 32768
    $region69: #{vae_forward.1} parent=1 // pred_fallthru
      _
    // Predicated region
    $region70: #{vae_forward.1} parent=1 // pred_check
      _
    $region71: #{vae_forward.1} parent=1 // pred_check_branch
      %84 = sbr.rel (0) target = $region73
    $region72: #{vae_forward.1} parent=1 // pred_region
      %85 = dma.done [#allocation6], 32768
    $region73: #{vae_forward.1} parent=1 // pred_fallthru
      _
    %v87 = vld [vmem:[%s0] sm:$0xff]
    %v88 = vld [vmem:[%s0 + $0x8] sm:$0xff]
    %v89 = vld [vmem:[%s0 + $0x10] sm:$0xff]
    %v90 = vld [vmem:[%s0 + $0x18] sm:$0xff]
    %v91 = vld [vmem:[%s0 + $0x20] sm:$0xff]
    %v92 = vld [vmem:[%s0 + $0x28] sm:$0xff]
    %v93 = vld [vmem:[%s0 + $0x30] sm:$0xff]
    %v94 = vld [vmem:[%s0 + $0x38] sm:$0xff]
    %v95 = vpack.c.bf16 %v87, %v87
    %v96 = vpack.c.bf16 %v88, %v88
    %v97 = vpack.c.bf16 %v89, %v89
    %v98 = vpack.c.bf16 %v90, %v90
    %v99 = vpack.c.bf16 %v91, %v91
    %v100 = vpack.c.bf16 %v92, %v92
    %v101 = vpack.c.bf16 %v93, %v93
    %v102 = vpack.c.bf16 %v94, %v94
    %v103 = vld [vmem:[#allocation2] sm:$0xff]
    %v104 = vld [vmem:[#allocation2 + $0x8] sm:$0xff]
    %v105 = vld [vmem:[#allocation2 + $0x10] sm:$0xff]
    %v106 = vld [vmem:[#allocation2 + $0x18] sm:$0xff]
    %v107 = vld [vmem:[#allocation2 + $0x20] sm:$0xff]
    %v108 = vld [vmem:[#allocation2 + $0x28] sm:$0xff]
    %v109 = vld [vmem:[#allocation2 + $0x30] sm:$0xff]
    %v110 = vld [vmem:[#allocation2 + $0x38] sm:$0xff]
    %v111 = vld [vmem:[#allocation2 + $0x40] sm:$0xff]
    %v112 = vld [vmem:[#allocation2 + $0x48] sm:$0xff]
    %v113 = vld [vmem:[#allocation2 + $0x50] sm:$0xff]
    %v114 = vld [vmem:[#allocation2 + $0x58] sm:$0xff]
    %v115 = vld [vmem:[#allocation2 + $0x60] sm:$0xff]
    %v116 = vld [vmem:[#allocation2 + $0x68] sm:$0xff]
    %v117 = vld [vmem:[#allocation2 + $0x70] sm:$0xff]
    %v118 = vld [vmem:[#allocation2 + $0x78] sm:$0xff]
    %v119 = vld [vmem:[#allocation2 + $0x80] sm:$0xff]
    %v120 = vld [vmem:[#allocation2 + $0x88] sm:$0xff]
    %v121 = vld [vmem:[#allocation2 + $0x90] sm:$0xff]
    %v122 = vld [vmem:[#allocation2 + $0x98] sm:$0xff]
    %v123 = vld [vmem:[#allocation2 + $0xa0] sm:$0xff]
    %v124 = vld [vmem:[#allocation2 + $0xa8] sm:$0xff]
    %v125 = vld [vmem:[#allocation2 + $0xb0] sm:$0xff]
    %v126 = vld [vmem:[#allocation2 + $0xb8] sm:$0xff]
    %v127 = vld [vmem:[#allocation2 + $0xc0] sm:$0xff]
    %v128 = vld [vmem:[#allocation2 + $0xc8] sm:$0xff]
    %v129 = vld [vmem:[#allocation2 + $0xd0] sm:$0xff]
    %v130 = vld [vmem:[#allocation2 + $0xd8] sm:$0xff]
    %v131 = vld [vmem:[#allocation2 + $0xe0] sm:$0xff]
    %v132 = vld [vmem:[#allocation2 + $0xe8] sm:$0xff]
    %v133 = vld [vmem:[#allocation2 + $0xf0] sm:$0xff]
    %v134 = vld [vmem:[#allocation2 + $0xf8] sm:$0xff]
    %v135 = vld [vmem:[#allocation2 + $0x100] sm:$0xff]
    %v136 = vld [vmem:[#allocation2 + $0x108] sm:$0xff]
    %v137 = vld [vmem:[#allocation2 + $0x110] sm:$0xff]
    %v138 = vld [vmem:[#allocation2 + $0x118] sm:$0xff]
    %v139 = vld [vmem:[#allocation2 + $0x120] sm:$0xff]
    %v140 = vld [vmem:[#allocation2 + $0x128] sm:$0xff]
    %v141 = vld [vmem:[#allocation2 + $0x130] sm:$0xff]
    %v142 = vld [vmem:[#allocation2 + $0x138] sm:$0xff]
    %v143 = vld [vmem:[#allocation2 + $0x140] sm:$0xff]
    %v144 = vld [vmem:[#allocation2 + $0x148] sm:$0xff]
    %v145 = vld [vmem:[#allocation2 + $0x150] sm:$0xff]
    %v146 = vld [vmem:[#allocation2 + $0x158] sm:$0xff]
    %v147 = vld [vmem:[#allocation2 + $0x160] sm:$0xff]
    %v148 = vld [vmem:[#allocation2 + $0x168] sm:$0xff]
    %v149 = vld [vmem:[#allocation2 + $0x170] sm:$0xff]
    %v150 = vld [vmem:[#allocation2 + $0x178] sm:$0xff]
    %v151 = vld [vmem:[#allocation2 + $0x180] sm:$0xff]
    %v152 = vld [vmem:[#allocation2 + $0x188] sm:$0xff]
    %v153 = vld [vmem:[#allocation2 + $0x190] sm:$0xff]
    %v154 = vld [vmem:[#allocation2 + $0x198] sm:$0xff]
    %v155 = vld [vmem:[#allocation2 + $0x1a0] sm:$0xff]
    %v156 = vld [vmem:[#allocation2 + $0x1a8] sm:$0xff]
    %v157 = vld [vmem:[#allocation2 + $0x1b0] sm:$0xff]
    %v158 = vld [vmem:[#allocation2 + $0x1b8] sm:$0xff]
    %v159 = vld [vmem:[#allocation2 + $0x1c0] sm:$0xff]
    %v160 = vld [vmem:[#allocation2 + $0x1c8] sm:$0xff]
    %v161 = vld [vmem:[#allocation2 + $0x1d0] sm:$0xff]
    %v162 = vld [vmem:[#allocation2 + $0x1d8] sm:$0xff]
    %v163 = vld [vmem:[#allocation2 + $0x1e0] sm:$0xff]
    %v164 = vld [vmem:[#allocation2 + $0x1e8] sm:$0xff]
    %v165 = vld [vmem:[#allocation2 + $0x1f0] sm:$0xff]
    %v166 = vld [vmem:[#allocation2 + $0x1f8] sm:$0xff]
    %v167 = vld [vmem:[#allocation2 + $0x200] sm:$0xff]
    %v168 = vld [vmem:[#allocation2 + $0x208] sm:$0xff]
    %v169 = vld [vmem:[#allocation2 + $0x210] sm:$0xff]
    %v170 = vld [vmem:[#allocation2 + $0x218] sm:$0xff]
    %v171 = vld [vmem:[#allocation2 + $0x220] sm:$0xff]
    %v172 = vld [vmem:[#allocation2 + $0x228] sm:$0xff]
    %v173 = vld [vmem:[#allocation2 + $0x230] sm:$0xff]
    %v174 = vld [vmem:[#allocation2 + $0x238] sm:$0xff]
    %v175 = vld [vmem:[#allocation2 + $0x240] sm:$0xff]
    %v176 = vld [vmem:[#allocation2 + $0x248] sm:$0xff]
    %v177 = vld [vmem:[#allocation2 + $0x250] sm:$0xff]
    %v178 = vld [vmem:[#allocation2 + $0x258] sm:$0xff]
    %v179 = vld [vmem:[#allocation2 + $0x260] sm:$0xff]
    %v180 = vld [vmem:[#allocation2 + $0x268] sm:$0xff]
    %v181 = vld [vmem:[#allocation2 + $0x270] sm:$0xff]
    %v182 = vld [vmem:[#allocation2 + $0x278] sm:$0xff]
    %v183 = vld [vmem:[#allocation2 + $0x280] sm:$0xff]
    %v184 = vld [vmem:[#allocation2 + $0x288] sm:$0xff]
    %v185 = vld [vmem:[#allocation2 + $0x290] sm:$0xff]
    %v186 = vld [vmem:[#allocation2 + $0x298] sm:$0xff]
    %v187 = vld [vmem:[#allocation2 + $0x2a0] sm:$0xff]
    %v188 = vld [vmem:[#allocation2 + $0x2a8] sm:$0xff]
    %v189 = vld [vmem:[#allocation2 + $0x2b0] sm:$0xff]
    %v190 = vld [vmem:[#allocation2 + $0x2b8] sm:$0xff]
    %v191 = vld [vmem:[#allocation2 + $0x2c0] sm:$0xff]
    %v192 = vld [vmem:[#allocation2 + $0x2c8] sm:$0xff]
    %v193 = vld [vmem:[#allocation2 + $0x2d0] sm:$0xff]
    %v194 = vld [vmem:[#allocation2 + $0x2d8] sm:$0xff]
    %v195 = vld [vmem:[#allocation2 + $0x2e0] sm:$0xff]
    %v196 = vld [vmem:[#allocation2 + $0x2e8] sm:$0xff]
    %v197 = vld [vmem:[#allocation2 + $0x2f0] sm:$0xff]
    %v198 = vld [vmem:[#allocation2 + $0x2f8] sm:$0xff]
    %v199 = vld [vmem:[#allocation2 + $0x300] sm:$0xff]
    %v200 = vld [vmem:[#allocation2 + $0x308] sm:$0xff]
    %v201 = vld [vmem:[#allocation2 + $0x310] sm:$0xff]
    %v202 = vld [vmem:[#allocation2 + $0x318] sm:$0xff]
    %v203 = vld [vmem:[#allocation2 + $0x320] sm:$0xff]
    %v204 = vld [vmem:[#allocation2 + $0x328] sm:$0xff]
    %v205 = vld [vmem:[#allocation2 + $0x330] sm:$0xff]
    %v206 = vld [vmem:[#allocation2 + $0x338] sm:$0xff]
    %v207 = vld [vmem:[#allocation2 + $0x340] sm:$0xff]
    %v208 = vld [vmem:[#allocation2 + $0x348] sm:$0xff]
    %v209 = vld [vmem:[#allocation2 + $0x350] sm:$0xff]
    %v210 = vld [vmem:[#allocation2 + $0x358] sm:$0xff]
    %v211 = vld [vmem:[#allocation2 + $0x360] sm:$0xff]
    %v212 = vld [vmem:[#allocation2 + $0x368] sm:$0xff]
    %v213 = vld [vmem:[#allocation2 + $0x370] sm:$0xff]
    %v214 = vld [vmem:[#allocation2 + $0x378] sm:$0xff]
    %v215 = vld [vmem:[#allocation2 + $0x380] sm:$0xff]
    %v216 = vld [vmem:[#allocation2 + $0x388] sm:$0xff]
    %v217 = vld [vmem:[#allocation2 + $0x390] sm:$0xff]
    %v218 = vld [vmem:[#allocation2 + $0x398] sm:$0xff]
    %v219 = vld [vmem:[#allocation2 + $0x3a0] sm:$0xff]
    %v220 = vld [vmem:[#allocation2 + $0x3a8] sm:$0xff]
    %v221 = vld [vmem:[#allocation2 + $0x3b0] sm:$0xff]
    %v222 = vld [vmem:[#allocation2 + $0x3b8] sm:$0xff]
    %v223 = vld [vmem:[#allocation2 + $0x3c0] sm:$0xff]
    %v224 = vld [vmem:[#allocation2 + $0x3c8] sm:$0xff]
    %v225 = vld [vmem:[#allocation2 + $0x3d0] sm:$0xff]
    %v226 = vld [vmem:[#allocation2 + $0x3d8] sm:$0xff]
    %v227 = vld [vmem:[#allocation2 + $0x3e0] sm:$0xff]
    %v228 = vld [vmem:[#allocation2 + $0x3e8] sm:$0xff]
    %v229 = vld [vmem:[#allocation2 + $0x3f0] sm:$0xff]
    %v230 = vld [vmem:[#allocation2 + $0x3f8] sm:$0xff]
    %v231 = vld [vmem:[#allocation2 + $0x400] sm:$0xff]
    %v232 = vld [vmem:[#allocation2 + $0x408] sm:$0xff]
    %v233 = vld [vmem:[#allocation2 + $0x410] sm:$0xff]
    %v234 = vld [vmem:[#allocation2 + $0x418] sm:$0xff]
    %v235 = vld [vmem:[#allocation2 + $0x420] sm:$0xff]
    %v236 = vld [vmem:[#allocation2 + $0x428] sm:$0xff]
    %v237 = vld [vmem:[#allocation2 + $0x430] sm:$0xff]
    %v238 = vld [vmem:[#allocation2 + $0x438] sm:$0xff]
    %v239 = vld [vmem:[#allocation2 + $0x440] sm:$0xff]
    %v240 = vld [vmem:[#allocation2 + $0x448] sm:$0xff]
    %v241 = vld [vmem:[#allocation2 + $0x450] sm:$0xff]
    %v242 = vld [vmem:[#allocation2 + $0x458] sm:$0xff]
    %v243 = vld [vmem:[#allocation2 + $0x460] sm:$0xff]
    %v244 = vld [vmem:[#allocation2 + $0x468] sm:$0xff]
    %v245 = vld [vmem:[#allocation2 + $0x470] sm:$0xff]
    %v246 = vld [vmem:[#allocation2 + $0x478] sm:$0xff]
    %v247 = vld [vmem:[#allocation2 + $0x480] sm:$0xff]
    %v248 = vld [vmem:[#allocation2 + $0x488] sm:$0xff]
    %v249 = vld [vmem:[#allocation2 + $0x490] sm:$0xff]
    %v250 = vld [vmem:[#allocation2 + $0x498] sm:$0xff]
    %v251 = vld [vmem:[#allocation2 + $0x4a0] sm:$0xff]
    %v252 = vld [vmem:[#allocation2 + $0x4a8] sm:$0xff]
    %v253 = vld [vmem:[#allocation2 + $0x4b0] sm:$0xff]
    %v254 = vld [vmem:[#allocation2 + $0x4b8] sm:$0xff]
    %v255 = vld [vmem:[#allocation2 + $0x4c0] sm:$0xff]
    %v256 = vld [vmem:[#allocation2 + $0x4c8] sm:$0xff]
    %v257 = vld [vmem:[#allocation2 + $0x4d0] sm:$0xff]
    %v258 = vld [vmem:[#allocation2 + $0x4d8] sm:$0xff]
    %v259 = vld [vmem:[#allocation2 + $0x4e0] sm:$0xff]
    %v260 = vld [vmem:[#allocation2 + $0x4e8] sm:$0xff]
    %v261 = vld [vmem:[#allocation2 + $0x4f0] sm:$0xff]
    %v262 = vld [vmem:[#allocation2 + $0x4f8] sm:$0xff]
    %v263 = vld [vmem:[#allocation2 + $0x500] sm:$0xff]
    %v264 = vld [vmem:[#allocation2 + $0x508] sm:$0xff]
    %v265 = vld [vmem:[#allocation2 + $0x510] sm:$0xff]
    %v266 = vld [vmem:[#allocation2 + $0x518] sm:$0xff]
    %v267 = vld [vmem:[#allocation2 + $0x520] sm:$0xff]
    %v268 = vld [vmem:[#allocation2 + $0x528] sm:$0xff]
    %v269 = vld [vmem:[#allocation2 + $0x530] sm:$0xff]
    %v270 = vld [vmem:[#allocation2 + $0x538] sm:$0xff]
    %v271 = vld [vmem:[#allocation2 + $0x540] sm:$0xff]
    %v272 = vld [vmem:[#allocation2 + $0x548] sm:$0xff]
    %v273 = vld [vmem:[#allocation2 + $0x550] sm:$0xff]
    %v274 = vld [vmem:[#allocation2 + $0x558] sm:$0xff]
    %v275 = vld [vmem:[#allocation2 + $0x560] sm:$0xff]
    %v276 = vld [vmem:[#allocation2 + $0x568] sm:$0xff]
    %v277 = vld [vmem:[#allocation2 + $0x570] sm:$0xff]
    %v278 = vld [vmem:[#allocation2 + $0x578] sm:$0xff]
    %v279 = vld [vmem:[#allocation2 + $0x580] sm:$0xff]
    %v280 = vld [vmem:[#allocation2 + $0x588] sm:$0xff]
    %v281 = vld [vmem:[#allocation2 + $0x590] sm:$0xff]
    %v282 = vld [vmem:[#allocation2 + $0x598] sm:$0xff]
    %v283 = vld [vmem:[#allocation2 + $0x5a0] sm:$0xff]
    %v284 = vld [vmem:[#allocation2 + $0x5a8] sm:$0xff]
    %v285 = vld [vmem:[#allocation2 + $0x5b0] sm:$0xff]
    %v286 = vld [vmem:[#allocation2 + $0x5b8] sm:$0xff]
    %v287 = vld [vmem:[#allocation2 + $0x5c0] sm:$0xff]
    %v288 = vld [vmem:[#allocation2 + $0x5c8] sm:$0xff]
    %v289 = vld [vmem:[#allocation2 + $0x5d0] sm:$0xff]
    %v290 = vld [vmem:[#allocation2 + $0x5d8] sm:$0xff]
    %v291 = vld [vmem:[#allocation2 + $0x5e0] sm:$0xff]
    %v292 = vld [vmem:[#allocation2 + $0x5e8] sm:$0xff]
    %v293 = vld [vmem:[#allocation2 + $0x5f0] sm:$0xff]
    %v294 = vld [vmem:[#allocation2 + $0x5f8] sm:$0xff]
    %v295 = vld [vmem:[#allocation2 + $0x600] sm:$0xff]
    %v296 = vld [vmem:[#allocation2 + $0x608] sm:$0xff]
    %v297 = vld [vmem:[#allocation2 + $0x610] sm:$0xff]
    %v298 = vld [vmem:[#allocation2 + $0x618] sm:$0xff]
    %v299 = vld [vmem:[#allocation2 + $0x620] sm:$0xff]
    %v300 = vld [vmem:[#allocation2 + $0x628] sm:$0xff]
    %v301 = vld [vmem:[#allocation2 + $0x630] sm:$0xff]
    %v302 = vld [vmem:[#allocation2 + $0x638] sm:$0xff]
    %v303 = vld [vmem:[#allocation2 + $0x640] sm:$0xff]
    %v304 = vld [vmem:[#allocation2 + $0x648] sm:$0xff]
    %v305 = vld [vmem:[#allocation2 + $0x650] sm:$0xff]
    %v306 = vld [vmem:[#allocation2 + $0x658] sm:$0xff]
    %v307 = vld [vmem:[#allocation2 + $0x660] sm:$0xff]
    %v308 = vld [vmem:[#allocation2 + $0x668] sm:$0xff]
    %v309 = vld [vmem:[#allocation2 + $0x670] sm:$0xff]
    %v310 = vld [vmem:[#allocation2 + $0x678] sm:$0xff]
    %v311 = vld [vmem:[#allocation2 + $0x680] sm:$0xff]
    %v312 = vld [vmem:[#allocation2 + $0x688] sm:$0xff]
    %v313 = vld [vmem:[#allocation2 + $0x690] sm:$0xff]
    %v314 = vld [vmem:[#allocation2 + $0x698] sm:$0xff]
    %v315 = vld [vmem:[#allocation2 + $0x6a0] sm:$0xff]
    %v316 = vld [vmem:[#allocation2 + $0x6a8] sm:$0xff]
    %v317 = vld [vmem:[#allocation2 + $0x6b0] sm:$0xff]
    %v318 = vld [vmem:[#allocation2 + $0x6b8] sm:$0xff]
    %v319 = vld [vmem:[#allocation2 + $0x6c0] sm:$0xff]
    %v320 = vld [vmem:[#allocation2 + $0x6c8] sm:$0xff]
    %v321 = vld [vmem:[#allocation2 + $0x6d0] sm:$0xff]
    %v322 = vld [vmem:[#allocation2 + $0x6d8] sm:$0xff]
    %v323 = vld [vmem:[#allocation2 + $0x6e0] sm:$0xff]
    %v324 = vld [vmem:[#allocation2 + $0x6e8] sm:$0xff]
    %v325 = vld [vmem:[#allocation2 + $0x6f0] sm:$0xff]
    %v326 = vld [vmem:[#allocation2 + $0x6f8] sm:$0xff]
    %v327 = vld [vmem:[#allocation2 + $0x700] sm:$0xff]
    %v328 = vld [vmem:[#allocation2 + $0x708] sm:$0xff]
    %v329 = vld [vmem:[#allocation2 + $0x710] sm:$0xff]
    %v330 = vld [vmem:[#allocation2 + $0x718] sm:$0xff]
    %v331 = vld [vmem:[#allocation2 + $0x720] sm:$0xff]
    %v332 = vld [vmem:[#allocation2 + $0x728] sm:$0xff]
    %v333 = vld [vmem:[#allocation2 + $0x730] sm:$0xff]
    %v334 = vld [vmem:[#allocation2 + $0x738] sm:$0xff]
    %v335 = vld [vmem:[#allocation2 + $0x740] sm:$0xff]
    %v336 = vld [vmem:[#allocation2 + $0x748] sm:$0xff]
    %v337 = vld [vmem:[#allocation2 + $0x750] sm:$0xff]
    %v338 = vld [vmem:[#allocation2 + $0x758] sm:$0xff]
    %v339 = vld [vmem:[#allocation2 + $0x760] sm:$0xff]
    %v340 = vld [vmem:[#allocation2 + $0x768] sm:$0xff]
    %v341 = vld [vmem:[#allocation2 + $0x770] sm:$0xff]
    %v342 = vld [vmem:[#allocation2 + $0x778] sm:$0xff]
    %v343 = vld [vmem:[#allocation2 + $0x780] sm:$0xff]
    %v344 = vld [vmem:[#allocation2 + $0x788] sm:$0xff]
    %v345 = vld [vmem:[#allocation2 + $0x790] sm:$0xff]
    %v346 = vld [vmem:[#allocation2 + $0x798] sm:$0xff]
    %v347 = vld [vmem:[#allocation2 + $0x7a0] sm:$0xff]
    %v348 = vld [vmem:[#allocation2 + $0x7a8] sm:$0xff]
    %v349 = vld [vmem:[#allocation2 + $0x7b0] sm:$0xff]
    %v350 = vld [vmem:[#allocation2 + $0x7b8] sm:$0xff]
    %v351 = vld [vmem:[#allocation2 + $0x7c0] sm:$0xff]
    %v352 = vld [vmem:[#allocation2 + $0x7c8] sm:$0xff]
    %v353 = vld [vmem:[#allocation2 + $0x7d0] sm:$0xff]
    %v354 = vld [vmem:[#allocation2 + $0x7d8] sm:$0xff]
    %v355 = vld [vmem:[#allocation2 + $0x7e0] sm:$0xff]
    %v356 = vld [vmem:[#allocation2 + $0x7e8] sm:$0xff]
    %v357 = vld [vmem:[#allocation2 + $0x7f0] sm:$0xff]
    %v358 = vld [vmem:[#allocation2 + $0x7f8] sm:$0xff]
    %v359 = vld [vmem:[%s3] sm:$0xf]
    %v361 = vlaneseq
    %v362 = vshrl.u32 %v361, 7
    %v363 = vsub.s32 0, %v362
    %v364 = vrot.slane %v359, %v363
    %v365 = vlaneseq
    %v366 = vshrl.u32 %v365, 7
    %v367 = vsub.s32 1, %v366
    %v368 = vrot.slane %v359, %v367
    %v369 = vlaneseq
    %v370 = vshrl.u32 %v369, 7
    %v371 = vsub.s32 2, %v370
    %v372 = vrot.slane %v359, %v371
    %v373 = vlaneseq
    %v374 = vshrl.u32 %v373, 7
    %v375 = vsub.s32 3, %v374
    %v376 = vrot.slane %v359, %v375
    %v637 = vunpack.c.l.b16 %v103
    %v638 = vunpack.c.h.b16 %v103
    %v639 = vunpack.c.l.b16 %v104
    %v640 = vunpack.c.h.b16 %v104
    %v641 = vunpack.c.l.b16 %v105
    %v642 = vunpack.c.h.b16 %v105
    %v643 = vunpack.c.l.b16 %v106
    %v644 = vunpack.c.h.b16 %v106
    %v645 = vunpack.c.l.b16 %v107
    %v646 = vunpack.c.h.b16 %v107
    %v647 = vunpack.c.l.b16 %v108
    %v648 = vunpack.c.h.b16 %v108
    %v649 = vunpack.c.l.b16 %v109
    %v650 = vunpack.c.h.b16 %v109
    %v651 = vunpack.c.l.b16 %v110
    %v652 = vunpack.c.h.b16 %v110
    %v653 = vunpack.c.l.b16 %v111
    %v654 = vunpack.c.h.b16 %v111
    %v655 = vunpack.c.l.b16 %v112
    %v656 = vunpack.c.h.b16 %v112
    %v657 = vunpack.c.l.b16 %v113
    %v658 = vunpack.c.h.b16 %v113
    %v659 = vunpack.c.l.b16 %v114
    %v660 = vunpack.c.h.b16 %v114
    %v661 = vunpack.c.l.b16 %v115
    %v662 = vunpack.c.h.b16 %v115
    %v663 = vunpack.c.l.b16 %v116
    %v664 = vunpack.c.h.b16 %v116
    %v665 = vunpack.c.l.b16 %v117
    %v666 = vunpack.c.h.b16 %v117
    %v667 = vunpack.c.l.b16 %v118
    %v668 = vunpack.c.h.b16 %v118
    %v669 = vunpack.c.l.b16 %v119
    %v670 = vunpack.c.h.b16 %v119
    %v671 = vunpack.c.l.b16 %v120
    %v672 = vunpack.c.h.b16 %v120
    %v673 = vunpack.c.l.b16 %v121
    %v674 = vunpack.c.h.b16 %v121
    %v675 = vunpack.c.l.b16 %v122
    %v676 = vunpack.c.h.b16 %v122
    %v677 = vunpack.c.l.b16 %v123
    %v678 = vunpack.c.h.b16 %v123
    %v679 = vunpack.c.l.b16 %v124
    %v680 = vunpack.c.h.b16 %v124
    %v681 = vunpack.c.l.b16 %v125
    %v682 = vunpack.c.h.b16 %v125
    %v683 = vunpack.c.l.b16 %v126
    %v684 = vunpack.c.h.b16 %v126
    %v685 = vunpack.c.l.b16 %v127
    %v686 = vunpack.c.h.b16 %v127
    %v687 = vunpack.c.l.b16 %v128
    %v688 = vunpack.c.h.b16 %v128
    %v689 = vunpack.c.l.b16 %v129
    %v690 = vunpack.c.h.b16 %v129
    %v691 = vunpack.c.l.b16 %v130
    %v692 = vunpack.c.h.b16 %v130
    %v693 = vunpack.c.l.b16 %v131
    %v694 = vunpack.c.h.b16 %v131
    %v695 = vunpack.c.l.b16 %v132
    %v696 = vunpack.c.h.b16 %v132
    %v697 = vunpack.c.l.b16 %v133
    %v698 = vunpack.c.h.b16 %v133
    %v699 = vunpack.c.l.b16 %v134
    %v700 = vunpack.c.h.b16 %v134
    %v701 = vunpack.c.l.b16 %v135
    %v702 = vunpack.c.h.b16 %v135
    %v703 = vunpack.c.l.b16 %v136
    %v704 = vunpack.c.h.b16 %v136
    %v705 = vunpack.c.l.b16 %v137
    %v706 = vunpack.c.h.b16 %v137
    %v707 = vunpack.c.l.b16 %v138
    %v708 = vunpack.c.h.b16 %v138
    %v709 = vunpack.c.l.b16 %v139
    %v710 = vunpack.c.h.b16 %v139
    %v711 = vunpack.c.l.b16 %v140
    %v712 = vunpack.c.h.b16 %v140
    %v713 = vunpack.c.l.b16 %v141
    %v714 = vunpack.c.h.b16 %v141
    %v715 = vunpack.c.l.b16 %v142
    %v716 = vunpack.c.h.b16 %v142
    %v717 = vunpack.c.l.b16 %v143
    %v718 = vunpack.c.h.b16 %v143
    %v719 = vunpack.c.l.b16 %v144
    %v720 = vunpack.c.h.b16 %v144
    %v721 = vunpack.c.l.b16 %v145
    %v722 = vunpack.c.h.b16 %v145
    %v723 = vunpack.c.l.b16 %v146
    %v724 = vunpack.c.h.b16 %v146
    %v725 = vunpack.c.l.b16 %v147
    %v726 = vunpack.c.h.b16 %v147
    %v727 = vunpack.c.l.b16 %v148
    %v728 = vunpack.c.h.b16 %v148
    %v729 = vunpack.c.l.b16 %v149
    %v730 = vunpack.c.h.b16 %v149
    %v731 = vunpack.c.l.b16 %v150
    %v732 = vunpack.c.h.b16 %v150
    %v733 = vunpack.c.l.b16 %v151
    %v734 = vunpack.c.h.b16 %v151
    %v735 = vunpack.c.l.b16 %v152
    %v736 = vunpack.c.h.b16 %v152
    %v737 = vunpack.c.l.b16 %v153
    %v738 = vunpack.c.h.b16 %v153
    %v739 = vunpack.c.l.b16 %v154
    %v740 = vunpack.c.h.b16 %v154
    %v741 = vunpack.c.l.b16 %v155
    %v742 = vunpack.c.h.b16 %v155
    %v743 = vunpack.c.l.b16 %v156
    %v744 = vunpack.c.h.b16 %v156
    %v745 = vunpack.c.l.b16 %v157
    %v746 = vunpack.c.h.b16 %v157
    %v747 = vunpack.c.l.b16 %v158
    %v748 = vunpack.c.h.b16 %v158
    %v749 = vunpack.c.l.b16 %v159
    %v750 = vunpack.c.h.b16 %v159
    %v751 = vunpack.c.l.b16 %v160
    %v752 = vunpack.c.h.b16 %v160
    %v753 = vunpack.c.l.b16 %v161
    %v754 = vunpack.c.h.b16 %v161
    %v755 = vunpack.c.l.b16 %v162
    %v756 = vunpack.c.h.b16 %v162
    %v757 = vunpack.c.l.b16 %v163
    %v758 = vunpack.c.h.b16 %v163
    %v759 = vunpack.c.l.b16 %v164
    %v760 = vunpack.c.h.b16 %v164
    %v761 = vunpack.c.l.b16 %v165
    %v762 = vunpack.c.h.b16 %v165
    %v763 = vunpack.c.l.b16 %v166
    %v764 = vunpack.c.h.b16 %v166
    %v765 = vunpack.c.l.b16 %v167
    %v766 = vunpack.c.h.b16 %v167
    %v767 = vunpack.c.l.b16 %v168
    %v768 = vunpack.c.h.b16 %v168
    %v769 = vunpack.c.l.b16 %v169
    %v770 = vunpack.c.h.b16 %v169
    %v771 = vunpack.c.l.b16 %v170
    %v772 = vunpack.c.h.b16 %v170
    %v773 = vunpack.c.l.b16 %v171
    %v774 = vunpack.c.h.b16 %v171
    %v775 = vunpack.c.l.b16 %v172
    %v776 = vunpack.c.h.b16 %v172
    %v777 = vunpack.c.l.b16 %v173
    %v778 = vunpack.c.h.b16 %v173
    %v779 = vunpack.c.l.b16 %v174
    %v780 = vunpack.c.h.b16 %v174
    %v781 = vunpack.c.l.b16 %v175
    %v782 = vunpack.c.h.b16 %v175
    %v783 = vunpack.c.l.b16 %v176
    %v784 = vunpack.c.h.b16 %v176
    %v785 = vunpack.c.l.b16 %v177
    %v786 = vunpack.c.h.b16 %v177
    %v787 = vunpack.c.l.b16 %v178
    %v788 = vunpack.c.h.b16 %v178
    %v789 = vunpack.c.l.b16 %v179
    %v790 = vunpack.c.h.b16 %v179
    %v791 = vunpack.c.l.b16 %v180
    %v792 = vunpack.c.h.b16 %v180
    %v793 = vunpack.c.l.b16 %v181
    %v794 = vunpack.c.h.b16 %v181
    %v795 = vunpack.c.l.b16 %v182
    %v796 = vunpack.c.h.b16 %v182
    %v797 = vunpack.c.l.b16 %v183
    %v798 = vunpack.c.h.b16 %v183
    %v799 = vunpack.c.l.b16 %v184
    %v800 = vunpack.c.h.b16 %v184
    %v801 = vunpack.c.l.b16 %v185
    %v802 = vunpack.c.h.b16 %v185
    %v803 = vunpack.c.l.b16 %v186
    %v804 = vunpack.c.h.b16 %v186
    %v805 = vunpack.c.l.b16 %v187
    %v806 = vunpack.c.h.b16 %v187
    %v807 = vunpack.c.l.b16 %v188
    %v808 = vunpack.c.h.b16 %v188
    %v809 = vunpack.c.l.b16 %v189
    %v810 = vunpack.c.h.b16 %v189
    %v811 = vunpack.c.l.b16 %v190
    %v812 = vunpack.c.h.b16 %v190
    %v813 = vunpack.c.l.b16 %v191
    %v814 = vunpack.c.h.b16 %v191
    %v815 = vunpack.c.l.b16 %v192
    %v816 = vunpack.c.h.b16 %v192
    %v817 = vunpack.c.l.b16 %v193
    %v818 = vunpack.c.h.b16 %v193
    %v819 = vunpack.c.l.b16 %v194
    %v820 = vunpack.c.h.b16 %v194
    %v821 = vunpack.c.l.b16 %v195
    %v822 = vunpack.c.h.b16 %v195
    %v823 = vunpack.c.l.b16 %v196
    %v824 = vunpack.c.h.b16 %v196
    %v825 = vunpack.c.l.b16 %v197
    %v826 = vunpack.c.h.b16 %v197
    %v827 = vunpack.c.l.b16 %v198
    %v828 = vunpack.c.h.b16 %v198
    %v829 = vunpack.c.l.b16 %v199
    %v830 = vunpack.c.h.b16 %v199
    %v831 = vunpack.c.l.b16 %v200
    %v832 = vunpack.c.h.b16 %v200
    %v833 = vunpack.c.l.b16 %v201
    %v834 = vunpack.c.h.b16 %v201
    %v835 = vunpack.c.l.b16 %v202
    %v836 = vunpack.c.h.b16 %v202
    %v837 = vunpack.c.l.b16 %v203
    %v838 = vunpack.c.h.b16 %v203
    %v839 = vunpack.c.l.b16 %v204
    %v840 = vunpack.c.h.b16 %v204
    %v841 = vunpack.c.l.b16 %v205
    %v842 = vunpack.c.h.b16 %v205
    %v843 = vunpack.c.l.b16 %v206
    %v844 = vunpack.c.h.b16 %v206
    %v845 = vunpack.c.l.b16 %v207
    %v846 = vunpack.c.h.b16 %v207
    %v847 = vunpack.c.l.b16 %v208
    %v848 = vunpack.c.h.b16 %v208
    %v849 = vunpack.c.l.b16 %v209
    %v850 = vunpack.c.h.b16 %v209
    %v851 = vunpack.c.l.b16 %v210
    %v852 = vunpack.c.h.b16 %v210
    %v853 = vunpack.c.l.b16 %v211
    %v854 = vunpack.c.h.b16 %v211
    %v855 = vunpack.c.l.b16 %v212
    %v856 = vunpack.c.h.b16 %v212
    %v857 = vunpack.c.l.b16 %v213
    %v858 = vunpack.c.h.b16 %v213
    %v859 = vunpack.c.l.b16 %v214
    %v860 = vunpack.c.h.b16 %v214
    %v861 = vunpack.c.l.b16 %v215
    %v862 = vunpack.c.h.b16 %v215
    %v863 = vunpack.c.l.b16 %v216
    %v864 = vunpack.c.h.b16 %v216
    %v865 = vunpack.c.l.b16 %v217
    %v866 = vunpack.c.h.b16 %v217
    %v867 = vunpack.c.l.b16 %v218
    %v868 = vunpack.c.h.b16 %v218
    %v869 = vunpack.c.l.b16 %v219
    %v870 = vunpack.c.h.b16 %v219
    %v871 = vunpack.c.l.b16 %v220
    %v872 = vunpack.c.h.b16 %v220
    %v873 = vunpack.c.l.b16 %v221
    %v874 = vunpack.c.h.b16 %v221
    %v875 = vunpack.c.l.b16 %v222
    %v876 = vunpack.c.h.b16 %v222
    %v877 = vunpack.c.l.b16 %v223
    %v878 = vunpack.c.h.b16 %v223
    %v879 = vunpack.c.l.b16 %v224
    %v880 = vunpack.c.h.b16 %v224
    %v881 = vunpack.c.l.b16 %v225
    %v882 = vunpack.c.h.b16 %v225
    %v883 = vunpack.c.l.b16 %v226
    %v884 = vunpack.c.h.b16 %v226
    %v885 = vunpack.c.l.b16 %v227
    %v886 = vunpack.c.h.b16 %v227
    %v887 = vunpack.c.l.b16 %v228
    %v888 = vunpack.c.h.b16 %v228
    %v889 = vunpack.c.l.b16 %v229
    %v890 = vunpack.c.h.b16 %v229
    %v891 = vunpack.c.l.b16 %v230
    %v892 = vunpack.c.h.b16 %v230
    %v893 = vunpack.c.l.b16 %v231
    %v894 = vunpack.c.h.b16 %v231
    %v895 = vunpack.c.l.b16 %v232
    %v896 = vunpack.c.h.b16 %v232
    %v897 = vunpack.c.l.b16 %v233
    %v898 = vunpack.c.h.b16 %v233
    %v899 = vunpack.c.l.b16 %v234
    %v900 = vunpack.c.h.b16 %v234
    %v901 = vunpack.c.l.b16 %v235
    %v902 = vunpack.c.h.b16 %v235
    %v903 = vunpack.c.l.b16 %v236
    %v904 = vunpack.c.h.b16 %v236
    %v905 = vunpack.c.l.b16 %v237
    %v906 = vunpack.c.h.b16 %v237
    %v907 = vunpack.c.l.b16 %v238
    %v908 = vunpack.c.h.b16 %v238
    %v909 = vunpack.c.l.b16 %v239
    %v910 = vunpack.c.h.b16 %v239
    %v911 = vunpack.c.l.b16 %v240
    %v912 = vunpack.c.h.b16 %v240
    %v913 = vunpack.c.l.b16 %v241
    %v914 = vunpack.c.h.b16 %v241
    %v915 = vunpack.c.l.b16 %v242
    %v916 = vunpack.c.h.b16 %v242
    %v917 = vunpack.c.l.b16 %v243
    %v918 = vunpack.c.h.b16 %v243
    %v919 = vunpack.c.l.b16 %v244
    %v920 = vunpack.c.h.b16 %v244
    %v921 = vunpack.c.l.b16 %v245
    %v922 = vunpack.c.h.b16 %v245
    %v923 = vunpack.c.l.b16 %v246
    %v924 = vunpack.c.h.b16 %v246
    %v925 = vunpack.c.l.b16 %v247
    %v926 = vunpack.c.h.b16 %v247
    %v927 = vunpack.c.l.b16 %v248
    %v928 = vunpack.c.h.b16 %v248
    %v929 = vunpack.c.l.b16 %v249
    %v930 = vunpack.c.h.b16 %v249
    %v931 = vunpack.c.l.b16 %v250
    %v932 = vunpack.c.h.b16 %v250
    %v933 = vunpack.c.l.b16 %v251
    %v934 = vunpack.c.h.b16 %v251
    %v935 = vunpack.c.l.b16 %v252
    %v936 = vunpack.c.h.b16 %v252
    %v937 = vunpack.c.l.b16 %v253
    %v938 = vunpack.c.h.b16 %v253
    %v939 = vunpack.c.l.b16 %v254
    %v940 = vunpack.c.h.b16 %v254
    %v941 = vunpack.c.l.b16 %v255
    %v942 = vunpack.c.h.b16 %v255
    %v943 = vunpack.c.l.b16 %v256
    %v944 = vunpack.c.h.b16 %v256
    %v945 = vunpack.c.l.b16 %v257
    %v946 = vunpack.c.h.b16 %v257
    %v947 = vunpack.c.l.b16 %v258
    %v948 = vunpack.c.h.b16 %v258
    %v949 = vunpack.c.l.b16 %v259
    %v950 = vunpack.c.h.b16 %v259
    %v951 = vunpack.c.l.b16 %v260
    %v952 = vunpack.c.h.b16 %v260
    %v953 = vunpack.c.l.b16 %v261
    %v954 = vunpack.c.h.b16 %v261
    %v955 = vunpack.c.l.b16 %v262
    %v956 = vunpack.c.h.b16 %v262
    %v957 = vunpack.c.l.b16 %v263
    %v958 = vunpack.c.h.b16 %v263
    %v959 = vunpack.c.l.b16 %v264
    %v960 = vunpack.c.h.b16 %v264
    %v961 = vunpack.c.l.b16 %v265
    %v962 = vunpack.c.h.b16 %v265
    %v963 = vunpack.c.l.b16 %v266
    %v964 = vunpack.c.h.b16 %v266
    %v965 = vunpack.c.l.b16 %v267
    %v966 = vunpack.c.h.b16 %v267
    %v967 = vunpack.c.l.b16 %v268
    %v968 = vunpack.c.h.b16 %v268
    %v969 = vunpack.c.l.b16 %v269
    %v970 = vunpack.c.h.b16 %v269
    %v971 = vunpack.c.l.b16 %v270
    %v972 = vunpack.c.h.b16 %v270
    %v973 = vunpack.c.l.b16 %v271
    %v974 = vunpack.c.h.b16 %v271
    %v975 = vunpack.c.l.b16 %v272
    %v976 = vunpack.c.h.b16 %v272
    %v977 = vunpack.c.l.b16 %v273
    %v978 = vunpack.c.h.b16 %v273
    %v979 = vunpack.c.l.b16 %v274
    %v980 = vunpack.c.h.b16 %v274
    %v981 = vunpack.c.l.b16 %v275
    %v982 = vunpack.c.h.b16 %v275
    %v983 = vunpack.c.l.b16 %v276
    %v984 = vunpack.c.h.b16 %v276
    %v985 = vunpack.c.l.b16 %v277
    %v986 = vunpack.c.h.b16 %v277
    %v987 = vunpack.c.l.b16 %v278
    %v988 = vunpack.c.h.b16 %v278
    %v989 = vunpack.c.l.b16 %v279
    %v990 = vunpack.c.h.b16 %v279
    %v991 = vunpack.c.l.b16 %v280
    %v992 = vunpack.c.h.b16 %v280
    %v993 = vunpack.c.l.b16 %v281
    %v994 = vunpack.c.h.b16 %v281
    %v995 = vunpack.c.l.b16 %v282
    %v996 = vunpack.c.h.b16 %v282
    %v997 = vunpack.c.l.b16 %v283
    %v998 = vunpack.c.h.b16 %v283
    %v999 = vunpack.c.l.b16 %v284
    %v1000 = vunpack.c.h.b16 %v284
    %v1001 = vunpack.c.l.b16 %v285
    %v1002 = vunpack.c.h.b16 %v285
    %v1003 = vunpack.c.l.b16 %v286
    %v1004 = vunpack.c.h.b16 %v286
    %v1005 = vunpack.c.l.b16 %v287
    %v1006 = vunpack.c.h.b16 %v287
    %v1007 = vunpack.c.l.b16 %v288
    %v1008 = vunpack.c.h.b16 %v288
    %v1009 = vunpack.c.l.b16 %v289
    %v1010 = vunpack.c.h.b16 %v289
    %v1011 = vunpack.c.l.b16 %v290
    %v1012 = vunpack.c.h.b16 %v290
    %v1013 = vunpack.c.l.b16 %v291
    %v1014 = vunpack.c.h.b16 %v291
    %v1015 = vunpack.c.l.b16 %v292
    %v1016 = vunpack.c.h.b16 %v292
    %v1017 = vunpack.c.l.b16 %v293
    %v1018 = vunpack.c.h.b16 %v293
    %v1019 = vunpack.c.l.b16 %v294
    %v1020 = vunpack.c.h.b16 %v294
    %v1021 = vunpack.c.l.b16 %v295
    %v1022 = vunpack.c.h.b16 %v295
    %v1023 = vunpack.c.l.b16 %v296
    %v1024 = vunpack.c.h.b16 %v296
    %v1025 = vunpack.c.l.b16 %v297
    %v1026 = vunpack.c.h.b16 %v297
    %v1027 = vunpack.c.l.b16 %v298
    %v1028 = vunpack.c.h.b16 %v298
    %v1029 = vunpack.c.l.b16 %v299
    %v1030 = vunpack.c.h.b16 %v299
    %v1031 = vunpack.c.l.b16 %v300
    %v1032 = vunpack.c.h.b16 %v300
    %v1033 = vunpack.c.l.b16 %v301
    %v1034 = vunpack.c.h.b16 %v301
    %v1035 = vunpack.c.l.b16 %v302
    %v1036 = vunpack.c.h.b16 %v302
    %v1037 = vunpack.c.l.b16 %v303
    %v1038 = vunpack.c.h.b16 %v303
    %v1039 = vunpack.c.l.b16 %v304
    %v1040 = vunpack.c.h.b16 %v304
    %v1041 = vunpack.c.l.b16 %v305
    %v1042 = vunpack.c.h.b16 %v305
    %v1043 = vunpack.c.l.b16 %v306
    %v1044 = vunpack.c.h.b16 %v306
    %v1045 = vunpack.c.l.b16 %v307
    %v1046 = vunpack.c.h.b16 %v307
    %v1047 = vunpack.c.l.b16 %v308
    %v1048 = vunpack.c.h.b16 %v308
    %v1049 = vunpack.c.l.b16 %v309
    %v1050 = vunpack.c.h.b16 %v309
    %v1051 = vunpack.c.l.b16 %v310
    %v1052 = vunpack.c.h.b16 %v310
    %v1053 = vunpack.c.l.b16 %v311
    %v1054 = vunpack.c.h.b16 %v311
    %v1055 = vunpack.c.l.b16 %v312
    %v1056 = vunpack.c.h.b16 %v312
    %v1057 = vunpack.c.l.b16 %v313
    %v1058 = vunpack.c.h.b16 %v313
    %v1059 = vunpack.c.l.b16 %v314
    %v1060 = vunpack.c.h.b16 %v314
    %v1061 = vunpack.c.l.b16 %v315
    %v1062 = vunpack.c.h.b16 %v315
    %v1063 = vunpack.c.l.b16 %v316
    %v1064 = vunpack.c.h.b16 %v316
    %v1065 = vunpack.c.l.b16 %v317
    %v1066 = vunpack.c.h.b16 %v317
    %v1067 = vunpack.c.l.b16 %v318
    %v1068 = vunpack.c.h.b16 %v318
    %v1069 = vunpack.c.l.b16 %v319
    %v1070 = vunpack.c.h.b16 %v319
    %v1071 = vunpack.c.l.b16 %v320
    %v1072 = vunpack.c.h.b16 %v320
    %v1073 = vunpack.c.l.b16 %v321
    %v1074 = vunpack.c.h.b16 %v321
    %v1075 = vunpack.c.l.b16 %v322
    %v1076 = vunpack.c.h.b16 %v322
    %v1077 = vunpack.c.l.b16 %v323
    %v1078 = vunpack.c.h.b16 %v323
    %v1079 = vunpack.c.l.b16 %v324
    %v1080 = vunpack.c.h.b16 %v324
    %v1081 = vunpack.c.l.b16 %v325
    %v1082 = vunpack.c.h.b16 %v325
    %v1083 = vunpack.c.l.b16 %v326
    %v1084 = vunpack.c.h.b16 %v326
    %v1085 = vunpack.c.l.b16 %v327
    %v1086 = vunpack.c.h.b16 %v327
    %v1087 = vunpack.c.l.b16 %v328
    %v1088 = vunpack.c.h.b16 %v328
    %v1089 = vunpack.c.l.b16 %v329
    %v1090 = vunpack.c.h.b16 %v329
    %v1091 = vunpack.c.l.b16 %v330
    %v1092 = vunpack.c.h.b16 %v330
    %v1093 = vunpack.c.l.b16 %v331
    %v1094 = vunpack.c.h.b16 %v331
    %v1095 = vunpack.c.l.b16 %v332
    %v1096 = vunpack.c.h.b16 %v332
    %v1097 = vunpack.c.l.b16 %v333
    %v1098 = vunpack.c.h.b16 %v333
    %v1099 = vunpack.c.l.b16 %v334
    %v1100 = vunpack.c.h.b16 %v334
    %v1101 = vunpack.c.l.b16 %v335
    %v1102 = vunpack.c.h.b16 %v335
    %v1103 = vunpack.c.l.b16 %v336
    %v1104 = vunpack.c.h.b16 %v336
    %v1105 = vunpack.c.l.b16 %v337
    %v1106 = vunpack.c.h.b16 %v337
    %v1107 = vunpack.c.l.b16 %v338
    %v1108 = vunpack.c.h.b16 %v338
    %v1109 = vunpack.c.l.b16 %v339
    %v1110 = vunpack.c.h.b16 %v339
    %v1111 = vunpack.c.l.b16 %v340
    %v1112 = vunpack.c.h.b16 %v340
    %v1113 = vunpack.c.l.b16 %v341
    %v1114 = vunpack.c.h.b16 %v341
    %v1115 = vunpack.c.l.b16 %v342
    %v1116 = vunpack.c.h.b16 %v342
    %v1117 = vunpack.c.l.b16 %v343
    %v1118 = vunpack.c.h.b16 %v343
    %v1119 = vunpack.c.l.b16 %v344
    %v1120 = vunpack.c.h.b16 %v344
    %v1121 = vunpack.c.l.b16 %v345
    %v1122 = vunpack.c.h.b16 %v345
    %v1123 = vunpack.c.l.b16 %v346
    %v1124 = vunpack.c.h.b16 %v346
    %v1125 = vunpack.c.l.b16 %v347
    %v1126 = vunpack.c.h.b16 %v347
    %v1127 = vunpack.c.l.b16 %v348
    %v1128 = vunpack.c.h.b16 %v348
    %v1129 = vunpack.c.l.b16 %v349
    %v1130 = vunpack.c.h.b16 %v349
    %v1131 = vunpack.c.l.b16 %v350
    %v1132 = vunpack.c.h.b16 %v350
    %v1133 = vunpack.c.l.b16 %v351
    %v1134 = vunpack.c.h.b16 %v351
    %v1135 = vunpack.c.l.b16 %v352
    %v1136 = vunpack.c.h.b16 %v352
    %v1137 = vunpack.c.l.b16 %v353
    %v1138 = vunpack.c.h.b16 %v353
    %v1139 = vunpack.c.l.b16 %v354
    %v1140 = vunpack.c.h.b16 %v354
    %v1141 = vunpack.c.l.b16 %v355
    %v1142 = vunpack.c.h.b16 %v355
    %v1143 = vunpack.c.l.b16 %v356
    %v1144 = vunpack.c.h.b16 %v356
    %v1145 = vunpack.c.l.b16 %v357
    %v1146 = vunpack.c.h.b16 %v357
    %v1147 = vunpack.c.l.b16 %v358
    %v1148 = vunpack.c.h.b16 %v358
    %v1149 = vpack.c.b16 %v641, %v637
    %v1150 = vpack.c.b16 %v642, %v638
    %v1151 = vpack.c.b16 %v643, %v639
    %v1152 = vpack.c.b16 %v644, %v640
    %v1153 = vpack.c.b16 %v649, %v645
    %v1154 = vpack.c.b16 %v650, %v646
    %v1155 = vpack.c.b16 %v651, %v647
    %v1156 = vpack.c.b16 %v652, %v648
    %v1157 = vpack.c.b16 %v657, %v653
    %v1158 = vpack.c.b16 %v658, %v654
    %v1159 = vpack.c.b16 %v659, %v655
    %v1160 = vpack.c.b16 %v660, %v656
    %v1161 = vpack.c.b16 %v665, %v661
    %v1162 = vpack.c.b16 %v666, %v662
    %v1163 = vpack.c.b16 %v667, %v663
    %v1164 = vpack.c.b16 %v668, %v664
    %v1165 = vpack.c.b16 %v673, %v669
    %v1166 = vpack.c.b16 %v674, %v670
    %v1167 = vpack.c.b16 %v675, %v671
    %v1168 = vpack.c.b16 %v676, %v672
    %v1169 = vpack.c.b16 %v681, %v677
    %v1170 = vpack.c.b16 %v682, %v678
    %v1171 = vpack.c.b16 %v683, %v679
    %v1172 = vpack.c.b16 %v684, %v680
    %v1173 = vpack.c.b16 %v689, %v685
    %v1174 = vpack.c.b16 %v690, %v686
    %v1175 = vpack.c.b16 %v691, %v687
    %v1176 = vpack.c.b16 %v692, %v688
    %v1177 = vpack.c.b16 %v697, %v693
    %v1178 = vpack.c.b16 %v698, %v694
    %v1179 = vpack.c.b16 %v699, %v695
    %v1180 = vpack.c.b16 %v700, %v696
    %v1181 = vpack.c.b16 %v705, %v701
    %v1182 = vpack.c.b16 %v706, %v702
    %v1183 = vpack.c.b16 %v707, %v703
    %v1184 = vpack.c.b16 %v708, %v704
    %v1185 = vpack.c.b16 %v713, %v709
    %v1186 = vpack.c.b16 %v714, %v710
    %v1187 = vpack.c.b16 %v715, %v711
    %v1188 = vpack.c.b16 %v716, %v712
    %v1189 = vpack.c.b16 %v721, %v717
    %v1190 = vpack.c.b16 %v722, %v718
    %v1191 = vpack.c.b16 %v723, %v719
    %v1192 = vpack.c.b16 %v724, %v720
    %v1193 = vpack.c.b16 %v729, %v725
    %v1194 = vpack.c.b16 %v730, %v726
    %v1195 = vpack.c.b16 %v731, %v727
    %v1196 = vpack.c.b16 %v732, %v728
    %v1197 = vpack.c.b16 %v737, %v733
    %v1198 = vpack.c.b16 %v738, %v734
    %v1199 = vpack.c.b16 %v739, %v735
    %v1200 = vpack.c.b16 %v740, %v736
    %v1201 = vpack.c.b16 %v745, %v741
    %v1202 = vpack.c.b16 %v746, %v742
    %v1203 = vpack.c.b16 %v747, %v743
    %v1204 = vpack.c.b16 %v748, %v744
    %v1205 = vpack.c.b16 %v753, %v749
    %v1206 = vpack.c.b16 %v754, %v750
    %v1207 = vpack.c.b16 %v755, %v751
    %v1208 = vpack.c.b16 %v756, %v752
    %v1209 = vpack.c.b16 %v761, %v757
    %v1210 = vpack.c.b16 %v762, %v758
    %v1211 = vpack.c.b16 %v763, %v759
    %v1212 = vpack.c.b16 %v764, %v760
    %v1213 = vpack.c.b16 %v769, %v765
    %v1214 = vpack.c.b16 %v770, %v766
    %v1215 = vpack.c.b16 %v771, %v767
    %v1216 = vpack.c.b16 %v772, %v768
    %v1217 = vpack.c.b16 %v777, %v773
    %v1218 = vpack.c.b16 %v778, %v774
    %v1219 = vpack.c.b16 %v779, %v775
    %v1220 = vpack.c.b16 %v780, %v776
    %v1221 = vpack.c.b16 %v785, %v781
    %v1222 = vpack.c.b16 %v786, %v782
    %v1223 = vpack.c.b16 %v787, %v783
    %v1224 = vpack.c.b16 %v788, %v784
    %v1225 = vpack.c.b16 %v793, %v789
    %v1226 = vpack.c.b16 %v794, %v790
    %v1227 = vpack.c.b16 %v795, %v791
    %v1228 = vpack.c.b16 %v796, %v792
    %v1229 = vpack.c.b16 %v801, %v797
    %v1230 = vpack.c.b16 %v802, %v798
    %v1231 = vpack.c.b16 %v803, %v799
    %v1232 = vpack.c.b16 %v804, %v800
    %v1233 = vpack.c.b16 %v809, %v805
    %v1234 = vpack.c.b16 %v810, %v806
    %v1235 = vpack.c.b16 %v811, %v807
    %v1236 = vpack.c.b16 %v812, %v808
    %v1237 = vpack.c.b16 %v817, %v813
    %v1238 = vpack.c.b16 %v818, %v814
    %v1239 = vpack.c.b16 %v819, %v815
    %v1240 = vpack.c.b16 %v820, %v816
    %v1241 = vpack.c.b16 %v825, %v821
    %v1242 = vpack.c.b16 %v826, %v822
    %v1243 = vpack.c.b16 %v827, %v823
    %v1244 = vpack.c.b16 %v828, %v824
    %v1245 = vpack.c.b16 %v833, %v829
    %v1246 = vpack.c.b16 %v834, %v830
    %v1247 = vpack.c.b16 %v835, %v831
    %v1248 = vpack.c.b16 %v836, %v832
    %v1249 = vpack.c.b16 %v841, %v837
    %v1250 = vpack.c.b16 %v842, %v838
    %v1251 = vpack.c.b16 %v843, %v839
    %v1252 = vpack.c.b16 %v844, %v840
    %v1253 = vpack.c.b16 %v849, %v845
    %v1254 = vpack.c.b16 %v850, %v846
    %v1255 = vpack.c.b16 %v851, %v847
    %v1256 = vpack.c.b16 %v852, %v848
    %v1257 = vpack.c.b16 %v857, %v853
    %v1258 = vpack.c.b16 %v858, %v854
    %v1259 = vpack.c.b16 %v859, %v855
    %v1260 = vpack.c.b16 %v860, %v856
    %v1261 = vpack.c.b16 %v865, %v861
    %v1262 = vpack.c.b16 %v866, %v862
    %v1263 = vpack.c.b16 %v867, %v863
    %v1264 = vpack.c.b16 %v868, %v864
    %v1265 = vpack.c.b16 %v873, %v869
    %v1266 = vpack.c.b16 %v874, %v870
    %v1267 = vpack.c.b16 %v875, %v871
    %v1268 = vpack.c.b16 %v876, %v872
    %v1269 = vpack.c.b16 %v881, %v877
    %v1270 = vpack.c.b16 %v882, %v878
    %v1271 = vpack.c.b16 %v883, %v879
    %v1272 = vpack.c.b16 %v884, %v880
    %v1273 = vpack.c.b16 %v889, %v885
    %v1274 = vpack.c.b16 %v890, %v886
    %v1275 = vpack.c.b16 %v891, %v887
    %v1276 = vpack.c.b16 %v892, %v888
    %v1277 = vpack.c.b16 %v897, %v893
    %v1278 = vpack.c.b16 %v898, %v894
    %v1279 = vpack.c.b16 %v899, %v895
    %v1280 = vpack.c.b16 %v900, %v896
    %v1281 = vpack.c.b16 %v905, %v901
    %v1282 = vpack.c.b16 %v906, %v902
    %v1283 = vpack.c.b16 %v907, %v903
    %v1284 = vpack.c.b16 %v908, %v904
    %v1285 = vpack.c.b16 %v913, %v909
    %v1286 = vpack.c.b16 %v914, %v910
    %v1287 = vpack.c.b16 %v915, %v911
    %v1288 = vpack.c.b16 %v916, %v912
    %v1289 = vpack.c.b16 %v921, %v917
    %v1290 = vpack.c.b16 %v922, %v918
    %v1291 = vpack.c.b16 %v923, %v919
    %v1292 = vpack.c.b16 %v924, %v920
    %v1293 = vpack.c.b16 %v929, %v925
    %v1294 = vpack.c.b16 %v930, %v926
    %v1295 = vpack.c.b16 %v931, %v927
    %v1296 = vpack.c.b16 %v932, %v928
    %v1297 = vpack.c.b16 %v937, %v933
    %v1298 = vpack.c.b16 %v938, %v934
    %v1299 = vpack.c.b16 %v939, %v935
    %v1300 = vpack.c.b16 %v940, %v936
    %v1301 = vpack.c.b16 %v945, %v941
    %v1302 = vpack.c.b16 %v946, %v942
    %v1303 = vpack.c.b16 %v947, %v943
    %v1304 = vpack.c.b16 %v948, %v944
    %v1305 = vpack.c.b16 %v953, %v949
    %v1306 = vpack.c.b16 %v954, %v950
    %v1307 = vpack.c.b16 %v955, %v951
    %v1308 = vpack.c.b16 %v956, %v952
    %v1309 = vpack.c.b16 %v961, %v957
    %v1310 = vpack.c.b16 %v962, %v958
    %v1311 = vpack.c.b16 %v963, %v959
    %v1312 = vpack.c.b16 %v964, %v960
    %v1313 = vpack.c.b16 %v969, %v965
    %v1314 = vpack.c.b16 %v970, %v966
    %v1315 = vpack.c.b16 %v971, %v967
    %v1316 = vpack.c.b16 %v972, %v968
    %v1317 = vpack.c.b16 %v977, %v973
    %v1318 = vpack.c.b16 %v978, %v974
    %v1319 = vpack.c.b16 %v979, %v975
    %v1320 = vpack.c.b16 %v980, %v976
    %v1321 = vpack.c.b16 %v985, %v981
    %v1322 = vpack.c.b16 %v986, %v982
    %v1323 = vpack.c.b16 %v987, %v983
    %v1324 = vpack.c.b16 %v988, %v984
    %v1325 = vpack.c.b16 %v993, %v989
    %v1326 = vpack.c.b16 %v994, %v990
    %v1327 = vpack.c.b16 %v995, %v991
    %v1328 = vpack.c.b16 %v996, %v992
    %v1329 = vpack.c.b16 %v1001, %v997
    %v1330 = vpack.c.b16 %v1002, %v998
    %v1331 = vpack.c.b16 %v1003, %v999
    %v1332 = vpack.c.b16 %v1004, %v1000
    %v1333 = vpack.c.b16 %v1009, %v1005
    %v1334 = vpack.c.b16 %v1010, %v1006
    %v1335 = vpack.c.b16 %v1011, %v1007
    %v1336 = vpack.c.b16 %v1012, %v1008
    %v1337 = vpack.c.b16 %v1017, %v1013
    %v1338 = vpack.c.b16 %v1018, %v1014
    %v1339 = vpack.c.b16 %v1019, %v1015
    %v1340 = vpack.c.b16 %v1020, %v1016
    %v1341 = vpack.c.b16 %v1025, %v1021
    %v1342 = vpack.c.b16 %v1026, %v1022
    %v1343 = vpack.c.b16 %v1027, %v1023
    %v1344 = vpack.c.b16 %v1028, %v1024
    %v1345 = vpack.c.b16 %v1033, %v1029
    %v1346 = vpack.c.b16 %v1034, %v1030
    %v1347 = vpack.c.b16 %v1035, %v1031
    %v1348 = vpack.c.b16 %v1036, %v1032
    %v1349 = vpack.c.b16 %v1041, %v1037
    %v1350 = vpack.c.b16 %v1042, %v1038
    %v1351 = vpack.c.b16 %v1043, %v1039
    %v1352 = vpack.c.b16 %v1044, %v1040
    %v1353 = vpack.c.b16 %v1049, %v1045
    %v1354 = vpack.c.b16 %v1050, %v1046
    %v1355 = vpack.c.b16 %v1051, %v1047
    %v1356 = vpack.c.b16 %v1052, %v1048
    %v1357 = vpack.c.b16 %v1057, %v1053
    %v1358 = vpack.c.b16 %v1058, %v1054
    %v1359 = vpack.c.b16 %v1059, %v1055
    %v1360 = vpack.c.b16 %v1060, %v1056
    %v1361 = vpack.c.b16 %v1065, %v1061
    %v1362 = vpack.c.b16 %v1066, %v1062
    %v1363 = vpack.c.b16 %v1067, %v1063
    %v1364 = vpack.c.b16 %v1068, %v1064
    %v1365 = vpack.c.b16 %v1073, %v1069
    %v1366 = vpack.c.b16 %v1074, %v1070
    %v1367 = vpack.c.b16 %v1075, %v1071
    %v1368 = vpack.c.b16 %v1076, %v1072
    %v1369 = vpack.c.b16 %v1081, %v1077
    %v1370 = vpack.c.b16 %v1082, %v1078
    %v1371 = vpack.c.b16 %v1083, %v1079
    %v1372 = vpack.c.b16 %v1084, %v1080
    %v1373 = vpack.c.b16 %v1089, %v1085
    %v1374 = vpack.c.b16 %v1090, %v1086
    %v1375 = vpack.c.b16 %v1091, %v1087
    %v1376 = vpack.c.b16 %v1092, %v1088
    %v1377 = vpack.c.b16 %v1097, %v1093
    %v1378 = vpack.c.b16 %v1098, %v1094
    %v1379 = vpack.c.b16 %v1099, %v1095
    %v1380 = vpack.c.b16 %v1100, %v1096
    %v1381 = vpack.c.b16 %v1105, %v1101
    %v1382 = vpack.c.b16 %v1106, %v1102
    %v1383 = vpack.c.b16 %v1107, %v1103
    %v1384 = vpack.c.b16 %v1108, %v1104
    %v1385 = vpack.c.b16 %v1113, %v1109
    %v1386 = vpack.c.b16 %v1114, %v1110
    %v1387 = vpack.c.b16 %v1115, %v1111
    %v1388 = vpack.c.b16 %v1116, %v1112
    %v1389 = vpack.c.b16 %v1121, %v1117
    %v1390 = vpack.c.b16 %v1122, %v1118
    %v1391 = vpack.c.b16 %v1123, %v1119
    %v1392 = vpack.c.b16 %v1124, %v1120
    %v1393 = vpack.c.b16 %v1129, %v1125
    %v1394 = vpack.c.b16 %v1130, %v1126
    %v1395 = vpack.c.b16 %v1131, %v1127
    %v1396 = vpack.c.b16 %v1132, %v1128
    %v1397 = vpack.c.b16 %v1137, %v1133
    %v1398 = vpack.c.b16 %v1138, %v1134
    %v1399 = vpack.c.b16 %v1139, %v1135
    %v1400 = vpack.c.b16 %v1140, %v1136
    %v1401 = vpack.c.b16 %v1145, %v1141
    %v1402 = vpack.c.b16 %v1146, %v1142
    %v1403 = vpack.c.b16 %v1147, %v1143
    %v1404 = vpack.c.b16 %v1148, %v1144
    %1661 = vmatprep.subr.bf16.mxu0 %v1150
    %1662 = vmatpush1.bf16.msra.mxu0 %v1149
    %1663 = vmatprep.subr.bf16.mxu0 %v1154
    %1664 = vmatpush1.bf16.msra.mxu0 %v1153
    %1665 = vmatprep.subr.bf16.mxu0 %v1158
    %1666 = vmatpush1.bf16.msra.mxu0 %v1157
    %1667 = vmatprep.subr.bf16.mxu0 %v1162
    %1668 = vmatpush1.bf16.msra.mxu0 %v1161
    %1669 = vmatprep.subr.bf16.mxu0 %v1166
    %1670 = vmatpush1.bf16.msra.mxu0 %v1165
    %1671 = vmatprep.subr.bf16.mxu0 %v1170
    %1672 = vmatpush1.bf16.msra.mxu0 %v1169
    %1673 = vmatprep.subr.bf16.mxu0 %v1174
    %1674 = vmatpush1.bf16.msra.mxu0 %v1173
    %1675 = vmatprep.subr.bf16.mxu0 %v1178
    %1676 = vmatpush1.bf16.msra.mxu0 %v1177
    %1677 = vmatprep.subr.bf16.mxu0 %v1182
    %1678 = vmatpush1.bf16.msra.mxu0 %v1181
    %1679 = vmatprep.subr.bf16.mxu0 %v1186
    %1680 = vmatpush1.bf16.msra.mxu0 %v1185
    %1681 = vmatprep.subr.bf16.mxu0 %v1190
    %1682 = vmatpush1.bf16.msra.mxu0 %v1189
    %1683 = vmatprep.subr.bf16.mxu0 %v1194
    %1684 = vmatpush1.bf16.msra.mxu0 %v1193
    %1685 = vmatprep.subr.bf16.mxu0 %v1198
    %1686 = vmatpush1.bf16.msra.mxu0 %v1197
    %1687 = vmatprep.subr.bf16.mxu0 %v1202
    %1688 = vmatpush1.bf16.msra.mxu0 %v1201
    %1689 = vmatprep.subr.bf16.mxu0 %v1206
    %1690 = vmatpush1.bf16.msra.mxu0 %v1205
    %1691 = vmatprep.subr.bf16.mxu0 %v1210
    %1692 = vmatpush1.bf16.msra.mxu0 %v1209
    %1693 = vmatprep.mubr.bf16.mxu0 %v96
    %1694 = vmatmul.mubr.bf16.gmra.mrb[0].mxu0 %v95
    %v1695 = vpop.f32.mrb[0].mxu0
    %v1696 = vadd.f32 %v364, %v1695
    %v1697 = vpop.f32.mrb[0].mxu0
    %v1698 = vadd.f32 %v368, %v1697
    %v1699 = vpop.f32.mrb[0].mxu0
    %v1700 = vpop.f32.mrb[0].mxu0
    %1701 = vdwg.mxu0
    %1702 = vmatprep.subr.bf16.mxu0 %v1214
    %1703 = vmatpush1.bf16.msra.mxu0 %v1213
    %1704 = vmatprep.subr.bf16.mxu0 %v1218
    %1705 = vmatpush1.bf16.msra.mxu0 %v1217
    %1706 = vmatprep.subr.bf16.mxu0 %v1222
    %1707 = vmatpush1.bf16.msra.mxu0 %v1221
    %1708 = vmatprep.subr.bf16.mxu0 %v1226
    %1709 = vmatpush1.bf16.msra.mxu0 %v1225
    %1710 = vmatprep.subr.bf16.mxu0 %v1230
    %1711 = vmatpush1.bf16.msra.mxu0 %v1229
    %1712 = vmatprep.subr.bf16.mxu0 %v1234
    %1713 = vmatpush1.bf16.msra.mxu0 %v1233
    %1714 = vmatprep.subr.bf16.mxu0 %v1238
    %1715 = vmatpush1.bf16.msra.mxu0 %v1237
    %1716 = vmatprep.subr.bf16.mxu0 %v1242
    %1717 = vmatpush1.bf16.msra.mxu0 %v1241
    %1718 = vmatprep.subr.bf16.mxu0 %v1246
    %1719 = vmatpush1.bf16.msra.mxu0 %v1245
    %1720 = vmatprep.subr.bf16.mxu0 %v1250
    %1721 = vmatpush1.bf16.msra.mxu0 %v1249
    %1722 = vmatprep.subr.bf16.mxu0 %v1254
    %1723 = vmatpush1.bf16.msra.mxu0 %v1253
    %1724 = vmatprep.subr.bf16.mxu0 %v1258
    %1725 = vmatpush1.bf16.msra.mxu0 %v1257
    %1726 = vmatprep.subr.bf16.mxu0 %v1262
    %1727 = vmatpush1.bf16.msra.mxu0 %v1261
    %1728 = vmatprep.subr.bf16.mxu0 %v1266
    %1729 = vmatpush1.bf16.msra.mxu0 %v1265
    %1730 = vmatprep.subr.bf16.mxu0 %v1270
    %1731 = vmatpush1.bf16.msra.mxu0 %v1269
    %1732 = vmatprep.subr.bf16.mxu0 %v1274
    %1733 = vmatpush1.bf16.msra.mxu0 %v1273
    %1734 = vmatprep.mubr.bf16.mxu0 %v98
    %1735 = vmatmul.mubr.bf16.gmra.mrb[0].mxu0 %v97
    %v1736 = vpop.f32.mrb[0].mxu0
    %v1737 = vadd.f32 %v1696, %v1736
    %v1738 = vpop.f32.mrb[0].mxu0
    %v1739 = vadd.f32 %v1698, %v1738
    %v1740 = vpop.f32.mrb[0].mxu0
    %v1741 = vpop.f32.mrb[0].mxu0
    %1742 = vdwg.mxu0
    %1743 = vmatprep.subr.bf16.mxu0 %v1278
    %1744 = vmatpush1.bf16.msra.mxu0 %v1277
    %1745 = vmatprep.subr.bf16.mxu0 %v1282
    %1746 = vmatpush1.bf16.msra.mxu0 %v1281
    %1747 = vmatprep.subr.bf16.mxu0 %v1286
    %1748 = vmatpush1.bf16.msra.mxu0 %v1285
    %1749 = vmatprep.subr.bf16.mxu0 %v1290
    %1750 = vmatpush1.bf16.msra.mxu0 %v1289
    %1751 = vmatprep.subr.bf16.mxu0 %v1294
    %1752 = vmatpush1.bf16.msra.mxu0 %v1293
    %1753 = vmatprep.subr.bf16.mxu0 %v1298
    %1754 = vmatpush1.bf16.msra.mxu0 %v1297
    %1755 = vmatprep.subr.bf16.mxu0 %v1302
    %1756 = vmatpush1.bf16.msra.mxu0 %v1301
    %1757 = vmatprep.subr.bf16.mxu0 %v1306
    %1758 = vmatpush1.bf16.msra.mxu0 %v1305
    %1759 = vmatprep.subr.bf16.mxu0 %v1310
    %1760 = vmatpush1.bf16.msra.mxu0 %v1309
    %1761 = vmatprep.subr.bf16.mxu0 %v1314
    %1762 = vmatpush1.bf16.msra.mxu0 %v1313
    %1763 = vmatprep.subr.bf16.mxu0 %v1318
    %1764 = vmatpush1.bf16.msra.mxu0 %v1317
    %1765 = vmatprep.subr.bf16.mxu0 %v1322
    %1766 = vmatpush1.bf16.msra.mxu0 %v1321
    %1767 = vmatprep.subr.bf16.mxu0 %v1326
    %1768 = vmatpush1.bf16.msra.mxu0 %v1325
    %1769 = vmatprep.subr.bf16.mxu0 %v1330
    %1770 = vmatpush1.bf16.msra.mxu0 %v1329
    %1771 = vmatprep.subr.bf16.mxu0 %v1334
    %1772 = vmatpush1.bf16.msra.mxu0 %v1333
    %1773 = vmatprep.subr.bf16.mxu0 %v1338
    %1774 = vmatpush1.bf16.msra.mxu0 %v1337
    %1775 = vmatprep.mubr.bf16.mxu0 %v100
    %1776 = vmatmul.mubr.bf16.gmra.mrb[0].mxu0 %v99
    %v1777 = vpop.f32.mrb[0].mxu0
    %v1778 = vadd.f32 %v1737, %v1777
    %v1779 = vpop.f32.mrb[0].mxu0
    %v1780 = vadd.f32 %v1739, %v1779
    %v1781 = vpop.f32.mrb[0].mxu0
    %v1782 = vpop.f32.mrb[0].mxu0
    %1783 = vdwg.mxu0
    %1784 = vmatprep.subr.bf16.mxu0 %v1342
    %1785 = vmatpush1.bf16.msra.mxu0 %v1341
    %1786 = vmatprep.subr.bf16.mxu0 %v1346
    %1787 = vmatpush1.bf16.msra.mxu0 %v1345
    %1788 = vmatprep.subr.bf16.mxu0 %v1350
    %1789 = vmatpush1.bf16.msra.mxu0 %v1349
    %1790 = vmatprep.subr.bf16.mxu0 %v1354
    %1791 = vmatpush1.bf16.msra.mxu0 %v1353
    %1792 = vmatprep.subr.bf16.mxu0 %v1358
    %1793 = vmatpush1.bf16.msra.mxu0 %v1357
    %1794 = vmatprep.subr.bf16.mxu0 %v1362
    %1795 = vmatpush1.bf16.msra.mxu0 %v1361
    %1796 = vmatprep.subr.bf16.mxu0 %v1366
    %1797 = vmatpush1.bf16.msra.mxu0 %v1365
    %1798 = vmatprep.subr.bf16.mxu0 %v1370
    %1799 = vmatpush1.bf16.msra.mxu0 %v1369
    %1800 = vmatprep.subr.bf16.mxu0 %v1374
    %1801 = vmatpush1.bf16.msra.mxu0 %v1373
    %1802 = vmatprep.subr.bf16.mxu0 %v1378
    %1803 = vmatpush1.bf16.msra.mxu0 %v1377
    %1804 = vmatprep.subr.bf16.mxu0 %v1382
    %1805 = vmatpush1.bf16.msra.mxu0 %v1381
    %1806 = vmatprep.subr.bf16.mxu0 %v1386
    %1807 = vmatpush1.bf16.msra.mxu0 %v1385
    %1808 = vmatprep.subr.bf16.mxu0 %v1390
    %1809 = vmatpush1.bf16.msra.mxu0 %v1389
    %1810 = vmatprep.subr.bf16.mxu0 %v1394
    %1811 = vmatpush1.bf16.msra.mxu0 %v1393
    %1812 = vmatprep.subr.bf16.mxu0 %v1398
    %1813 = vmatpush1.bf16.msra.mxu0 %v1397
    %1814 = vmatprep.subr.bf16.mxu0 %v1402
    %1815 = vmatpush1.bf16.msra.mxu0 %v1401
    %1816 = vmatprep.mubr.bf16.mxu0 %v102
    %1817 = vmatmul.mubr.bf16.gmra.mrb[0].mxu0 %v101
    %v1818 = vpop.f32.mrb[0].mxu0
    %v1819 = vadd.f32 %v1778, %v1818
    %v1820 = vpop.f32.mrb[0].mxu0
    %v1821 = vadd.f32 %v1780, %v1820
    %v1822 = vpop.f32.mrb[0].mxu0
    %v1823 = vpop.f32.mrb[0].mxu0
    %1824 = vdwg.mxu0
    %1825 = vmatprep.subr.bf16.mxu0 %v1152
    %1826 = vmatpush1.bf16.msra.mxu0 %v1151
    %1827 = vmatprep.subr.bf16.mxu0 %v1156
    %1828 = vmatpush1.bf16.msra.mxu0 %v1155
    %1829 = vmatprep.subr.bf16.mxu0 %v1160
    %1830 = vmatpush1.bf16.msra.mxu0 %v1159
    %1831 = vmatprep.subr.bf16.mxu0 %v1164
    %1832 = vmatpush1.bf16.msra.mxu0 %v1163
    %1833 = vmatprep.subr.bf16.mxu0 %v1168
    %1834 = vmatpush1.bf16.msra.mxu0 %v1167
    %1835 = vmatprep.subr.bf16.mxu0 %v1172
    %1836 = vmatpush1.bf16.msra.mxu0 %v1171
    %1837 = vmatprep.subr.bf16.mxu0 %v1176
    %1838 = vmatpush1.bf16.msra.mxu0 %v1175
    %1839 = vmatprep.subr.bf16.mxu0 %v1180
    %1840 = vmatpush1.bf16.msra.mxu0 %v1179
    %1841 = vmatprep.subr.bf16.mxu0 %v1184
    %1842 = vmatpush1.bf16.msra.mxu0 %v1183
    %1843 = vmatprep.subr.bf16.mxu0 %v1188
    %1844 = vmatpush1.bf16.msra.mxu0 %v1187
    %1845 = vmatprep.subr.bf16.mxu0 %v1192
    %1846 = vmatpush1.bf16.msra.mxu0 %v1191
    %1847 = vmatprep.subr.bf16.mxu0 %v1196
    %1848 = vmatpush1.bf16.msra.mxu0 %v1195
    %1849 = vmatprep.subr.bf16.mxu0 %v1200
    %1850 = vmatpush1.bf16.msra.mxu0 %v1199
    %1851 = vmatprep.subr.bf16.mxu0 %v1204
    %1852 = vmatpush1.bf16.msra.mxu0 %v1203
    %1853 = vmatprep.subr.bf16.mxu0 %v1208
    %1854 = vmatpush1.bf16.msra.mxu0 %v1207
    %1855 = vmatprep.subr.bf16.mxu0 %v1212
    %1856 = vmatpush1.bf16.msra.mxu0 %v1211
    %1857 = vmatprep.mubr.bf16.mxu0 %v96
    %1858 = vmatmul.mubr.bf16.gmra.mrb[0].mxu0 %v95
    %v1859 = vpop.f32.mrb[0].mxu0
    %v1860 = vadd.f32 %v372, %v1859
    %v1861 = vpop.f32.mrb[0].mxu0
    %v1862 = vadd.f32 %v376, %v1861
    %v1863 = vpop.f32.mrb[0].mxu0
    %v1864 = vpop.f32.mrb[0].mxu0
    %1865 = vdwg.mxu0
    %1866 = vmatprep.subr.bf16.mxu0 %v1216
    %1867 = vmatpush1.bf16.msra.mxu0 %v1215
    %1868 = vmatprep.subr.bf16.mxu0 %v1220
    %1869 = vmatpush1.bf16.msra.mxu0 %v1219
    %1870 = vmatprep.subr.bf16.mxu0 %v1224
    %1871 = vmatpush1.bf16.msra.mxu0 %v1223
    %1872 = vmatprep.subr.bf16.mxu0 %v1228
    %1873 = vmatpush1.bf16.msra.mxu0 %v1227
    %1874 = vmatprep.subr.bf16.mxu0 %v1232
    %1875 = vmatpush1.bf16.msra.mxu0 %v1231
    %1876 = vmatprep.subr.bf16.mxu0 %v1236
    %1877 = vmatpush1.bf16.msra.mxu0 %v1235
    %1878 = vmatprep.subr.bf16.mxu0 %v1240
    %1879 = vmatpush1.bf16.msra.mxu0 %v1239
    %1880 = vmatprep.subr.bf16.mxu0 %v1244
    %1881 = vmatpush1.bf16.msra.mxu0 %v1243
    %1882 = vmatprep.subr.bf16.mxu0 %v1248
    %1883 = vmatpush1.bf16.msra.mxu0 %v1247
    %1884 = vmatprep.subr.bf16.mxu0 %v1252
    %1885 = vmatpush1.bf16.msra.mxu0 %v1251
    %1886 = vmatprep.subr.bf16.mxu0 %v1256
    %1887 = vmatpush1.bf16.msra.mxu0 %v1255
    %1888 = vmatprep.subr.bf16.mxu0 %v1260
    %1889 = vmatpush1.bf16.msra.mxu0 %v1259
    %1890 = vmatprep.subr.bf16.mxu0 %v1264
    %1891 = vmatpush1.bf16.msra.mxu0 %v1263
    %1892 = vmatprep.subr.bf16.mxu0 %v1268
    %1893 = vmatpush1.bf16.msra.mxu0 %v1267
    %1894 = vmatprep.subr.bf16.mxu0 %v1272
    %1895 = vmatpush1.bf16.msra.mxu0 %v1271
    %1896 = vmatprep.subr.bf16.mxu0 %v1276
    %1897 = vmatpush1.bf16.msra.mxu0 %v1275
    %1898 = vmatprep.mubr.bf16.mxu0 %v98
    %1899 = vmatmul.mubr.bf16.gmra.mrb[0].mxu0 %v97
    %v1900 = vpop.f32.mrb[0].mxu0
    %v1901 = vadd.f32 %v1860, %v1900
    %v1902 = vpop.f32.mrb[0].mxu0
    %v1903 = vadd.f32 %v1862, %v1902
    %v1904 = vpop.f32.mrb[0].mxu0
    %v1905 = vpop.f32.mrb[0].mxu0
    %1906 = vdwg.mxu0
    %1907 = vmatprep.subr.bf16.mxu0 %v1280
    %1908 = vmatpush1.bf16.msra.mxu0 %v1279
    %1909 = vmatprep.subr.bf16.mxu0 %v1284
    %1910 = vmatpush1.bf16.msra.mxu0 %v1283
    %1911 = vmatprep.subr.bf16.mxu0 %v1288
    %1912 = vmatpush1.bf16.msra.mxu0 %v1287
    %1913 = vmatprep.subr.bf16.mxu0 %v1292
    %1914 = vmatpush1.bf16.msra.mxu0 %v1291
    %1915 = vmatprep.subr.bf16.mxu0 %v1296
    %1916 = vmatpush1.bf16.msra.mxu0 %v1295
    %1917 = vmatprep.subr.bf16.mxu0 %v1300
    %1918 = vmatpush1.bf16.msra.mxu0 %v1299
    %1919 = vmatprep.subr.bf16.mxu0 %v1304
    %1920 = vmatpush1.bf16.msra.mxu0 %v1303
    %1921 = vmatprep.subr.bf16.mxu0 %v1308
    %1922 = vmatpush1.bf16.msra.mxu0 %v1307
    %1923 = vmatprep.subr.bf16.mxu0 %v1312
    %1924 = vmatpush1.bf16.msra.mxu0 %v1311
    %1925 = vmatprep.subr.bf16.mxu0 %v1316
    %1926 = vmatpush1.bf16.msra.mxu0 %v1315
    %1927 = vmatprep.subr.bf16.mxu0 %v1320
    %1928 = vmatpush1.bf16.msra.mxu0 %v1319
    %1929 = vmatprep.subr.bf16.mxu0 %v1324
    %1930 = vmatpush1.bf16.msra.mxu0 %v1323
    %1931 = vmatprep.subr.bf16.mxu0 %v1328
    %1932 = vmatpush1.bf16.msra.mxu0 %v1327
    %1933 = vmatprep.subr.bf16.mxu0 %v1332
    %1934 = vmatpush1.bf16.msra.mxu0 %v1331
    %1935 = vmatprep.subr.bf16.mxu0 %v1336
    %1936 = vmatpush1.bf16.msra.mxu0 %v1335
    %1937 = vmatprep.subr.bf16.mxu0 %v1340
    %1938 = vmatpush1.bf16.msra.mxu0 %v1339
    %1939 = vmatprep.mubr.bf16.mxu0 %v100
    %1940 = vmatmul.mubr.bf16.gmra.mrb[0].mxu0 %v99
    %v1941 = vpop.f32.mrb[0].mxu0
    %v1942 = vadd.f32 %v1901, %v1941
    %v1943 = vpop.f32.mrb[0].mxu0
    %v1944 = vadd.f32 %v1903, %v1943
    %v1945 = vpop.f32.mrb[0].mxu0
    %v1946 = vpop.f32.mrb[0].mxu0
    %1947 = vdwg.mxu0
    %1948 = vmatprep.subr.bf16.mxu0 %v1344
    %1949 = vmatpush1.bf16.msra.mxu0 %v1343
    %1950 = vmatprep.subr.bf16.mxu0 %v1348
    %1951 = vmatpush1.bf16.msra.mxu0 %v1347
    %1952 = vmatprep.subr.bf16.mxu0 %v1352
    %1953 = vmatpush1.bf16.msra.mxu0 %v1351
    %1954 = vmatprep.subr.bf16.mxu0 %v1356
    %1955 = vmatpush1.bf16.msra.mxu0 %v1355
    %1956 = vmatprep.subr.bf16.mxu0 %v1360
    %1957 = vmatpush1.bf16.msra.mxu0 %v1359
    %1958 = vmatprep.subr.bf16.mxu0 %v1364
    %1959 = vmatpush1.bf16.msra.mxu0 %v1363
    %1960 = vmatprep.subr.bf16.mxu0 %v1368
    %1961 = vmatpush1.bf16.msra.mxu0 %v1367
    %1962 = vmatprep.subr.bf16.mxu0 %v1372
    %1963 = vmatpush1.bf16.msra.mxu0 %v1371
    %1964 = vmatprep.subr.bf16.mxu0 %v1376
    %1965 = vmatpush1.bf16.msra.mxu0 %v1375
    %1966 = vmatprep.subr.bf16.mxu0 %v1380
    %1967 = vmatpush1.bf16.msra.mxu0 %v1379
    %1968 = vmatprep.subr.bf16.mxu0 %v1384
    %1969 = vmatpush1.bf16.msra.mxu0 %v1383
    %1970 = vmatprep.subr.bf16.mxu0 %v1388
    %1971 = vmatpush1.bf16.msra.mxu0 %v1387
    %1972 = vmatprep.subr.bf16.mxu0 %v1392
    %1973 = vmatpush1.bf16.msra.mxu0 %v1391
    %1974 = vmatprep.subr.bf16.mxu0 %v1396
    %1975 = vmatpush1.bf16.msra.mxu0 %v1395
    %1976 = vmatprep.subr.bf16.mxu0 %v1400
    %1977 = vmatpush1.bf16.msra.mxu0 %v1399
    %1978 = vmatprep.subr.bf16.mxu0 %v1404
    %1979 = vmatpush1.bf16.msra.mxu0 %v1403
    %1980 = vmatprep.mubr.bf16.mxu0 %v102
    %1981 = vmatmul.mubr.bf16.gmra.mrb[0].mxu0 %v101
    %v1982 = vpop.f32.mrb[0].mxu0
    %v1983 = vadd.f32 %v1942, %v1982
    %v1984 = vpop.f32.mrb[0].mxu0
    %v1985 = vadd.f32 %v1944, %v1984
    %v1986 = vpop.f32.mrb[0].mxu0
    %v1987 = vpop.f32.mrb[0].mxu0
    %1988 = vdwg.mxu0
    %v1989 = vmax.f32 %v1819, 0.0
    %v1990 = vmax.f32 %v1821, 0.0
    %v1991 = vmax.f32 %v1983, 0.0
    %v1992 = vmax.f32 %v1985, 0.0
    %v1993 = vpack.c.bf16 %v1989, %v1989
    %v1994 = vpack.c.bf16 %v1990, %v1990
    %v1995 = vpack.c.bf16 %v1991, %v1991
    %v1996 = vpack.c.bf16 %v1992, %v1992
    %v1997 = vld [vmem:[%s4] sm:$0xf]
    %v1998 = vld [vmem:[%s4 + $0x4] sm:$0xf]
    %v1999 = vld [vmem:[%s4 + $0x8] sm:$0xf]
    %v2000 = vld [vmem:[%s4 + $0xc] sm:$0xf]
    %v2001 = vld [vmem:[%s4 + $0x10] sm:$0xf]
    %v2002 = vld [vmem:[%s4 + $0x14] sm:$0xf]
    %v2003 = vld [vmem:[%s4 + $0x18] sm:$0xf]
    %v2004 = vld [vmem:[%s4 + $0x1c] sm:$0xf]
    %v2005 = vld [vmem:[%s4 + $0x20] sm:$0xf]
    %v2006 = vld [vmem:[%s4 + $0x24] sm:$0xf]
    %v2007 = vld [vmem:[%s4 + $0x28] sm:$0xf]
    %v2008 = vld [vmem:[%s4 + $0x2c] sm:$0xf]
    %v2009 = vld [vmem:[%s4 + $0x30] sm:$0xf]
    %v2010 = vld [vmem:[%s4 + $0x34] sm:$0xf]
    %v2011 = vld [vmem:[%s4 + $0x38] sm:$0xf]
    %v2012 = vld [vmem:[%s4 + $0x3c] sm:$0xf]
    %v2013 = vld [vmem:[%s4 + $0x40] sm:$0xf]
    %v2014 = vld [vmem:[%s4 + $0x44] sm:$0xf]
    %v2015 = vld [vmem:[%s4 + $0x48] sm:$0xf]
    %v2016 = vld [vmem:[%s4 + $0x4c] sm:$0xf]
    %v2017 = vld [vmem:[%s4 + $0x50] sm:$0xf]
    %v2018 = vld [vmem:[%s4 + $0x54] sm:$0xf]
    %v2019 = vld [vmem:[%s4 + $0x58] sm:$0xf]
    %v2020 = vld [vmem:[%s4 + $0x5c] sm:$0xf]
    %v2021 = vld [vmem:[%s4 + $0x60] sm:$0xf]
    %v2022 = vld [vmem:[%s4 + $0x64] sm:$0xf]
    %v2023 = vld [vmem:[%s4 + $0x68] sm:$0xf]
    %v2024 = vld [vmem:[%s4 + $0x6c] sm:$0xf]
    %v2025 = vld [vmem:[%s4 + $0x70] sm:$0xf]
    %v2026 = vld [vmem:[%s4 + $0x74] sm:$0xf]
    %v2027 = vld [vmem:[%s4 + $0x78] sm:$0xf]
    %v2028 = vld [vmem:[%s4 + $0x7c] sm:$0xf]
    %v2029 = vld [vmem:[%s4 + $0x80] sm:$0xf]
    %v2030 = vld [vmem:[%s4 + $0x84] sm:$0xf]
    %v2031 = vld [vmem:[%s4 + $0x88] sm:$0xf]
    %v2032 = vld [vmem:[%s4 + $0x8c] sm:$0xf]
    %v2033 = vld [vmem:[%s4 + $0x90] sm:$0xf]
    %v2034 = vld [vmem:[%s4 + $0x94] sm:$0xf]
    %v2035 = vld [vmem:[%s4 + $0x98] sm:$0xf]
    %v2036 = vld [vmem:[%s4 + $0x9c] sm:$0xf]
    %v2037 = vld [vmem:[%s4 + $0xa0] sm:$0xf]
    %v2038 = vld [vmem:[%s4 + $0xa4] sm:$0xf]
    %v2039 = vld [vmem:[%s4 + $0xa8] sm:$0xf]
    %v2040 = vld [vmem:[%s4 + $0xac] sm:$0xf]
    %v2041 = vld [vmem:[%s4 + $0xb0] sm:$0xf]
    %v2042 = vld [vmem:[%s4 + $0xb4] sm:$0xf]
    %v2043 = vld [vmem:[%s4 + $0xb8] sm:$0xf]
    %v2044 = vld [vmem:[%s4 + $0xbc] sm:$0xf]
    %v2045 = vld [vmem:[%s4 + $0xc0] sm:$0xf]
    %v2046 = vld [vmem:[%s4 + $0xc4] sm:$0xf]
    %v2047 = vld [vmem:[%s4 + $0xc8] sm:$0xf]
    %v2048 = vld [vmem:[%s4 + $0xcc] sm:$0xf]
    %v2049 = vld [vmem:[%s4 + $0xd0] sm:$0xf]
    %v2050 = vld [vmem:[%s4 + $0xd4] sm:$0xf]
    %v2051 = vld [vmem:[%s4 + $0xd8] sm:$0xf]
    %v2052 = vld [vmem:[%s4 + $0xdc] sm:$0xf]
    %v2053 = vld [vmem:[%s4 + $0xe0] sm:$0xf]
    %v2054 = vld [vmem:[%s4 + $0xe4] sm:$0xf]
    %v2055 = vld [vmem:[%s4 + $0xe8] sm:$0xf]
    %v2056 = vld [vmem:[%s4 + $0xec] sm:$0xf]
    %v2057 = vld [vmem:[%s4 + $0xf0] sm:$0xf]
    %v2058 = vld [vmem:[%s4 + $0xf4] sm:$0xf]
    %v2059 = vld [vmem:[%s4 + $0xf8] sm:$0xf]
    %v2060 = vld [vmem:[%s4 + $0xfc] sm:$0xf]
    %v2061 = vld [vmem:[%s5] sm:$0x1]
    %v2063 = vlaneseq
    %v2064 = vshrl.u32 %v2063, 7
    %v2065 = vsub.s32 0, %v2064
    %v2066 = vrot.slane %v2061, %v2065
    %v2132 = vunpack.c.l.b16 %v1997
    %v2133 = vunpack.c.l.b16 %v1998
    %v2134 = vunpack.c.l.b16 %v1999
    %v2135 = vunpack.c.l.b16 %v2000
    %v2136 = vunpack.c.l.b16 %v2001
    %v2137 = vunpack.c.l.b16 %v2002
    %v2138 = vunpack.c.l.b16 %v2003
    %v2139 = vunpack.c.l.b16 %v2004
    %v2140 = vunpack.c.l.b16 %v2005
    %v2141 = vunpack.c.l.b16 %v2006
    %v2142 = vunpack.c.l.b16 %v2007
    %v2143 = vunpack.c.l.b16 %v2008
    %v2144 = vunpack.c.l.b16 %v2009
    %v2145 = vunpack.c.l.b16 %v2010
    %v2146 = vunpack.c.l.b16 %v2011
    %v2147 = vunpack.c.l.b16 %v2012
    %v2148 = vunpack.c.l.b16 %v2013
    %v2149 = vunpack.c.l.b16 %v2014
    %v2150 = vunpack.c.l.b16 %v2015
    %v2151 = vunpack.c.l.b16 %v2016
    %v2152 = vunpack.c.l.b16 %v2017
    %v2153 = vunpack.c.l.b16 %v2018
    %v2154 = vunpack.c.l.b16 %v2019
    %v2155 = vunpack.c.l.b16 %v2020
    %v2156 = vunpack.c.l.b16 %v2021
    %v2157 = vunpack.c.l.b16 %v2022
    %v2158 = vunpack.c.l.b16 %v2023
    %v2159 = vunpack.c.l.b16 %v2024
    %v2160 = vunpack.c.l.b16 %v2025
    %v2161 = vunpack.c.l.b16 %v2026
    %v2162 = vunpack.c.l.b16 %v2027
    %v2163 = vunpack.c.l.b16 %v2028
    %v2164 = vunpack.c.l.b16 %v2029
    %v2165 = vunpack.c.l.b16 %v2030
    %v2166 = vunpack.c.l.b16 %v2031
    %v2167 = vunpack.c.l.b16 %v2032
    %v2168 = vunpack.c.l.b16 %v2033
    %v2169 = vunpack.c.l.b16 %v2034
    %v2170 = vunpack.c.l.b16 %v2035
    %v2171 = vunpack.c.l.b16 %v2036
    %v2172 = vunpack.c.l.b16 %v2037
    %v2173 = vunpack.c.l.b16 %v2038
    %v2174 = vunpack.c.l.b16 %v2039
    %v2175 = vunpack.c.l.b16 %v2040
    %v2176 = vunpack.c.l.b16 %v2041
    %v2177 = vunpack.c.l.b16 %v2042
    %v2178 = vunpack.c.l.b16 %v2043
    %v2179 = vunpack.c.l.b16 %v2044
    %v2180 = vunpack.c.l.b16 %v2045
    %v2181 = vunpack.c.l.b16 %v2046
    %v2182 = vunpack.c.l.b16 %v2047
    %v2183 = vunpack.c.l.b16 %v2048
    %v2184 = vunpack.c.l.b16 %v2049
    %v2185 = vunpack.c.l.b16 %v2050
    %v2186 = vunpack.c.l.b16 %v2051
    %v2187 = vunpack.c.l.b16 %v2052
    %v2188 = vunpack.c.l.b16 %v2053
    %v2189 = vunpack.c.l.b16 %v2054
    %v2190 = vunpack.c.l.b16 %v2055
    %v2191 = vunpack.c.l.b16 %v2056
    %v2192 = vunpack.c.l.b16 %v2057
    %v2193 = vunpack.c.l.b16 %v2058
    %v2194 = vunpack.c.l.b16 %v2059
    %v2195 = vunpack.c.l.b16 %v2060
    %v2196 = vpack.c.b16 %v2133, %v2132
    %v2197 = vpack.c.b16 %v2135, %v2134
    %v2198 = vpack.c.b16 %v2137, %v2136
    %v2199 = vpack.c.b16 %v2139, %v2138
    %v2200 = vpack.c.b16 %v2141, %v2140
    %v2201 = vpack.c.b16 %v2143, %v2142
    %v2202 = vpack.c.b16 %v2145, %v2144
    %v2203 = vpack.c.b16 %v2147, %v2146
    %v2204 = vpack.c.b16 %v2149, %v2148
    %v2205 = vpack.c.b16 %v2151, %v2150
    %v2206 = vpack.c.b16 %v2153, %v2152
    %v2207 = vpack.c.b16 %v2155, %v2154
    %v2208 = vpack.c.b16 %v2157, %v2156
    %v2209 = vpack.c.b16 %v2159, %v2158
    %v2210 = vpack.c.b16 %v2161, %v2160
    %v2211 = vpack.c.b16 %v2163, %v2162
    %v2212 = vpack.c.b16 %v2165, %v2164
    %v2213 = vpack.c.b16 %v2167, %v2166
    %v2214 = vpack.c.b16 %v2169, %v2168
    %v2215 = vpack.c.b16 %v2171, %v2170
    %v2216 = vpack.c.b16 %v2173, %v2172
    %v2217 = vpack.c.b16 %v2175, %v2174
    %v2218 = vpack.c.b16 %v2177, %v2176
    %v2219 = vpack.c.b16 %v2179, %v2178
    %v2220 = vpack.c.b16 %v2181, %v2180
    %v2221 = vpack.c.b16 %v2183, %v2182
    %v2222 = vpack.c.b16 %v2185, %v2184
    %v2223 = vpack.c.b16 %v2187, %v2186
    %v2224 = vpack.c.b16 %v2189, %v2188
    %v2225 = vpack.c.b16 %v2191, %v2190
    %v2226 = vpack.c.b16 %v2193, %v2192
    %v2227 = vpack.c.b16 %v2195, %v2194
    %2260 = vmatprep.subr.bf16.mxu0 0
    %2261 = vmatpush1.bf16.msra.mxu0 %v2196
    %2262 = vmatprep.subr.bf16.mxu0 0
    %2263 = vmatpush1.bf16.msra.mxu0 %v2197
    %2264 = vmatprep.subr.bf16.mxu0 0
    %2265 = vmatpush1.bf16.msra.mxu0 %v2198
    %2266 = vmatprep.subr.bf16.mxu0 0
    %2267 = vmatpush1.bf16.msra.mxu0 %v2199
    %2268 = vmatprep.subr.bf16.mxu0 0
    %2269 = vmatpush1.bf16.msra.mxu0 %v2200
    %2270 = vmatprep.subr.bf16.mxu0 0
    %2271 = vmatpush1.bf16.msra.mxu0 %v2201
    %2272 = vmatprep.subr.bf16.mxu0 0
    %2273 = vmatpush1.bf16.msra.mxu0 %v2202
    %2274 = vmatprep.subr.bf16.mxu0 0
    %2275 = vmatpush1.bf16.msra.mxu0 %v2203
    %2276 = vmatprep.subr.bf16.mxu0 0
    %2277 = vmatpush1.bf16.msra.mxu0 %v2204
    %2278 = vmatprep.subr.bf16.mxu0 0
    %2279 = vmatpush1.bf16.msra.mxu0 %v2205
    %2280 = vmatprep.subr.bf16.mxu0 0
    %2281 = vmatpush1.bf16.msra.mxu0 %v2206
    %2282 = vmatprep.subr.bf16.mxu0 0
    %2283 = vmatpush1.bf16.msra.mxu0 %v2207
    %2284 = vmatprep.subr.bf16.mxu0 0
    %2285 = vmatpush1.bf16.msra.mxu0 %v2208
    %2286 = vmatprep.subr.bf16.mxu0 0
    %2287 = vmatpush1.bf16.msra.mxu0 %v2209
    %2288 = vmatprep.subr.bf16.mxu0 0
    %2289 = vmatpush1.bf16.msra.mxu0 %v2210
    %2290 = vmatprep.subr.bf16.mxu0 0
    %2291 = vmatpush1.bf16.msra.mxu0 %v2211
    %2292 = vmatprep.mubr.bf16.mxu0 %v1994
    %2293 = vmatmul.mubr.bf16.gmra.mrb[0].mxu0 %v1993
    %v2294 = vpop.f32.mrb[0].mxu0
    %v2295 = vadd.f32 %v2066, %v2294
    %v2296 = vpop.f32.mrb[0].mxu0
    %v2297 = vpop.f32.mrb[0].mxu0
    %v2298 = vpop.f32.mrb[0].mxu0
    %2299 = vdwg.mxu0
    %2300 = vmatprep.subr.bf16.mxu0 0
    %2301 = vmatpush1.bf16.msra.mxu0 %v2212
    %2302 = vmatprep.subr.bf16.mxu0 0
    %2303 = vmatpush1.bf16.msra.mxu0 %v2213
    %2304 = vmatprep.subr.bf16.mxu0 0
    %2305 = vmatpush1.bf16.msra.mxu0 %v2214
    %2306 = vmatprep.subr.bf16.mxu0 0
    %2307 = vmatpush1.bf16.msra.mxu0 %v2215
    %2308 = vmatprep.subr.bf16.mxu0 0
    %2309 = vmatpush1.bf16.msra.mxu0 %v2216
    %2310 = vmatprep.subr.bf16.mxu0 0
    %2311 = vmatpush1.bf16.msra.mxu0 %v2217
    %2312 = vmatprep.subr.bf16.mxu0 0
    %2313 = vmatpush1.bf16.msra.mxu0 %v2218
    %2314 = vmatprep.subr.bf16.mxu0 0
    %2315 = vmatpush1.bf16.msra.mxu0 %v2219
    %2316 = vmatprep.subr.bf16.mxu0 0
    %2317 = vmatpush1.bf16.msra.mxu0 %v2220
    %2318 = vmatprep.subr.bf16.mxu0 0
    %2319 = vmatpush1.bf16.msra.mxu0 %v2221
    %2320 = vmatprep.subr.bf16.mxu0 0
    %2321 = vmatpush1.bf16.msra.mxu0 %v2222
    %2322 = vmatprep.subr.bf16.mxu0 0
    %2323 = vmatpush1.bf16.msra.mxu0 %v2223
    %2324 = vmatprep.subr.bf16.mxu0 0
    %2325 = vmatpush1.bf16.msra.mxu0 %v2224
    %2326 = vmatprep.subr.bf16.mxu0 0
    %2327 = vmatpush1.bf16.msra.mxu0 %v2225
    %2328 = vmatprep.subr.bf16.mxu0 0
    %2329 = vmatpush1.bf16.msra.mxu0 %v2226
    %2330 = vmatprep.subr.bf16.mxu0 0
    %2331 = vmatpush1.bf16.msra.mxu0 %v2227
    %2332 = vmatprep.mubr.bf16.mxu0 %v1996
    %2333 = vmatmul.mubr.bf16.gmra.mrb[0].mxu0 %v1995
    %v2334 = vpop.f32.mrb[0].mxu0
    %v2335 = vadd.f32 %v2295, %v2334
    %v2336 = vpop.f32.mrb[0].mxu0
    %v2337 = vpop.f32.mrb[0].mxu0
    %v2338 = vpop.f32.mrb[0].mxu0
    %2339 = vdwg.mxu0
    %v2340 = vmax.f32 %v2335, 0.0
    %v2341 = vpack.c.bf16 %v2340, %v2340
    %v2342 = vld [vmem:[%s6] sm:$0xf]
    %v2343 = vld [vmem:[%s6 + $0x4] sm:$0xf]
    %v2344 = vld [vmem:[%s6 + $0x8] sm:$0xf]
    %v2345 = vld [vmem:[%s6 + $0xc] sm:$0xf]
    %v2346 = vld [vmem:[%s6 + $0x10] sm:$0xf]
    %v2347 = vld [vmem:[%s6 + $0x14] sm:$0xf]
    %v2348 = vld [vmem:[%s6 + $0x18] sm:$0xf]
    %v2349 = vld [vmem:[%s6 + $0x1c] sm:$0xf]
    %v2350 = vld [vmem:[%s7] sm:$0x1]
    %v2352 = vlaneseq
    %v2353 = vshrl.u32 %v2352, 7
    %v2354 = vsub.s32 0, %v2353
    %v2355 = vrot.slane %v2350, %v2354
    %v2365 = vunpack.c.l.b16 %v2342
    %v2366 = vunpack.c.l.b16 %v2343
    %v2367 = vunpack.c.l.b16 %v2344
    %v2368 = vunpack.c.l.b16 %v2345
    %v2369 = vunpack.c.l.b16 %v2346
    %v2370 = vunpack.c.l.b16 %v2347
    %v2371 = vunpack.c.l.b16 %v2348
    %v2372 = vunpack.c.l.b16 %v2349
    %v2373 = vpack.c.b16 %v2366, %v2365
    %v2374 = vpack.c.b16 %v2368, %v2367
    %v2375 = vpack.c.b16 %v2370, %v2369
    %v2376 = vpack.c.b16 %v2372, %v2371
    %vm2381 = vcmask 523264
    %v2383 = vsel %vm2381, %v2341, 0
    %2385 = vmatprep.subr.bf16.mxu0 0
    %2386 = vmatpush1.bf16.msra.mxu0 %v2373
    %2387 = vmatprep.subr.bf16.mxu0 0
    %2388 = vmatpush1.bf16.msra.mxu0 %v2374
    %2389 = vmatprep.subr.bf16.mxu0 0
    %2390 = vmatpush1.bf16.msra.mxu0 %v2375
    %2391 = vmatprep.subr.bf16.mxu0 0
    %2392 = vmatpush1.bf16.msra.mxu0 %v2376
    %2393 = vmatprep.subr.bf16.mxu0 0
    %2394 = vmatpush1.bf16.msra.mxu0 0
    %2395 = vmatprep.subr.bf16.mxu0 0
    %2396 = vmatpush1.bf16.msra.mxu0 0
    %2397 = vmatprep.subr.bf16.mxu0 0
    %2398 = vmatpush1.bf16.msra.mxu0 0
    %2399 = vmatprep.subr.bf16.mxu0 0
    %2400 = vmatpush1.bf16.msra.mxu0 0
    %2401 = vmatprep.subr.bf16.mxu0 0
    %2402 = vmatpush1.bf16.msra.mxu0 0
    %2403 = vmatprep.subr.bf16.mxu0 0
    %2404 = vmatpush1.bf16.msra.mxu0 0
    %2405 = vmatprep.subr.bf16.mxu0 0
    %2406 = vmatpush1.bf16.msra.mxu0 0
    %2407 = vmatprep.subr.bf16.mxu0 0
    %2408 = vmatpush1.bf16.msra.mxu0 0
    %2409 = vmatprep.subr.bf16.mxu0 0
    %2410 = vmatpush1.bf16.msra.mxu0 0
    %2411 = vmatprep.subr.bf16.mxu0 0
    %2412 = vmatpush1.bf16.msra.mxu0 0
    %2413 = vmatprep.subr.bf16.mxu0 0
    %2414 = vmatpush1.bf16.msra.mxu0 0
    %2415 = vmatprep.subr.bf16.mxu0 0
    %2416 = vmatpush1.bf16.msra.mxu0 0
    %2417 = vmatprep.mubr.bf16.mxu0 0
    %2418 = vmatmul.mubr.bf16.gmra.mrb[0].mxu0 %v2383
    %v2419 = vpop.f32.mrb[0].mxu0
    %v2420 = vadd.f32 %v2355, %v2419
    %v2421 = vpop.f32.mrb[0].mxu0
    %v2422 = vpop.f32.mrb[0].mxu0
    %v2423 = vpop.f32.mrb[0].mxu0
    %2424 = vdwg.mxu0
    %v2425 = vld [vmem:[%s8] sm:$0xf]
    %v2426 = vld [vmem:[%s8 + $0x4] sm:$0xf]
    %v2427 = vld [vmem:[%s8 + $0x8] sm:$0xf]
    %v2428 = vld [vmem:[%s8 + $0xc] sm:$0xf]
    %v2429 = vld [vmem:[%s8 + $0x10] sm:$0xf]
    %v2430 = vld [vmem:[%s8 + $0x14] sm:$0xf]
    %v2431 = vld [vmem:[%s8 + $0x18] sm:$0xf]
    %v2432 = vld [vmem:[%s8 + $0x1c] sm:$0xf]
    %v2433 = vld [vmem:[%s9] sm:$0x1]
    %v2435 = vlaneseq
    %v2436 = vshrl.u32 %v2435, 7
    %v2437 = vsub.s32 0, %v2436
    %v2438 = vrot.slane %v2433, %v2437
    %v2448 = vunpack.c.l.b16 %v2425
    %v2449 = vunpack.c.l.b16 %v2426
    %v2450 = vunpack.c.l.b16 %v2427
    %v2451 = vunpack.c.l.b16 %v2428
    %v2452 = vunpack.c.l.b16 %v2429
    %v2453 = vunpack.c.l.b16 %v2430
    %v2454 = vunpack.c.l.b16 %v2431
    %v2455 = vunpack.c.l.b16 %v2432
    %v2456 = vpack.c.b16 %v2449, %v2448
    %v2457 = vpack.c.b16 %v2451, %v2450
    %v2458 = vpack.c.b16 %v2453, %v2452
    %v2459 = vpack.c.b16 %v2455, %v2454
    %2464 = vmatprep.subr.bf16.mxu0 0
    %2465 = vmatpush1.bf16.msra.mxu0 %v2456
    %2466 = vmatprep.subr.bf16.mxu0 0
    %2467 = vmatpush1.bf16.msra.mxu0 %v2457
    %2468 = vmatprep.subr.bf16.mxu0 0
    %2469 = vmatpush1.bf16.msra.mxu0 %v2458
    %2470 = vmatprep.subr.bf16.mxu0 0
    %2471 = vmatpush1.bf16.msra.mxu0 %v2459
    %2472 = vmatprep.subr.bf16.mxu0 0
    %2473 = vmatpush1.bf16.msra.mxu0 0
    %2474 = vmatprep.subr.bf16.mxu0 0
    %2475 = vmatpush1.bf16.msra.mxu0 0
    %2476 = vmatprep.subr.bf16.mxu0 0
    %2477 = vmatpush1.bf16.msra.mxu0 0
    %2478 = vmatprep.subr.bf16.mxu0 0
    %2479 = vmatpush1.bf16.msra.mxu0 0
    %2480 = vmatprep.subr.bf16.mxu0 0
    %2481 = vmatpush1.bf16.msra.mxu0 0
    %2482 = vmatprep.subr.bf16.mxu0 0
    %2483 = vmatpush1.bf16.msra.mxu0 0
    %2484 = vmatprep.subr.bf16.mxu0 0
    %2485 = vmatpush1.bf16.msra.mxu0 0
    %2486 = vmatprep.subr.bf16.mxu0 0
    %2487 = vmatpush1.bf16.msra.mxu0 0
    %2488 = vmatprep.subr.bf16.mxu0 0
    %2489 = vmatpush1.bf16.msra.mxu0 0
    %2490 = vmatprep.subr.bf16.mxu0 0
    %2491 = vmatpush1.bf16.msra.mxu0 0
    %2492 = vmatprep.subr.bf16.mxu0 0
    %2493 = vmatpush1.bf16.msra.mxu0 0
    %2494 = vmatprep.subr.bf16.mxu0 0
    %2495 = vmatpush1.bf16.msra.mxu0 0
    %2496 = vmatprep.mubr.bf16.mxu0 0
    %2497 = vmatmul.mubr.bf16.gmra.mrb[0].mxu0 %v2383
    %v2498 = vpop.f32.mrb[0].mxu0
    %v2499 = vadd.f32 %v2438, %v2498
    %v2500 = vpop.f32.mrb[0].mxu0
    %v2501 = vpop.f32.mrb[0].mxu0
    %v2502 = vpop.f32.mrb[0].mxu0
    %2503 = vdwg.mxu0
    %v2504 = vmul.f32 %v2499, 0.5
    %v2505 = vmul.f32 %v2504, 1.442695
    %v2506 = vpow.pop %v2505
    %v2507 = vld [vmem:[%s1] sm:$0xff]
    %v2508 = vmul.f32 %v2507, %v2506
    %v2509 = vadd.f32 %v2420, %v2508
    %v2510 = vpack.c.bf16 %v2509, %v2509
    %v2511 = vld [vmem:[%s10] sm:$0xf]
    %v2512 = vld [vmem:[%s10 + $0x4] sm:$0xf]
    %v2513 = vld [vmem:[%s10 + $0x8] sm:$0xf]
    %v2514 = vld [vmem:[%s10 + $0xc] sm:$0xf]
    %v2515 = vld [vmem:[%s10 + $0x10] sm:$0xf]
    %v2516 = vld [vmem:[%s10 + $0x14] sm:$0xf]
    %v2517 = vld [vmem:[%s10 + $0x18] sm:$0xf]
    %v2518 = vld [vmem:[%s10 + $0x1c] sm:$0xf]
    %v2519 = vld [vmem:[%s10 + $0x20] sm:$0xf]
    %v2520 = vld [vmem:[%s10 + $0x24] sm:$0xf]
    %v2521 = vld [vmem:[%s10 + $0x28] sm:$0xf]
    %v2522 = vld [vmem:[%s10 + $0x2c] sm:$0xf]
    %v2523 = vld [vmem:[%s10 + $0x30] sm:$0xf]
    %v2524 = vld [vmem:[%s10 + $0x34] sm:$0xf]
    %v2525 = vld [vmem:[%s10 + $0x38] sm:$0xf]
    %v2526 = vld [vmem:[%s10 + $0x3c] sm:$0xf]
    %v2527 = vld [vmem:[%s11] sm:$0x1]
    %v2529 = vlaneseq
    %v2530 = vshrl.u32 %v2529, 7
    %v2531 = vsub.s32 0, %v2530
    %v2532 = vrot.slane %v2527, %v2531
    %v2550 = vunpack.c.l.b16 %v2511
    %v2551 = vunpack.c.l.b16 %v2512
    %v2552 = vunpack.c.l.b16 %v2513
    %v2553 = vunpack.c.l.b16 %v2514
    %v2554 = vunpack.c.l.b16 %v2515
    %v2555 = vunpack.c.l.b16 %v2516
    %v2556 = vunpack.c.l.b16 %v2517
    %v2557 = vunpack.c.l.b16 %v2518
    %v2558 = vunpack.c.l.b16 %v2519
    %v2559 = vunpack.c.l.b16 %v2520
    %v2560 = vunpack.c.l.b16 %v2521
    %v2561 = vunpack.c.l.b16 %v2522
    %v2562 = vunpack.c.l.b16 %v2523
    %v2563 = vunpack.c.l.b16 %v2524
    %v2564 = vunpack.c.l.b16 %v2525
    %v2565 = vunpack.c.l.b16 %v2526
    %v2566 = vpack.c.b16 %v2551, %v2550
    %v2567 = vpack.c.b16 %v2553, %v2552
    %v2568 = vpack.c.b16 %v2555, %v2554
    %v2569 = vpack.c.b16 %v2557, %v2556
    %v2570 = vpack.c.b16 %v2559, %v2558
    %v2571 = vpack.c.b16 %v2561, %v2560
    %v2572 = vpack.c.b16 %v2563, %v2562
    %v2573 = vpack.c.b16 %v2565, %v2564
    %2582 = vmatprep.subr.bf16.mxu0 0
    %2583 = vmatpush1.bf16.msra.mxu0 %v2566
    %2584 = vmatprep.subr.bf16.mxu0 0
    %2585 = vmatpush1.bf16.msra.mxu0 %v2567
    %2586 = vmatprep.subr.bf16.mxu0 0
    %2587 = vmatpush1.bf16.msra.mxu0 %v2568
    %2588 = vmatprep.subr.bf16.mxu0 0
    %2589 = vmatpush1.bf16.msra.mxu0 %v2569
    %2590 = vmatprep.subr.bf16.mxu0 0
    %2591 = vmatpush1.bf16.msra.mxu0 %v2570
    %2592 = vmatprep.subr.bf16.mxu0 0
    %2593 = vmatpush1.bf16.msra.mxu0 %v2571
    %2594 = vmatprep.subr.bf16.mxu0 0
    %2595 = vmatpush1.bf16.msra.mxu0 %v2572
    %2596 = vmatprep.subr.bf16.mxu0 0
    %2597 = vmatpush1.bf16.msra.mxu0 %v2573
    %2598 = vmatprep.subr.bf16.mxu0 0
    %2599 = vmatpush1.bf16.msra.mxu0 0
    %2600 = vmatprep.subr.bf16.mxu0 0
    %2601 = vmatpush1.bf16.msra.mxu0 0
    %2602 = vmatprep.subr.bf16.mxu0 0
    %2603 = vmatpush1.bf16.msra.mxu0 0
    %2604 = vmatprep.subr.bf16.mxu0 0
    %2605 = vmatpush1.bf16.msra.mxu0 0
    %2606 = vmatprep.subr.bf16.mxu0 0
    %2607 = vmatpush1.bf16.msra.mxu0 0
    %2608 = vmatprep.subr.bf16.mxu0 0
    %2609 = vmatpush1.bf16.msra.mxu0 0
    %2610 = vmatprep.subr.bf16.mxu0 0
    %2611 = vmatpush1.bf16.msra.mxu0 0
    %2612 = vmatprep.subr.bf16.mxu0 0
    %2613 = vmatpush1.bf16.msra.mxu0 0
    %2614 = vmatprep.mubr.bf16.mxu0 0
    %2615 = vmatmul.mubr.bf16.gmra.mrb[0].mxu0 %v2510
    %v2616 = vpop.f32.mrb[0].mxu0
    %v2617 = vadd.f32 %v2532, %v2616
    %v2618 = vpop.f32.mrb[0].mxu0
    %v2619 = vpop.f32.mrb[0].mxu0
    %v2620 = vpop.f32.mrb[0].mxu0
    %2621 = vdwg.mxu0
    %v2622 = vmax.f32 %v2617, 0.0
    %v2623 = vpack.c.bf16 %v2622, %v2622
    %v2624 = vld [vmem:[%s12] sm:$0xff]
    %v2625 = vld [vmem:[%s12 + $0x8] sm:$0xff]
    %v2626 = vld [vmem:[%s12 + $0x10] sm:$0xff]
    %v2627 = vld [vmem:[%s12 + $0x18] sm:$0xff]
    %v2628 = vld [vmem:[%s12 + $0x20] sm:$0xff]
    %v2629 = vld [vmem:[%s12 + $0x28] sm:$0xff]
    %v2630 = vld [vmem:[%s12 + $0x30] sm:$0xff]
    %v2631 = vld [vmem:[%s12 + $0x38] sm:$0xff]
    %v2632 = vld [vmem:[%s12 + $0x40] sm:$0xff]
    %v2633 = vld [vmem:[%s12 + $0x48] sm:$0xff]
    %v2634 = vld [vmem:[%s12 + $0x50] sm:$0xff]
    %v2635 = vld [vmem:[%s12 + $0x58] sm:$0xff]
    %v2636 = vld [vmem:[%s12 + $0x60] sm:$0xff]
    %v2637 = vld [vmem:[%s12 + $0x68] sm:$0xff]
    %v2638 = vld [vmem:[%s12 + $0x70] sm:$0xff]
    %v2639 = vld [vmem:[%s12 + $0x78] sm:$0xff]
    %v2640 = vld [vmem:[%s13] sm:$0xf]
    %v2642 = vlaneseq
    %v2643 = vshrl.u32 %v2642, 7
    %v2644 = vsub.s32 0, %v2643
    %v2645 = vrot.slane %v2640, %v2644
    %v2646 = vlaneseq
    %v2647 = vshrl.u32 %v2646, 7
    %v2648 = vsub.s32 1, %v2647
    %v2649 = vrot.slane %v2640, %v2648
    %v2650 = vlaneseq
    %v2651 = vshrl.u32 %v2650, 7
    %v2652 = vsub.s32 2, %v2651
    %v2653 = vrot.slane %v2640, %v2652
    %v2654 = vlaneseq
    %v2655 = vshrl.u32 %v2654, 7
    %v2656 = vsub.s32 3, %v2655
    %v2657 = vrot.slane %v2640, %v2656
    %v2678 = vunpack.c.l.b16 %v2624
    %v2679 = vunpack.c.h.b16 %v2624
    %v2680 = vunpack.c.l.b16 %v2625
    %v2681 = vunpack.c.h.b16 %v2625
    %v2682 = vunpack.c.l.b16 %v2626
    %v2683 = vunpack.c.h.b16 %v2626
    %v2684 = vunpack.c.l.b16 %v2627
    %v2685 = vunpack.c.h.b16 %v2627
    %v2686 = vunpack.c.l.b16 %v2628
    %v2687 = vunpack.c.h.b16 %v2628
    %v2688 = vunpack.c.l.b16 %v2629
    %v2689 = vunpack.c.h.b16 %v2629
    %v2690 = vunpack.c.l.b16 %v2630
    %v2691 = vunpack.c.h.b16 %v2630
    %v2692 = vunpack.c.l.b16 %v2631
    %v2693 = vunpack.c.h.b16 %v2631
    %v2694 = vunpack.c.l.b16 %v2632
    %v2695 = vunpack.c.h.b16 %v2632
    %v2696 = vunpack.c.l.b16 %v2633
    %v2697 = vunpack.c.h.b16 %v2633
    %v2698 = vunpack.c.l.b16 %v2634
    %v2699 = vunpack.c.h.b16 %v2634
    %v2700 = vunpack.c.l.b16 %v2635
    %v2701 = vunpack.c.h.b16 %v2635
    %v2702 = vunpack.c.l.b16 %v2636
    %v2703 = vunpack.c.h.b16 %v2636
    %v2704 = vunpack.c.l.b16 %v2637
    %v2705 = vunpack.c.h.b16 %v2637
    %v2706 = vunpack.c.l.b16 %v2638
    %v2707 = vunpack.c.h.b16 %v2638
    %v2708 = vunpack.c.l.b16 %v2639
    %v2709 = vunpack.c.h.b16 %v2639
    %v2710 = vpack.c.b16 %v2682, %v2678
    %v2711 = vpack.c.b16 %v2683, %v2679
    %v2712 = vpack.c.b16 %v2684, %v2680
    %v2713 = vpack.c.b16 %v2685, %v2681
    %v2714 = vpack.c.b16 %v2690, %v2686
    %v2715 = vpack.c.b16 %v2691, %v2687
    %v2716 = vpack.c.b16 %v2692, %v2688
    %v2717 = vpack.c.b16 %v2693, %v2689
    %v2718 = vpack.c.b16 %v2698, %v2694
    %v2719 = vpack.c.b16 %v2699, %v2695
    %v2720 = vpack.c.b16 %v2700, %v2696
    %v2721 = vpack.c.b16 %v2701, %v2697
    %v2722 = vpack.c.b16 %v2706, %v2702
    %v2723 = vpack.c.b16 %v2707, %v2703
    %v2724 = vpack.c.b16 %v2708, %v2704
    %v2725 = vpack.c.b16 %v2709, %v2705
    %v2743 = vsel %vm2381, %v2623, 0
    %2745 = vmatprep.subr.bf16.mxu0 %v2711
    %2746 = vmatpush1.bf16.msra.mxu0 %v2710
    %2747 = vmatprep.subr.bf16.mxu0 %v2715
    %2748 = vmatpush1.bf16.msra.mxu0 %v2714
    %2749 = vmatprep.subr.bf16.mxu0 %v2719
    %2750 = vmatpush1.bf16.msra.mxu0 %v2718
    %2751 = vmatprep.subr.bf16.mxu0 %v2723
    %2752 = vmatpush1.bf16.msra.mxu0 %v2722
    %2753 = vmatprep.subr.bf16.mxu0 0
    %2754 = vmatpush1.bf16.msra.mxu0 0
    %2755 = vmatprep.subr.bf16.mxu0 0
    %2756 = vmatpush1.bf16.msra.mxu0 0
    %2757 = vmatprep.subr.bf16.mxu0 0
    %2758 = vmatpush1.bf16.msra.mxu0 0
    %2759 = vmatprep.subr.bf16.mxu0 0
    %2760 = vmatpush1.bf16.msra.mxu0 0
    %2761 = vmatprep.subr.bf16.mxu0 0
    %2762 = vmatpush1.bf16.msra.mxu0 0
    %2763 = vmatprep.subr.bf16.mxu0 0
    %2764 = vmatpush1.bf16.msra.mxu0 0
    %2765 = vmatprep.subr.bf16.mxu0 0
    %2766 = vmatpush1.bf16.msra.mxu0 0
    %2767 = vmatprep.subr.bf16.mxu0 0
    %2768 = vmatpush1.bf16.msra.mxu0 0
    %2769 = vmatprep.subr.bf16.mxu0 0
    %2770 = vmatpush1.bf16.msra.mxu0 0
    %2771 = vmatprep.subr.bf16.mxu0 0
    %2772 = vmatpush1.bf16.msra.mxu0 0
    %2773 = vmatprep.subr.bf16.mxu0 0
    %2774 = vmatpush1.bf16.msra.mxu0 0
    %2775 = vmatprep.subr.bf16.mxu0 0
    %2776 = vmatpush1.bf16.msra.mxu0 0
    %2777 = vmatprep.mubr.bf16.mxu0 0
    %2778 = vmatmul.mubr.bf16.gmra.mrb[0].mxu0 %v2743
    %v2779 = vpop.f32.mrb[0].mxu0
    %v2780 = vadd.f32 %v2645, %v2779
    %v2781 = vpop.f32.mrb[0].mxu0
    %v2782 = vadd.f32 %v2649, %v2781
    %v2783 = vpop.f32.mrb[0].mxu0
    %v2784 = vpop.f32.mrb[0].mxu0
    %2785 = vdwg.mxu0
    %2786 = vmatprep.subr.bf16.mxu0 %v2713
    %2787 = vmatpush1.bf16.msra.mxu0 %v2712
    %2788 = vmatprep.subr.bf16.mxu0 %v2717
    %2789 = vmatpush1.bf16.msra.mxu0 %v2716
    %2790 = vmatprep.subr.bf16.mxu0 %v2721
    %2791 = vmatpush1.bf16.msra.mxu0 %v2720
    %2792 = vmatprep.subr.bf16.mxu0 %v2725
    %2793 = vmatpush1.bf16.msra.mxu0 %v2724
    %2794 = vmatprep.subr.bf16.mxu0 0
    %2795 = vmatpush1.bf16.msra.mxu0 0
    %2796 = vmatprep.subr.bf16.mxu0 0
    %2797 = vmatpush1.bf16.msra.mxu0 0
    %2798 = vmatprep.subr.bf16.mxu0 0
    %2799 = vmatpush1.bf16.msra.mxu0 0
    %2800 = vmatprep.subr.bf16.mxu0 0
    %2801 = vmatpush1.bf16.msra.mxu0 0
    %2802 = vmatprep.subr.bf16.mxu0 0
    %2803 = vmatpush1.bf16.msra.mxu0 0
    %2804 = vmatprep.subr.bf16.mxu0 0
    %2805 = vmatpush1.bf16.msra.mxu0 0
    %2806 = vmatprep.subr.bf16.mxu0 0
    %2807 = vmatpush1.bf16.msra.mxu0 0
    %2808 = vmatprep.subr.bf16.mxu0 0
    %2809 = vmatpush1.bf16.msra.mxu0 0
    %2810 = vmatprep.subr.bf16.mxu0 0
    %2811 = vmatpush1.bf16.msra.mxu0 0
    %2812 = vmatprep.subr.bf16.mxu0 0
    %2813 = vmatpush1.bf16.msra.mxu0 0
    %2814 = vmatprep.subr.bf16.mxu0 0
    %2815 = vmatpush1.bf16.msra.mxu0 0
    %2816 = vmatprep.subr.bf16.mxu0 0
    %2817 = vmatpush1.bf16.msra.mxu0 0
    %2818 = vmatprep.mubr.bf16.mxu0 0
    %2819 = vmatmul.mubr.bf16.gmra.mrb[0].mxu0 %v2743
    %v2820 = vpop.f32.mrb[0].mxu0
    %v2821 = vadd.f32 %v2653, %v2820
    %v2822 = vpop.f32.mrb[0].mxu0
    %v2823 = vadd.f32 %v2657, %v2822
    %v2824 = vpop.f32.mrb[0].mxu0
    %v2825 = vpop.f32.mrb[0].mxu0
    %2826 = vdwg.mxu0
    %v2827 = vmax.f32 %v2780, 0.0
    %v2828 = vmax.f32 %v2782, 0.0
    %v2829 = vmax.f32 %v2821, 0.0
    %v2830 = vmax.f32 %v2823, 0.0
    %v2831 = vpack.c.bf16 %v2827, %v2827
    %v2832 = vpack.c.bf16 %v2828, %v2828
    %v2833 = vpack.c.bf16 %v2829, %v2829
    %v2834 = vpack.c.bf16 %v2830, %v2830
    %v2835 = vld [vmem:[#allocation5] sm:$0xff]
    %v2836 = vld [vmem:[#allocation5 + $0x8] sm:$0xff]
    %v2837 = vld [vmem:[#allocation5 + $0x10] sm:$0xff]
    %v2838 = vld [vmem:[#allocation5 + $0x18] sm:$0xff]
    %v2839 = vld [vmem:[#allocation5 + $0x20] sm:$0xff]
    %v2840 = vld [vmem:[#allocation5 + $0x28] sm:$0xff]
    %v2841 = vld [vmem:[#allocation5 + $0x30] sm:$0xff]
    %v2842 = vld [vmem:[#allocation5 + $0x38] sm:$0xff]
    %v2843 = vld [vmem:[#allocation5 + $0x40] sm:$0xff]
    %v2844 = vld [vmem:[#allocation5 + $0x48] sm:$0xff]
    %v2845 = vld [vmem:[#allocation5 + $0x50] sm:$0xff]
    %v2846 = vld [vmem:[#allocation5 + $0x58] sm:$0xff]
    %v2847 = vld [vmem:[#allocation5 + $0x60] sm:$0xff]
    %v2848 = vld [vmem:[#allocation5 + $0x68] sm:$0xff]
    %v2849 = vld [vmem:[#allocation5 + $0x70] sm:$0xff]
    %v2850 = vld [vmem:[#allocation5 + $0x78] sm:$0xff]
    %v2851 = vld [vmem:[#allocation5 + $0x80] sm:$0xff]
    %v2852 = vld [vmem:[#allocation5 + $0x88] sm:$0xff]
    %v2853 = vld [vmem:[#allocation5 + $0x90] sm:$0xff]
    %v2854 = vld [vmem:[#allocation5 + $0x98] sm:$0xff]
    %v2855 = vld [vmem:[#allocation5 + $0xa0] sm:$0xff]
    %v2856 = vld [vmem:[#allocation5 + $0xa8] sm:$0xff]
    %v2857 = vld [vmem:[#allocation5 + $0xb0] sm:$0xff]
    %v2858 = vld [vmem:[#allocation5 + $0xb8] sm:$0xff]
    %v2859 = vld [vmem:[#allocation5 + $0xc0] sm:$0xff]
    %v2860 = vld [vmem:[#allocation5 + $0xc8] sm:$0xff]
    %v2861 = vld [vmem:[#allocation5 + $0xd0] sm:$0xff]
    %v2862 = vld [vmem:[#allocation5 + $0xd8] sm:$0xff]
    %v2863 = vld [vmem:[#allocation5 + $0xe0] sm:$0xff]
    %v2864 = vld [vmem:[#allocation5 + $0xe8] sm:$0xff]
    %v2865 = vld [vmem:[#allocation5 + $0xf0] sm:$0xff]
    %v2866 = vld [vmem:[#allocation5 + $0xf8] sm:$0xff]
    %v2867 = vld [vmem:[#allocation5 + $0x100] sm:$0xff]
    %v2868 = vld [vmem:[#allocation5 + $0x108] sm:$0xff]
    %v2869 = vld [vmem:[#allocation5 + $0x110] sm:$0xff]
    %v2870 = vld [vmem:[#allocation5 + $0x118] sm:$0xff]
    %v2871 = vld [vmem:[#allocation5 + $0x120] sm:$0xff]
    %v2872 = vld [vmem:[#allocation5 + $0x128] sm:$0xff]
    %v2873 = vld [vmem:[#allocation5 + $0x130] sm:$0xff]
    %v2874 = vld [vmem:[#allocation5 + $0x138] sm:$0xff]
    %v2875 = vld [vmem:[#allocation5 + $0x140] sm:$0xff]
    %v2876 = vld [vmem:[#allocation5 + $0x148] sm:$0xff]
    %v2877 = vld [vmem:[#allocation5 + $0x150] sm:$0xff]
    %v2878 = vld [vmem:[#allocation5 + $0x158] sm:$0xff]
    %v2879 = vld [vmem:[#allocation5 + $0x160] sm:$0xff]
    %v2880 = vld [vmem:[#allocation5 + $0x168] sm:$0xff]
    %v2881 = vld [vmem:[#allocation5 + $0x170] sm:$0xff]
    %v2882 = vld [vmem:[#allocation5 + $0x178] sm:$0xff]
    %v2883 = vld [vmem:[#allocation5 + $0x180] sm:$0xff]
    %v2884 = vld [vmem:[#allocation5 + $0x188] sm:$0xff]
    %v2885 = vld [vmem:[#allocation5 + $0x190] sm:$0xff]
    %v2886 = vld [vmem:[#allocation5 + $0x198] sm:$0xff]
    %v2887 = vld [vmem:[#allocation5 + $0x1a0] sm:$0xff]
    %v2888 = vld [vmem:[#allocation5 + $0x1a8] sm:$0xff]
    %v2889 = vld [vmem:[#allocation5 + $0x1b0] sm:$0xff]
    %v2890 = vld [vmem:[#allocation5 + $0x1b8] sm:$0xff]
    %v2891 = vld [vmem:[#allocation5 + $0x1c0] sm:$0xff]
    %v2892 = vld [vmem:[#allocation5 + $0x1c8] sm:$0xff]
    %v2893 = vld [vmem:[#allocation5 + $0x1d0] sm:$0xff]
    %v2894 = vld [vmem:[#allocation5 + $0x1d8] sm:$0xff]
    %v2895 = vld [vmem:[#allocation5 + $0x1e0] sm:$0xff]
    %v2896 = vld [vmem:[#allocation5 + $0x1e8] sm:$0xff]
    %v2897 = vld [vmem:[#allocation5 + $0x1f0] sm:$0xff]
    %v2898 = vld [vmem:[#allocation5 + $0x1f8] sm:$0xff]
    %v2899 = vld [vmem:[#allocation5 + $0x200] sm:$0xff]
    %v2900 = vld [vmem:[#allocation5 + $0x208] sm:$0xff]
    %v2901 = vld [vmem:[#allocation5 + $0x210] sm:$0xff]
    %v2902 = vld [vmem:[#allocation5 + $0x218] sm:$0xff]
    %v2903 = vld [vmem:[#allocation5 + $0x220] sm:$0xff]
    %v2904 = vld [vmem:[#allocation5 + $0x228] sm:$0xff]
    %v2905 = vld [vmem:[#allocation5 + $0x230] sm:$0xff]
    %v2906 = vld [vmem:[#allocation5 + $0x238] sm:$0xff]
    %v2907 = vld [vmem:[#allocation5 + $0x240] sm:$0xff]
    %v2908 = vld [vmem:[#allocation5 + $0x248] sm:$0xff]
    %v2909 = vld [vmem:[#allocation5 + $0x250] sm:$0xff]
    %v2910 = vld [vmem:[#allocation5 + $0x258] sm:$0xff]
    %v2911 = vld [vmem:[#allocation5 + $0x260] sm:$0xff]
    %v2912 = vld [vmem:[#allocation5 + $0x268] sm:$0xff]
    %v2913 = vld [vmem:[#allocation5 + $0x270] sm:$0xff]
    %v2914 = vld [vmem:[#allocation5 + $0x278] sm:$0xff]
    %v2915 = vld [vmem:[#allocation5 + $0x280] sm:$0xff]
    %v2916 = vld [vmem:[#allocation5 + $0x288] sm:$0xff]
    %v2917 = vld [vmem:[#allocation5 + $0x290] sm:$0xff]
    %v2918 = vld [vmem:[#allocation5 + $0x298] sm:$0xff]
    %v2919 = vld [vmem:[#allocation5 + $0x2a0] sm:$0xff]
    %v2920 = vld [vmem:[#allocation5 + $0x2a8] sm:$0xff]
    %v2921 = vld [vmem:[#allocation5 + $0x2b0] sm:$0xff]
    %v2922 = vld [vmem:[#allocation5 + $0x2b8] sm:$0xff]
    %v2923 = vld [vmem:[#allocation5 + $0x2c0] sm:$0xff]
    %v2924 = vld [vmem:[#allocation5 + $0x2c8] sm:$0xff]
    %v2925 = vld [vmem:[#allocation5 + $0x2d0] sm:$0xff]
    %v2926 = vld [vmem:[#allocation5 + $0x2d8] sm:$0xff]
    %v2927 = vld [vmem:[#allocation5 + $0x2e0] sm:$0xff]
    %v2928 = vld [vmem:[#allocation5 + $0x2e8] sm:$0xff]
    %v2929 = vld [vmem:[#allocation5 + $0x2f0] sm:$0xff]
    %v2930 = vld [vmem:[#allocation5 + $0x2f8] sm:$0xff]
    %v2931 = vld [vmem:[#allocation5 + $0x300] sm:$0xff]
    %v2932 = vld [vmem:[#allocation5 + $0x308] sm:$0xff]
    %v2933 = vld [vmem:[#allocation5 + $0x310] sm:$0xff]
    %v2934 = vld [vmem:[#allocation5 + $0x318] sm:$0xff]
    %v2935 = vld [vmem:[#allocation5 + $0x320] sm:$0xff]
    %v2936 = vld [vmem:[#allocation5 + $0x328] sm:$0xff]
    %v2937 = vld [vmem:[#allocation5 + $0x330] sm:$0xff]
    %v2938 = vld [vmem:[#allocation5 + $0x338] sm:$0xff]
    %v2939 = vld [vmem:[#allocation5 + $0x340] sm:$0xff]
    %v2940 = vld [vmem:[#allocation5 + $0x348] sm:$0xff]
    %v2941 = vld [vmem:[#allocation5 + $0x350] sm:$0xff]
    %v2942 = vld [vmem:[#allocation5 + $0x358] sm:$0xff]
    %v2943 = vld [vmem:[#allocation5 + $0x360] sm:$0xff]
    %v2944 = vld [vmem:[#allocation5 + $0x368] sm:$0xff]
    %v2945 = vld [vmem:[#allocation5 + $0x370] sm:$0xff]
    %v2946 = vld [vmem:[#allocation5 + $0x378] sm:$0xff]
    %v2947 = vld [vmem:[#allocation5 + $0x380] sm:$0xff]
    %v2948 = vld [vmem:[#allocation5 + $0x388] sm:$0xff]
    %v2949 = vld [vmem:[#allocation5 + $0x390] sm:$0xff]
    %v2950 = vld [vmem:[#allocation5 + $0x398] sm:$0xff]
    %v2951 = vld [vmem:[#allocation5 + $0x3a0] sm:$0xff]
    %v2952 = vld [vmem:[#allocation5 + $0x3a8] sm:$0xff]
    %v2953 = vld [vmem:[#allocation5 + $0x3b0] sm:$0xff]
    %v2954 = vld [vmem:[#allocation5 + $0x3b8] sm:$0xff]
    %v2955 = vld [vmem:[#allocation5 + $0x3c0] sm:$0xff]
    %v2956 = vld [vmem:[#allocation5 + $0x3c8] sm:$0xff]
    %v2957 = vld [vmem:[#allocation5 + $0x3d0] sm:$0xff]
    %v2958 = vld [vmem:[#allocation5 + $0x3d8] sm:$0xff]
    %v2959 = vld [vmem:[#allocation5 + $0x3e0] sm:$0xff]
    %v2960 = vld [vmem:[#allocation5 + $0x3e8] sm:$0xff]
    %v2961 = vld [vmem:[#allocation5 + $0x3f0] sm:$0xff]
    %v2962 = vld [vmem:[#allocation5 + $0x3f8] sm:$0xff]
    %v2963 = vld [vmem:[#allocation5 + $0x400] sm:$0xff]
    %v2964 = vld [vmem:[#allocation5 + $0x408] sm:$0xff]
    %v2965 = vld [vmem:[#allocation5 + $0x410] sm:$0xff]
    %v2966 = vld [vmem:[#allocation5 + $0x418] sm:$0xff]
    %v2967 = vld [vmem:[#allocation5 + $0x420] sm:$0xff]
    %v2968 = vld [vmem:[#allocation5 + $0x428] sm:$0xff]
    %v2969 = vld [vmem:[#allocation5 + $0x430] sm:$0xff]
    %v2970 = vld [vmem:[#allocation5 + $0x438] sm:$0xff]
    %v2971 = vld [vmem:[#allocation5 + $0x440] sm:$0xff]
    %v2972 = vld [vmem:[#allocation5 + $0x448] sm:$0xff]
    %v2973 = vld [vmem:[#allocation5 + $0x450] sm:$0xff]
    %v2974 = vld [vmem:[#allocation5 + $0x458] sm:$0xff]
    %v2975 = vld [vmem:[#allocation5 + $0x460] sm:$0xff]
    %v2976 = vld [vmem:[#allocation5 + $0x468] sm:$0xff]
    %v2977 = vld [vmem:[#allocation5 + $0x470] sm:$0xff]
    %v2978 = vld [vmem:[#allocation5 + $0x478] sm:$0xff]
    %v2979 = vld [vmem:[#allocation5 + $0x480] sm:$0xff]
    %v2980 = vld [vmem:[#allocation5 + $0x488] sm:$0xff]
    %v2981 = vld [vmem:[#allocation5 + $0x490] sm:$0xff]
    %v2982 = vld [vmem:[#allocation5 + $0x498] sm:$0xff]
    %v2983 = vld [vmem:[#allocation5 + $0x4a0] sm:$0xff]
    %v2984 = vld [vmem:[#allocation5 + $0x4a8] sm:$0xff]
    %v2985 = vld [vmem:[#allocation5 + $0x4b0] sm:$0xff]
    %v2986 = vld [vmem:[#allocation5 + $0x4b8] sm:$0xff]
    %v2987 = vld [vmem:[#allocation5 + $0x4c0] sm:$0xff]
    %v2988 = vld [vmem:[#allocation5 + $0x4c8] sm:$0xff]
    %v2989 = vld [vmem:[#allocation5 + $0x4d0] sm:$0xff]
    %v2990 = vld [vmem:[#allocation5 + $0x4d8] sm:$0xff]
    %v2991 = vld [vmem:[#allocation5 + $0x4e0] sm:$0xff]
    %v2992 = vld [vmem:[#allocation5 + $0x4e8] sm:$0xff]
    %v2993 = vld [vmem:[#allocation5 + $0x4f0] sm:$0xff]
    %v2994 = vld [vmem:[#allocation5 + $0x4f8] sm:$0xff]
    %v2995 = vld [vmem:[#allocation5 + $0x500] sm:$0xff]
    %v2996 = vld [vmem:[#allocation5 + $0x508] sm:$0xff]
    %v2997 = vld [vmem:[#allocation5 + $0x510] sm:$0xff]
    %v2998 = vld [vmem:[#allocation5 + $0x518] sm:$0xff]
    %v2999 = vld [vmem:[#allocation5 + $0x520] sm:$0xff]
    %v3000 = vld [vmem:[#allocation5 + $0x528] sm:$0xff]
    %v3001 = vld [vmem:[#allocation5 + $0x530] sm:$0xff]
    %v3002 = vld [vmem:[#allocation5 + $0x538] sm:$0xff]
    %v3003 = vld [vmem:[#allocation5 + $0x540] sm:$0xff]
    %v3004 = vld [vmem:[#allocation5 + $0x548] sm:$0xff]
    %v3005 = vld [vmem:[#allocation5 + $0x550] sm:$0xff]
    %v3006 = vld [vmem:[#allocation5 + $0x558] sm:$0xff]
    %v3007 = vld [vmem:[#allocation5 + $0x560] sm:$0xff]
    %v3008 = vld [vmem:[#allocation5 + $0x568] sm:$0xff]
    %v3009 = vld [vmem:[#allocation5 + $0x570] sm:$0xff]
    %v3010 = vld [vmem:[#allocation5 + $0x578] sm:$0xff]
    %v3011 = vld [vmem:[#allocation5 + $0x580] sm:$0xff]
    %v3012 = vld [vmem:[#allocation5 + $0x588] sm:$0xff]
    %v3013 = vld [vmem:[#allocation5 + $0x590] sm:$0xff]
    %v3014 = vld [vmem:[#allocation5 + $0x598] sm:$0xff]
    %v3015 = vld [vmem:[#allocation5 + $0x5a0] sm:$0xff]
    %v3016 = vld [vmem:[#allocation5 + $0x5a8] sm:$0xff]
    %v3017 = vld [vmem:[#allocation5 + $0x5b0] sm:$0xff]
    %v3018 = vld [vmem:[#allocation5 + $0x5b8] sm:$0xff]
    %v3019 = vld [vmem:[#allocation5 + $0x5c0] sm:$0xff]
    %v3020 = vld [vmem:[#allocation5 + $0x5c8] sm:$0xff]
    %v3021 = vld [vmem:[#allocation5 + $0x5d0] sm:$0xff]
    %v3022 = vld [vmem:[#allocation5 + $0x5d8] sm:$0xff]
    %v3023 = vld [vmem:[#allocation5 + $0x5e0] sm:$0xff]
    %v3024 = vld [vmem:[#allocation5 + $0x5e8] sm:$0xff]
    %v3025 = vld [vmem:[#allocation5 + $0x5f0] sm:$0xff]
    %v3026 = vld [vmem:[#allocation5 + $0x5f8] sm:$0xff]
    %v3027 = vld [vmem:[#allocation5 + $0x600] sm:$0xff]
    %v3028 = vld [vmem:[#allocation5 + $0x608] sm:$0xff]
    %v3029 = vld [vmem:[#allocation5 + $0x610] sm:$0xff]
    %v3030 = vld [vmem:[#allocation5 + $0x618] sm:$0xff]
    %v3031 = vld [vmem:[#allocation5 + $0x620] sm:$0xff]
    %v3032 = vld [vmem:[#allocation5 + $0x628] sm:$0xff]
    %v3033 = vld [vmem:[#allocation5 + $0x630] sm:$0xff]
    %v3034 = vld [vmem:[#allocation5 + $0x638] sm:$0xff]
    %v3035 = vld [vmem:[#allocation5 + $0x640] sm:$0xff]
    %v3036 = vld [vmem:[#allocation5 + $0x648] sm:$0xff]
    %v3037 = vld [vmem:[#allocation5 + $0x650] sm:$0xff]
    %v3038 = vld [vmem:[#allocation5 + $0x658] sm:$0xff]
    %v3039 = vld [vmem:[#allocation5 + $0x660] sm:$0xff]
    %v3040 = vld [vmem:[#allocation5 + $0x668] sm:$0xff]
    %v3041 = vld [vmem:[#allocation5 + $0x670] sm:$0xff]
    %v3042 = vld [vmem:[#allocation5 + $0x678] sm:$0xff]
    %v3043 = vld [vmem:[#allocation5 + $0x680] sm:$0xff]
    %v3044 = vld [vmem:[#allocation5 + $0x688] sm:$0xff]
    %v3045 = vld [vmem:[#allocation5 + $0x690] sm:$0xff]
    %v3046 = vld [vmem:[#allocation5 + $0x698] sm:$0xff]
    %v3047 = vld [vmem:[#allocation5 + $0x6a0] sm:$0xff]
    %v3048 = vld [vmem:[#allocation5 + $0x6a8] sm:$0xff]
    %v3049 = vld [vmem:[#allocation5 + $0x6b0] sm:$0xff]
    %v3050 = vld [vmem:[#allocation5 + $0x6b8] sm:$0xff]
    %v3051 = vld [vmem:[#allocation5 + $0x6c0] sm:$0xff]
    %v3052 = vld [vmem:[#allocation5 + $0x6c8] sm:$0xff]
    %v3053 = vld [vmem:[#allocation5 + $0x6d0] sm:$0xff]
    %v3054 = vld [vmem:[#allocation5 + $0x6d8] sm:$0xff]
    %v3055 = vld [vmem:[#allocation5 + $0x6e0] sm:$0xff]
    %v3056 = vld [vmem:[#allocation5 + $0x6e8] sm:$0xff]
    %v3057 = vld [vmem:[#allocation5 + $0x6f0] sm:$0xff]
    %v3058 = vld [vmem:[#allocation5 + $0x6f8] sm:$0xff]
    %v3059 = vld [vmem:[#allocation5 + $0x700] sm:$0xff]
    %v3060 = vld [vmem:[#allocation5 + $0x708] sm:$0xff]
    %v3061 = vld [vmem:[#allocation5 + $0x710] sm:$0xff]
    %v3062 = vld [vmem:[#allocation5 + $0x718] sm:$0xff]
    %v3063 = vld [vmem:[#allocation5 + $0x720] sm:$0xff]
    %v3064 = vld [vmem:[#allocation5 + $0x728] sm:$0xff]
    %v3065 = vld [vmem:[#allocation5 + $0x730] sm:$0xff]
    %v3066 = vld [vmem:[#allocation5 + $0x738] sm:$0xff]
    %v3067 = vld [vmem:[#allocation5 + $0x740] sm:$0xff]
    %v3068 = vld [vmem:[#allocation5 + $0x748] sm:$0xff]
    %v3069 = vld [vmem:[#allocation5 + $0x750] sm:$0xff]
    %v3070 = vld [vmem:[#allocation5 + $0x758] sm:$0xff]
    %v3071 = vld [vmem:[#allocation5 + $0x760] sm:$0xff]
    %v3072 = vld [vmem:[#allocation5 + $0x768] sm:$0xff]
    %v3073 = vld [vmem:[#allocation5 + $0x770] sm:$0xff]
    %v3074 = vld [vmem:[#allocation5 + $0x778] sm:$0xff]
    %v3075 = vld [vmem:[#allocation5 + $0x780] sm:$0xff]
    %v3076 = vld [vmem:[#allocation5 + $0x788] sm:$0xff]
    %v3077 = vld [vmem:[#allocation5 + $0x790] sm:$0xff]
    %v3078 = vld [vmem:[#allocation5 + $0x798] sm:$0xff]
    %v3079 = vld [vmem:[#allocation5 + $0x7a0] sm:$0xff]
    %v3080 = vld [vmem:[#allocation5 + $0x7a8] sm:$0xff]
    %v3081 = vld [vmem:[#allocation5 + $0x7b0] sm:$0xff]
    %v3082 = vld [vmem:[#allocation5 + $0x7b8] sm:$0xff]
    %v3083 = vld [vmem:[#allocation5 + $0x7c0] sm:$0xff]
    %v3084 = vld [vmem:[#allocation5 + $0x7c8] sm:$0xff]
    %v3085 = vld [vmem:[#allocation5 + $0x7d0] sm:$0xff]
    %v3086 = vld [vmem:[#allocation5 + $0x7d8] sm:$0xff]
    %v3087 = vld [vmem:[#allocation5 + $0x7e0] sm:$0xff]
    %v3088 = vld [vmem:[#allocation5 + $0x7e8] sm:$0xff]
    %v3089 = vld [vmem:[#allocation5 + $0x7f0] sm:$0xff]
    %v3090 = vld [vmem:[#allocation5 + $0x7f8] sm:$0xff]
    %v3091 = vld [vmem:[%s15] sm:$0xff]
    %v3093 = vlaneseq
    %v3094 = vshrl.u32 %v3093, 7
    %v3095 = vsub.s32 0, %v3094
    %v3096 = vrot.slane %v3091, %v3095
    %v3097 = vlaneseq
    %v3098 = vshrl.u32 %v3097, 7
    %v3099 = vsub.s32 1, %v3098
    %v3100 = vrot.slane %v3091, %v3099
    %v3101 = vlaneseq
    %v3102 = vshrl.u32 %v3101, 7
    %v3103 = vsub.s32 2, %v3102
    %v3104 = vrot.slane %v3091, %v3103
    %v3105 = vlaneseq
    %v3106 = vshrl.u32 %v3105, 7
    %v3107 = vsub.s32 3, %v3106
    %v3108 = vrot.slane %v3091, %v3107
    %v3109 = vlaneseq
    %v3110 = vshrl.u32 %v3109, 7
    %v3111 = vsub.s32 4, %v3110
    %v3112 = vrot.slane %v3091, %v3111
    %v3113 = vlaneseq
    %v3114 = vshrl.u32 %v3113, 7
    %v3115 = vsub.s32 5, %v3114
    %v3116 = vrot.slane %v3091, %v3115
    %v3117 = vlaneseq
    %v3118 = vshrl.u32 %v3117, 7
    %v3119 = vsub.s32 6, %v3118
    %v3120 = vrot.slane %v3091, %v3119
    %v3121 = vlaneseq
    %v3122 = vshrl.u32 %v3121, 7
    %v3123 = vsub.s32 7, %v3122
    %v3124 = vrot.slane %v3091, %v3123
    %v3389 = vunpack.c.l.b16 %v2835
    %v3390 = vunpack.c.h.b16 %v2835
    %v3391 = vunpack.c.l.b16 %v2836
    %v3392 = vunpack.c.h.b16 %v2836
    %v3393 = vunpack.c.l.b16 %v2837
    %v3394 = vunpack.c.h.b16 %v2837
    %v3395 = vunpack.c.l.b16 %v2838
    %v3396 = vunpack.c.h.b16 %v2838
    %v3397 = vunpack.c.l.b16 %v2839
    %v3398 = vunpack.c.h.b16 %v2839
    %v3399 = vunpack.c.l.b16 %v2840
    %v3400 = vunpack.c.h.b16 %v2840
    %v3401 = vunpack.c.l.b16 %v2841
    %v3402 = vunpack.c.h.b16 %v2841
    %v3403 = vunpack.c.l.b16 %v2842
    %v3404 = vunpack.c.h.b16 %v2842
    %v3405 = vunpack.c.l.b16 %v2843
    %v3406 = vunpack.c.h.b16 %v2843
    %v3407 = vunpack.c.l.b16 %v2844
    %v3408 = vunpack.c.h.b16 %v2844
    %v3409 = vunpack.c.l.b16 %v2845
    %v3410 = vunpack.c.h.b16 %v2845
    %v3411 = vunpack.c.l.b16 %v2846
    %v3412 = vunpack.c.h.b16 %v2846
    %v3413 = vunpack.c.l.b16 %v2847
    %v3414 = vunpack.c.h.b16 %v2847
    %v3415 = vunpack.c.l.b16 %v2848
    %v3416 = vunpack.c.h.b16 %v2848
    %v3417 = vunpack.c.l.b16 %v2849
    %v3418 = vunpack.c.h.b16 %v2849
    %v3419 = vunpack.c.l.b16 %v2850
    %v3420 = vunpack.c.h.b16 %v2850
    %v3421 = vunpack.c.l.b16 %v2851
    %v3422 = vunpack.c.h.b16 %v2851
    %v3423 = vunpack.c.l.b16 %v2852
    %v3424 = vunpack.c.h.b16 %v2852
    %v3425 = vunpack.c.l.b16 %v2853
    %v3426 = vunpack.c.h.b16 %v2853
    %v3427 = vunpack.c.l.b16 %v2854
    %v3428 = vunpack.c.h.b16 %v2854
    %v3429 = vunpack.c.l.b16 %v2855
    %v3430 = vunpack.c.h.b16 %v2855
    %v3431 = vunpack.c.l.b16 %v2856
    %v3432 = vunpack.c.h.b16 %v2856
    %v3433 = vunpack.c.l.b16 %v2857
    %v3434 = vunpack.c.h.b16 %v2857
    %v3435 = vunpack.c.l.b16 %v2858
    %v3436 = vunpack.c.h.b16 %v2858
    %v3437 = vunpack.c.l.b16 %v2859
    %v3438 = vunpack.c.h.b16 %v2859
    %v3439 = vunpack.c.l.b16 %v2860
    %v3440 = vunpack.c.h.b16 %v2860
    %v3441 = vunpack.c.l.b16 %v2861
    %v3442 = vunpack.c.h.b16 %v2861
    %v3443 = vunpack.c.l.b16 %v2862
    %v3444 = vunpack.c.h.b16 %v2862
    %v3445 = vunpack.c.l.b16 %v2863
    %v3446 = vunpack.c.h.b16 %v2863
    %v3447 = vunpack.c.l.b16 %v2864
    %v3448 = vunpack.c.h.b16 %v2864
    %v3449 = vunpack.c.l.b16 %v2865
    %v3450 = vunpack.c.h.b16 %v2865
    %v3451 = vunpack.c.l.b16 %v2866
    %v3452 = vunpack.c.h.b16 %v2866
    %v3453 = vunpack.c.l.b16 %v2867
    %v3454 = vunpack.c.h.b16 %v2867
    %v3455 = vunpack.c.l.b16 %v2868
    %v3456 = vunpack.c.h.b16 %v2868
    %v3457 = vunpack.c.l.b16 %v2869
    %v3458 = vunpack.c.h.b16 %v2869
    %v3459 = vunpack.c.l.b16 %v2870
    %v3460 = vunpack.c.h.b16 %v2870
    %v3461 = vunpack.c.l.b16 %v2871
    %v3462 = vunpack.c.h.b16 %v2871
    %v3463 = vunpack.c.l.b16 %v2872
    %v3464 = vunpack.c.h.b16 %v2872
    %v3465 = vunpack.c.l.b16 %v2873
    %v3466 = vunpack.c.h.b16 %v2873
    %v3467 = vunpack.c.l.b16 %v2874
    %v3468 = vunpack.c.h.b16 %v2874
    %v3469 = vunpack.c.l.b16 %v2875
    %v3470 = vunpack.c.h.b16 %v2875
    %v3471 = vunpack.c.l.b16 %v2876
    %v3472 = vunpack.c.h.b16 %v2876
    %v3473 = vunpack.c.l.b16 %v2877
    %v3474 = vunpack.c.h.b16 %v2877
    %v3475 = vunpack.c.l.b16 %v2878
    %v3476 = vunpack.c.h.b16 %v2878
    %v3477 = vunpack.c.l.b16 %v2879
    %v3478 = vunpack.c.h.b16 %v2879
    %v3479 = vunpack.c.l.b16 %v2880
    %v3480 = vunpack.c.h.b16 %v2880
    %v3481 = vunpack.c.l.b16 %v2881
    %v3482 = vunpack.c.h.b16 %v2881
    %v3483 = vunpack.c.l.b16 %v2882
    %v3484 = vunpack.c.h.b16 %v2882
    %v3485 = vunpack.c.l.b16 %v2883
    %v3486 = vunpack.c.h.b16 %v2883
    %v3487 = vunpack.c.l.b16 %v2884
    %v3488 = vunpack.c.h.b16 %v2884
    %v3489 = vunpack.c.l.b16 %v2885
    %v3490 = vunpack.c.h.b16 %v2885
    %v3491 = vunpack.c.l.b16 %v2886
    %v3492 = vunpack.c.h.b16 %v2886
    %v3493 = vunpack.c.l.b16 %v2887
    %v3494 = vunpack.c.h.b16 %v2887
    %v3495 = vunpack.c.l.b16 %v2888
    %v3496 = vunpack.c.h.b16 %v2888
    %v3497 = vunpack.c.l.b16 %v2889
    %v3498 = vunpack.c.h.b16 %v2889
    %v3499 = vunpack.c.l.b16 %v2890
    %v3500 = vunpack.c.h.b16 %v2890
    %v3501 = vunpack.c.l.b16 %v2891
    %v3502 = vunpack.c.h.b16 %v2891
    %v3503 = vunpack.c.l.b16 %v2892
    %v3504 = vunpack.c.h.b16 %v2892
    %v3505 = vunpack.c.l.b16 %v2893
    %v3506 = vunpack.c.h.b16 %v2893
    %v3507 = vunpack.c.l.b16 %v2894
    %v3508 = vunpack.c.h.b16 %v2894
    %v3509 = vunpack.c.l.b16 %v2895
    %v3510 = vunpack.c.h.b16 %v2895
    %v3511 = vunpack.c.l.b16 %v2896
    %v3512 = vunpack.c.h.b16 %v2896
    %v3513 = vunpack.c.l.b16 %v2897
    %v3514 = vunpack.c.h.b16 %v2897
    %v3515 = vunpack.c.l.b16 %v2898
    %v3516 = vunpack.c.h.b16 %v2898
    %v3517 = vunpack.c.l.b16 %v2899
    %v3518 = vunpack.c.h.b16 %v2899
    %v3519 = vunpack.c.l.b16 %v2900
    %v3520 = vunpack.c.h.b16 %v2900
    %v3521 = vunpack.c.l.b16 %v2901
    %v3522 = vunpack.c.h.b16 %v2901
    %v3523 = vunpack.c.l.b16 %v2902
    %v3524 = vunpack.c.h.b16 %v2902
    %v3525 = vunpack.c.l.b16 %v2903
    %v3526 = vunpack.c.h.b16 %v2903
    %v3527 = vunpack.c.l.b16 %v2904
    %v3528 = vunpack.c.h.b16 %v2904
    %v3529 = vunpack.c.l.b16 %v2905
    %v3530 = vunpack.c.h.b16 %v2905
    %v3531 = vunpack.c.l.b16 %v2906
    %v3532 = vunpack.c.h.b16 %v2906
    %v3533 = vunpack.c.l.b16 %v2907
    %v3534 = vunpack.c.h.b16 %v2907
    %v3535 = vunpack.c.l.b16 %v2908
    %v3536 = vunpack.c.h.b16 %v2908
    %v3537 = vunpack.c.l.b16 %v2909
    %v3538 = vunpack.c.h.b16 %v2909
    %v3539 = vunpack.c.l.b16 %v2910
    %v3540 = vunpack.c.h.b16 %v2910
    %v3541 = vunpack.c.l.b16 %v2911
    %v3542 = vunpack.c.h.b16 %v2911
    %v3543 = vunpack.c.l.b16 %v2912
    %v3544 = vunpack.c.h.b16 %v2912
    %v3545 = vunpack.c.l.b16 %v2913
    %v3546 = vunpack.c.h.b16 %v2913
    %v3547 = vunpack.c.l.b16 %v2914
    %v3548 = vunpack.c.h.b16 %v2914
    %v3549 = vunpack.c.l.b16 %v2915
    %v3550 = vunpack.c.h.b16 %v2915
    %v3551 = vunpack.c.l.b16 %v2916
    %v3552 = vunpack.c.h.b16 %v2916
    %v3553 = vunpack.c.l.b16 %v2917
    %v3554 = vunpack.c.h.b16 %v2917
    %v3555 = vunpack.c.l.b16 %v2918
    %v3556 = vunpack.c.h.b16 %v2918
    %v3557 = vunpack.c.l.b16 %v2919
    %v3558 = vunpack.c.h.b16 %v2919
    %v3559 = vunpack.c.l.b16 %v2920
    %v3560 = vunpack.c.h.b16 %v2920
    %v3561 = vunpack.c.l.b16 %v2921
    %v3562 = vunpack.c.h.b16 %v2921
    %v3563 = vunpack.c.l.b16 %v2922
    %v3564 = vunpack.c.h.b16 %v2922
    %v3565 = vunpack.c.l.b16 %v2923
    %v3566 = vunpack.c.h.b16 %v2923
    %v3567 = vunpack.c.l.b16 %v2924
    %v3568 = vunpack.c.h.b16 %v2924
    %v3569 = vunpack.c.l.b16 %v2925
    %v3570 = vunpack.c.h.b16 %v2925
    %v3571 = vunpack.c.l.b16 %v2926
    %v3572 = vunpack.c.h.b16 %v2926
    %v3573 = vunpack.c.l.b16 %v2927
    %v3574 = vunpack.c.h.b16 %v2927
    %v3575 = vunpack.c.l.b16 %v2928
    %v3576 = vunpack.c.h.b16 %v2928
    %v3577 = vunpack.c.l.b16 %v2929
    %v3578 = vunpack.c.h.b16 %v2929
    %v3579 = vunpack.c.l.b16 %v2930
    %v3580 = vunpack.c.h.b16 %v2930
    %v3581 = vunpack.c.l.b16 %v2931
    %v3582 = vunpack.c.h.b16 %v2931
    %v3583 = vunpack.c.l.b16 %v2932
    %v3584 = vunpack.c.h.b16 %v2932
    %v3585 = vunpack.c.l.b16 %v2933
    %v3586 = vunpack.c.h.b16 %v2933
    %v3587 = vunpack.c.l.b16 %v2934
    %v3588 = vunpack.c.h.b16 %v2934
    %v3589 = vunpack.c.l.b16 %v2935
    %v3590 = vunpack.c.h.b16 %v2935
    %v3591 = vunpack.c.l.b16 %v2936
    %v3592 = vunpack.c.h.b16 %v2936
    %v3593 = vunpack.c.l.b16 %v2937
    %v3594 = vunpack.c.h.b16 %v2937
    %v3595 = vunpack.c.l.b16 %v2938
    %v3596 = vunpack.c.h.b16 %v2938
    %v3597 = vunpack.c.l.b16 %v2939
    %v3598 = vunpack.c.h.b16 %v2939
    %v3599 = vunpack.c.l.b16 %v2940
    %v3600 = vunpack.c.h.b16 %v2940
    %v3601 = vunpack.c.l.b16 %v2941
    %v3602 = vunpack.c.h.b16 %v2941
    %v3603 = vunpack.c.l.b16 %v2942
    %v3604 = vunpack.c.h.b16 %v2942
    %v3605 = vunpack.c.l.b16 %v2943
    %v3606 = vunpack.c.h.b16 %v2943
    %v3607 = vunpack.c.l.b16 %v2944
    %v3608 = vunpack.c.h.b16 %v2944
    %v3609 = vunpack.c.l.b16 %v2945
    %v3610 = vunpack.c.h.b16 %v2945
    %v3611 = vunpack.c.l.b16 %v2946
    %v3612 = vunpack.c.h.b16 %v2946
    %v3613 = vunpack.c.l.b16 %v2947
    %v3614 = vunpack.c.h.b16 %v2947
    %v3615 = vunpack.c.l.b16 %v2948
    %v3616 = vunpack.c.h.b16 %v2948
    %v3617 = vunpack.c.l.b16 %v2949
    %v3618 = vunpack.c.h.b16 %v2949
    %v3619 = vunpack.c.l.b16 %v2950
    %v3620 = vunpack.c.h.b16 %v2950
    %v3621 = vunpack.c.l.b16 %v2951
    %v3622 = vunpack.c.h.b16 %v2951
    %v3623 = vunpack.c.l.b16 %v2952
    %v3624 = vunpack.c.h.b16 %v2952
    %v3625 = vunpack.c.l.b16 %v2953
    %v3626 = vunpack.c.h.b16 %v2953
    %v3627 = vunpack.c.l.b16 %v2954
    %v3628 = vunpack.c.h.b16 %v2954
    %v3629 = vunpack.c.l.b16 %v2955
    %v3630 = vunpack.c.h.b16 %v2955
    %v3631 = vunpack.c.l.b16 %v2956
    %v3632 = vunpack.c.h.b16 %v2956
    %v3633 = vunpack.c.l.b16 %v2957
    %v3634 = vunpack.c.h.b16 %v2957
    %v3635 = vunpack.c.l.b16 %v2958
    %v3636 = vunpack.c.h.b16 %v2958
    %v3637 = vunpack.c.l.b16 %v2959
    %v3638 = vunpack.c.h.b16 %v2959
    %v3639 = vunpack.c.l.b16 %v2960
    %v3640 = vunpack.c.h.b16 %v2960
    %v3641 = vunpack.c.l.b16 %v2961
    %v3642 = vunpack.c.h.b16 %v2961
    %v3643 = vunpack.c.l.b16 %v2962
    %v3644 = vunpack.c.h.b16 %v2962
    %v3645 = vunpack.c.l.b16 %v2963
    %v3646 = vunpack.c.h.b16 %v2963
    %v3647 = vunpack.c.l.b16 %v2964
    %v3648 = vunpack.c.h.b16 %v2964
    %v3649 = vunpack.c.l.b16 %v2965
    %v3650 = vunpack.c.h.b16 %v2965
    %v3651 = vunpack.c.l.b16 %v2966
    %v3652 = vunpack.c.h.b16 %v2966
    %v3653 = vunpack.c.l.b16 %v2967
    %v3654 = vunpack.c.h.b16 %v2967
    %v3655 = vunpack.c.l.b16 %v2968
    %v3656 = vunpack.c.h.b16 %v2968
    %v3657 = vunpack.c.l.b16 %v2969
    %v3658 = vunpack.c.h.b16 %v2969
    %v3659 = vunpack.c.l.b16 %v2970
    %v3660 = vunpack.c.h.b16 %v2970
    %v3661 = vunpack.c.l.b16 %v2971
    %v3662 = vunpack.c.h.b16 %v2971
    %v3663 = vunpack.c.l.b16 %v2972
    %v3664 = vunpack.c.h.b16 %v2972
    %v3665 = vunpack.c.l.b16 %v2973
    %v3666 = vunpack.c.h.b16 %v2973
    %v3667 = vunpack.c.l.b16 %v2974
    %v3668 = vunpack.c.h.b16 %v2974
    %v3669 = vunpack.c.l.b16 %v2975
    %v3670 = vunpack.c.h.b16 %v2975
    %v3671 = vunpack.c.l.b16 %v2976
    %v3672 = vunpack.c.h.b16 %v2976
    %v3673 = vunpack.c.l.b16 %v2977
    %v3674 = vunpack.c.h.b16 %v2977
    %v3675 = vunpack.c.l.b16 %v2978
    %v3676 = vunpack.c.h.b16 %v2978
    %v3677 = vunpack.c.l.b16 %v2979
    %v3678 = vunpack.c.h.b16 %v2979
    %v3679 = vunpack.c.l.b16 %v2980
    %v3680 = vunpack.c.h.b16 %v2980
    %v3681 = vunpack.c.l.b16 %v2981
    %v3682 = vunpack.c.h.b16 %v2981
    %v3683 = vunpack.c.l.b16 %v2982
    %v3684 = vunpack.c.h.b16 %v2982
    %v3685 = vunpack.c.l.b16 %v2983
    %v3686 = vunpack.c.h.b16 %v2983
    %v3687 = vunpack.c.l.b16 %v2984
    %v3688 = vunpack.c.h.b16 %v2984
    %v3689 = vunpack.c.l.b16 %v2985
    %v3690 = vunpack.c.h.b16 %v2985
    %v3691 = vunpack.c.l.b16 %v2986
    %v3692 = vunpack.c.h.b16 %v2986
    %v3693 = vunpack.c.l.b16 %v2987
    %v3694 = vunpack.c.h.b16 %v2987
    %v3695 = vunpack.c.l.b16 %v2988
    %v3696 = vunpack.c.h.b16 %v2988
    %v3697 = vunpack.c.l.b16 %v2989
    %v3698 = vunpack.c.h.b16 %v2989
    %v3699 = vunpack.c.l.b16 %v2990
    %v3700 = vunpack.c.h.b16 %v2990
    %v3701 = vunpack.c.l.b16 %v2991
    %v3702 = vunpack.c.h.b16 %v2991
    %v3703 = vunpack.c.l.b16 %v2992
    %v3704 = vunpack.c.h.b16 %v2992
    %v3705 = vunpack.c.l.b16 %v2993
    %v3706 = vunpack.c.h.b16 %v2993
    %v3707 = vunpack.c.l.b16 %v2994
    %v3708 = vunpack.c.h.b16 %v2994
    %v3709 = vunpack.c.l.b16 %v2995
    %v3710 = vunpack.c.h.b16 %v2995
    %v3711 = vunpack.c.l.b16 %v2996
    %v3712 = vunpack.c.h.b16 %v2996
    %v3713 = vunpack.c.l.b16 %v2997
    %v3714 = vunpack.c.h.b16 %v2997
    %v3715 = vunpack.c.l.b16 %v2998
    %v3716 = vunpack.c.h.b16 %v2998
    %v3717 = vunpack.c.l.b16 %v2999
    %v3718 = vunpack.c.h.b16 %v2999
    %v3719 = vunpack.c.l.b16 %v3000
    %v3720 = vunpack.c.h.b16 %v3000
    %v3721 = vunpack.c.l.b16 %v3001
    %v3722 = vunpack.c.h.b16 %v3001
    %v3723 = vunpack.c.l.b16 %v3002
    %v3724 = vunpack.c.h.b16 %v3002
    %v3725 = vunpack.c.l.b16 %v3003
    %v3726 = vunpack.c.h.b16 %v3003
    %v3727 = vunpack.c.l.b16 %v3004
    %v3728 = vunpack.c.h.b16 %v3004
    %v3729 = vunpack.c.l.b16 %v3005
    %v3730 = vunpack.c.h.b16 %v3005
    %v3731 = vunpack.c.l.b16 %v3006
    %v3732 = vunpack.c.h.b16 %v3006
    %v3733 = vunpack.c.l.b16 %v3007
    %v3734 = vunpack.c.h.b16 %v3007
    %v3735 = vunpack.c.l.b16 %v3008
    %v3736 = vunpack.c.h.b16 %v3008
    %v3737 = vunpack.c.l.b16 %v3009
    %v3738 = vunpack.c.h.b16 %v3009
    %v3739 = vunpack.c.l.b16 %v3010
    %v3740 = vunpack.c.h.b16 %v3010
    %v3741 = vunpack.c.l.b16 %v3011
    %v3742 = vunpack.c.h.b16 %v3011
    %v3743 = vunpack.c.l.b16 %v3012
    %v3744 = vunpack.c.h.b16 %v3012
    %v3745 = vunpack.c.l.b16 %v3013
    %v3746 = vunpack.c.h.b16 %v3013
    %v3747 = vunpack.c.l.b16 %v3014
    %v3748 = vunpack.c.h.b16 %v3014
    %v3749 = vunpack.c.l.b16 %v3015
    %v3750 = vunpack.c.h.b16 %v3015
    %v3751 = vunpack.c.l.b16 %v3016
    %v3752 = vunpack.c.h.b16 %v3016
    %v3753 = vunpack.c.l.b16 %v3017
    %v3754 = vunpack.c.h.b16 %v3017
    %v3755 = vunpack.c.l.b16 %v3018
    %v3756 = vunpack.c.h.b16 %v3018
    %v3757 = vunpack.c.l.b16 %v3019
    %v3758 = vunpack.c.h.b16 %v3019
    %v3759 = vunpack.c.l.b16 %v3020
    %v3760 = vunpack.c.h.b16 %v3020
    %v3761 = vunpack.c.l.b16 %v3021
    %v3762 = vunpack.c.h.b16 %v3021
    %v3763 = vunpack.c.l.b16 %v3022
    %v3764 = vunpack.c.h.b16 %v3022
    %v3765 = vunpack.c.l.b16 %v3023
    %v3766 = vunpack.c.h.b16 %v3023
    %v3767 = vunpack.c.l.b16 %v3024
    %v3768 = vunpack.c.h.b16 %v3024
    %v3769 = vunpack.c.l.b16 %v3025
    %v3770 = vunpack.c.h.b16 %v3025
    %v3771 = vunpack.c.l.b16 %v3026
    %v3772 = vunpack.c.h.b16 %v3026
    %v3773 = vunpack.c.l.b16 %v3027
    %v3774 = vunpack.c.h.b16 %v3027
    %v3775 = vunpack.c.l.b16 %v3028
    %v3776 = vunpack.c.h.b16 %v3028
    %v3777 = vunpack.c.l.b16 %v3029
    %v3778 = vunpack.c.h.b16 %v3029
    %v3779 = vunpack.c.l.b16 %v3030
    %v3780 = vunpack.c.h.b16 %v3030
    %v3781 = vunpack.c.l.b16 %v3031
    %v3782 = vunpack.c.h.b16 %v3031
    %v3783 = vunpack.c.l.b16 %v3032
    %v3784 = vunpack.c.h.b16 %v3032
    %v3785 = vunpack.c.l.b16 %v3033
    %v3786 = vunpack.c.h.b16 %v3033
    %v3787 = vunpack.c.l.b16 %v3034
    %v3788 = vunpack.c.h.b16 %v3034
    %v3789 = vunpack.c.l.b16 %v3035
    %v3790 = vunpack.c.h.b16 %v3035
    %v3791 = vunpack.c.l.b16 %v3036
    %v3792 = vunpack.c.h.b16 %v3036
    %v3793 = vunpack.c.l.b16 %v3037
    %v3794 = vunpack.c.h.b16 %v3037
    %v3795 = vunpack.c.l.b16 %v3038
    %v3796 = vunpack.c.h.b16 %v3038
    %v3797 = vunpack.c.l.b16 %v3039
    %v3798 = vunpack.c.h.b16 %v3039
    %v3799 = vunpack.c.l.b16 %v3040
    %v3800 = vunpack.c.h.b16 %v3040
    %v3801 = vunpack.c.l.b16 %v3041
    %v3802 = vunpack.c.h.b16 %v3041
    %v3803 = vunpack.c.l.b16 %v3042
    %v3804 = vunpack.c.h.b16 %v3042
    %v3805 = vunpack.c.l.b16 %v3043
    %v3806 = vunpack.c.h.b16 %v3043
    %v3807 = vunpack.c.l.b16 %v3044
    %v3808 = vunpack.c.h.b16 %v3044
    %v3809 = vunpack.c.l.b16 %v3045
    %v3810 = vunpack.c.h.b16 %v3045
    %v3811 = vunpack.c.l.b16 %v3046
    %v3812 = vunpack.c.h.b16 %v3046
    %v3813 = vunpack.c.l.b16 %v3047
    %v3814 = vunpack.c.h.b16 %v3047
    %v3815 = vunpack.c.l.b16 %v3048
    %v3816 = vunpack.c.h.b16 %v3048
    %v3817 = vunpack.c.l.b16 %v3049
    %v3818 = vunpack.c.h.b16 %v3049
    %v3819 = vunpack.c.l.b16 %v3050
    %v3820 = vunpack.c.h.b16 %v3050
    %v3821 = vunpack.c.l.b16 %v3051
    %v3822 = vunpack.c.h.b16 %v3051
    %v3823 = vunpack.c.l.b16 %v3052
    %v3824 = vunpack.c.h.b16 %v3052
    %v3825 = vunpack.c.l.b16 %v3053
    %v3826 = vunpack.c.h.b16 %v3053
    %v3827 = vunpack.c.l.b16 %v3054
    %v3828 = vunpack.c.h.b16 %v3054
    %v3829 = vunpack.c.l.b16 %v3055
    %v3830 = vunpack.c.h.b16 %v3055
    %v3831 = vunpack.c.l.b16 %v3056
    %v3832 = vunpack.c.h.b16 %v3056
    %v3833 = vunpack.c.l.b16 %v3057
    %v3834 = vunpack.c.h.b16 %v3057
    %v3835 = vunpack.c.l.b16 %v3058
    %v3836 = vunpack.c.h.b16 %v3058
    %v3837 = vunpack.c.l.b16 %v3059
    %v3838 = vunpack.c.h.b16 %v3059
    %v3839 = vunpack.c.l.b16 %v3060
    %v3840 = vunpack.c.h.b16 %v3060
    %v3841 = vunpack.c.l.b16 %v3061
    %v3842 = vunpack.c.h.b16 %v3061
    %v3843 = vunpack.c.l.b16 %v3062
    %v3844 = vunpack.c.h.b16 %v3062
    %v3845 = vunpack.c.l.b16 %v3063
    %v3846 = vunpack.c.h.b16 %v3063
    %v3847 = vunpack.c.l.b16 %v3064
    %v3848 = vunpack.c.h.b16 %v3064
    %v3849 = vunpack.c.l.b16 %v3065
    %v3850 = vunpack.c.h.b16 %v3065
    %v3851 = vunpack.c.l.b16 %v3066
    %v3852 = vunpack.c.h.b16 %v3066
    %v3853 = vunpack.c.l.b16 %v3067
    %v3854 = vunpack.c.h.b16 %v3067
    %v3855 = vunpack.c.l.b16 %v3068
    %v3856 = vunpack.c.h.b16 %v3068
    %v3857 = vunpack.c.l.b16 %v3069
    %v3858 = vunpack.c.h.b16 %v3069
    %v3859 = vunpack.c.l.b16 %v3070
    %v3860 = vunpack.c.h.b16 %v3070
    %v3861 = vunpack.c.l.b16 %v3071
    %v3862 = vunpack.c.h.b16 %v3071
    %v3863 = vunpack.c.l.b16 %v3072
    %v3864 = vunpack.c.h.b16 %v3072
    %v3865 = vunpack.c.l.b16 %v3073
    %v3866 = vunpack.c.h.b16 %v3073
    %v3867 = vunpack.c.l.b16 %v3074
    %v3868 = vunpack.c.h.b16 %v3074
    %v3869 = vunpack.c.l.b16 %v3075
    %v3870 = vunpack.c.h.b16 %v3075
    %v3871 = vunpack.c.l.b16 %v3076
    %v3872 = vunpack.c.h.b16 %v3076
    %v3873 = vunpack.c.l.b16 %v3077
    %v3874 = vunpack.c.h.b16 %v3077
    %v3875 = vunpack.c.l.b16 %v3078
    %v3876 = vunpack.c.h.b16 %v3078
    %v3877 = vunpack.c.l.b16 %v3079
    %v3878 = vunpack.c.h.b16 %v3079
    %v3879 = vunpack.c.l.b16 %v3080
    %v3880 = vunpack.c.h.b16 %v3080
    %v3881 = vunpack.c.l.b16 %v3081
    %v3882 = vunpack.c.h.b16 %v3081
    %v3883 = vunpack.c.l.b16 %v3082
    %v3884 = vunpack.c.h.b16 %v3082
    %v3885 = vunpack.c.l.b16 %v3083
    %v3886 = vunpack.c.h.b16 %v3083
    %v3887 = vunpack.c.l.b16 %v3084
    %v3888 = vunpack.c.h.b16 %v3084
    %v3889 = vunpack.c.l.b16 %v3085
    %v3890 = vunpack.c.h.b16 %v3085
    %v3891 = vunpack.c.l.b16 %v3086
    %v3892 = vunpack.c.h.b16 %v3086
    %v3893 = vunpack.c.l.b16 %v3087
    %v3894 = vunpack.c.h.b16 %v3087
    %v3895 = vunpack.c.l.b16 %v3088
    %v3896 = vunpack.c.h.b16 %v3088
    %v3897 = vunpack.c.l.b16 %v3089
    %v3898 = vunpack.c.h.b16 %v3089
    %v3899 = vunpack.c.l.b16 %v3090
    %v3900 = vunpack.c.h.b16 %v3090
    %v3901 = vpack.c.b16 %v3397, %v3389
    %v3902 = vpack.c.b16 %v3398, %v3390
    %v3903 = vpack.c.b16 %v3399, %v3391
    %v3904 = vpack.c.b16 %v3400, %v3392
    %v3905 = vpack.c.b16 %v3401, %v3393
    %v3906 = vpack.c.b16 %v3402, %v3394
    %v3907 = vpack.c.b16 %v3403, %v3395
    %v3908 = vpack.c.b16 %v3404, %v3396
    %v3909 = vpack.c.b16 %v3413, %v3405
    %v3910 = vpack.c.b16 %v3414, %v3406
    %v3911 = vpack.c.b16 %v3415, %v3407
    %v3912 = vpack.c.b16 %v3416, %v3408
    %v3913 = vpack.c.b16 %v3417, %v3409
    %v3914 = vpack.c.b16 %v3418, %v3410
    %v3915 = vpack.c.b16 %v3419, %v3411
    %v3916 = vpack.c.b16 %v3420, %v3412
    %v3917 = vpack.c.b16 %v3429, %v3421
    %v3918 = vpack.c.b16 %v3430, %v3422
    %v3919 = vpack.c.b16 %v3431, %v3423
    %v3920 = vpack.c.b16 %v3432, %v3424
    %v3921 = vpack.c.b16 %v3433, %v3425
    %v3922 = vpack.c.b16 %v3434, %v3426
    %v3923 = vpack.c.b16 %v3435, %v3427
    %v3924 = vpack.c.b16 %v3436, %v3428
    %v3925 = vpack.c.b16 %v3445, %v3437
    %v3926 = vpack.c.b16 %v3446, %v3438
    %v3927 = vpack.c.b16 %v3447, %v3439
    %v3928 = vpack.c.b16 %v3448, %v3440
    %v3929 = vpack.c.b16 %v3449, %v3441
    %v3930 = vpack.c.b16 %v3450, %v3442
    %v3931 = vpack.c.b16 %v3451, %v3443
    %v3932 = vpack.c.b16 %v3452, %v3444
    %v3933 = vpack.c.b16 %v3461, %v3453
    %v3934 = vpack.c.b16 %v3462, %v3454
    %v3935 = vpack.c.b16 %v3463, %v3455
    %v3936 = vpack.c.b16 %v3464, %v3456
    %v3937 = vpack.c.b16 %v3465, %v3457
    %v3938 = vpack.c.b16 %v3466, %v3458
    %v3939 = vpack.c.b16 %v3467, %v3459
    %v3940 = vpack.c.b16 %v3468, %v3460
    %v3941 = vpack.c.b16 %v3477, %v3469
    %v3942 = vpack.c.b16 %v3478, %v3470
    %v3943 = vpack.c.b16 %v3479, %v3471
    %v3944 = vpack.c.b16 %v3480, %v3472
    %v3945 = vpack.c.b16 %v3481, %v3473
    %v3946 = vpack.c.b16 %v3482, %v3474
    %v3947 = vpack.c.b16 %v3483, %v3475
    %v3948 = vpack.c.b16 %v3484, %v3476
    %v3949 = vpack.c.b16 %v3493, %v3485
    %v3950 = vpack.c.b16 %v3494, %v3486
    %v3951 = vpack.c.b16 %v3495, %v3487
    %v3952 = vpack.c.b16 %v3496, %v3488
    %v3953 = vpack.c.b16 %v3497, %v3489
    %v3954 = vpack.c.b16 %v3498, %v3490
    %v3955 = vpack.c.b16 %v3499, %v3491
    %v3956 = vpack.c.b16 %v3500, %v3492
    %v3957 = vpack.c.b16 %v3509, %v3501
    %v3958 = vpack.c.b16 %v3510, %v3502
    %v3959 = vpack.c.b16 %v3511, %v3503
    %v3960 = vpack.c.b16 %v3512, %v3504
    %v3961 = vpack.c.b16 %v3513, %v3505
    %v3962 = vpack.c.b16 %v3514, %v3506
    %v3963 = vpack.c.b16 %v3515, %v3507
    %v3964 = vpack.c.b16 %v3516, %v3508
    %v3965 = vpack.c.b16 %v3525, %v3517
    %v3966 = vpack.c.b16 %v3526, %v3518
    %v3967 = vpack.c.b16 %v3527, %v3519
    %v3968 = vpack.c.b16 %v3528, %v3520
    %v3969 = vpack.c.b16 %v3529, %v3521
    %v3970 = vpack.c.b16 %v3530, %v3522
    %v3971 = vpack.c.b16 %v3531, %v3523
    %v3972 = vpack.c.b16 %v3532, %v3524
    %v3973 = vpack.c.b16 %v3541, %v3533
    %v3974 = vpack.c.b16 %v3542, %v3534
    %v3975 = vpack.c.b16 %v3543, %v3535
    %v3976 = vpack.c.b16 %v3544, %v3536
    %v3977 = vpack.c.b16 %v3545, %v3537
    %v3978 = vpack.c.b16 %v3546, %v3538
    %v3979 = vpack.c.b16 %v3547, %v3539
    %v3980 = vpack.c.b16 %v3548, %v3540
    %v3981 = vpack.c.b16 %v3557, %v3549
    %v3982 = vpack.c.b16 %v3558, %v3550
    %v3983 = vpack.c.b16 %v3559, %v3551
    %v3984 = vpack.c.b16 %v3560, %v3552
    %v3985 = vpack.c.b16 %v3561, %v3553
    %v3986 = vpack.c.b16 %v3562, %v3554
    %v3987 = vpack.c.b16 %v3563, %v3555
    %v3988 = vpack.c.b16 %v3564, %v3556
    %v3989 = vpack.c.b16 %v3573, %v3565
    %v3990 = vpack.c.b16 %v3574, %v3566
    %v3991 = vpack.c.b16 %v3575, %v3567
    %v3992 = vpack.c.b16 %v3576, %v3568
    %v3993 = vpack.c.b16 %v3577, %v3569
    %v3994 = vpack.c.b16 %v3578, %v3570
    %v3995 = vpack.c.b16 %v3579, %v3571
    %v3996 = vpack.c.b16 %v3580, %v3572
    %v3997 = vpack.c.b16 %v3589, %v3581
    %v3998 = vpack.c.b16 %v3590, %v3582
    %v3999 = vpack.c.b16 %v3591, %v3583
    %v4000 = vpack.c.b16 %v3592, %v3584
    %v4001 = vpack.c.b16 %v3593, %v3585
    %v4002 = vpack.c.b16 %v3594, %v3586
    %v4003 = vpack.c.b16 %v3595, %v3587
    %v4004 = vpack.c.b16 %v3596, %v3588
    %v4005 = vpack.c.b16 %v3605, %v3597
    %v4006 = vpack.c.b16 %v3606, %v3598
    %v4007 = vpack.c.b16 %v3607, %v3599
    %v4008 = vpack.c.b16 %v3608, %v3600
    %v4009 = vpack.c.b16 %v3609, %v3601
    %v4010 = vpack.c.b16 %v3610, %v3602
    %v4011 = vpack.c.b16 %v3611, %v3603
    %v4012 = vpack.c.b16 %v3612, %v3604
    %v4013 = vpack.c.b16 %v3621, %v3613
    %v4014 = vpack.c.b16 %v3622, %v3614
    %v4015 = vpack.c.b16 %v3623, %v3615
    %v4016 = vpack.c.b16 %v3624, %v3616
    %v4017 = vpack.c.b16 %v3625, %v3617
    %v4018 = vpack.c.b16 %v3626, %v3618
    %v4019 = vpack.c.b16 %v3627, %v3619
    %v4020 = vpack.c.b16 %v3628, %v3620
    %v4021 = vpack.c.b16 %v3637, %v3629
    %v4022 = vpack.c.b16 %v3638, %v3630
    %v4023 = vpack.c.b16 %v3639, %v3631
    %v4024 = vpack.c.b16 %v3640, %v3632
    %v4025 = vpack.c.b16 %v3641, %v3633
    %v4026 = vpack.c.b16 %v3642, %v3634
    %v4027 = vpack.c.b16 %v3643, %v3635
    %v4028 = vpack.c.b16 %v3644, %v3636
    %v4029 = vpack.c.b16 %v3653, %v3645
    %v4030 = vpack.c.b16 %v3654, %v3646
    %v4031 = vpack.c.b16 %v3655, %v3647
    %v4032 = vpack.c.b16 %v3656, %v3648
    %v4033 = vpack.c.b16 %v3657, %v3649
    %v4034 = vpack.c.b16 %v3658, %v3650
    %v4035 = vpack.c.b16 %v3659, %v3651
    %v4036 = vpack.c.b16 %v3660, %v3652
    %v4037 = vpack.c.b16 %v3669, %v3661
    %v4038 = vpack.c.b16 %v3670, %v3662
    %v4039 = vpack.c.b16 %v3671, %v3663
    %v4040 = vpack.c.b16 %v3672, %v3664
    %v4041 = vpack.c.b16 %v3673, %v3665
    %v4042 = vpack.c.b16 %v3674, %v3666
    %v4043 = vpack.c.b16 %v3675, %v3667
    %v4044 = vpack.c.b16 %v3676, %v3668
    %v4045 = vpack.c.b16 %v3685, %v3677
    %v4046 = vpack.c.b16 %v3686, %v3678
    %v4047 = vpack.c.b16 %v3687, %v3679
    %v4048 = vpack.c.b16 %v3688, %v3680
    %v4049 = vpack.c.b16 %v3689, %v3681
    %v4050 = vpack.c.b16 %v3690, %v3682
    %v4051 = vpack.c.b16 %v3691, %v3683
    %v4052 = vpack.c.b16 %v3692, %v3684
    %v4053 = vpack.c.b16 %v3701, %v3693
    %v4054 = vpack.c.b16 %v3702, %v3694
    %v4055 = vpack.c.b16 %v3703, %v3695
    %v4056 = vpack.c.b16 %v3704, %v3696
    %v4057 = vpack.c.b16 %v3705, %v3697
    %v4058 = vpack.c.b16 %v3706, %v3698
    %v4059 = vpack.c.b16 %v3707, %v3699
    %v4060 = vpack.c.b16 %v3708, %v3700
    %v4061 = vpack.c.b16 %v3717, %v3709
    %v4062 = vpack.c.b16 %v3718, %v3710
    %v4063 = vpack.c.b16 %v3719, %v3711
    %v4064 = vpack.c.b16 %v3720, %v3712
    %v4065 = vpack.c.b16 %v3721, %v3713
    %v4066 = vpack.c.b16 %v3722, %v3714
    %v4067 = vpack.c.b16 %v3723, %v3715
    %v4068 = vpack.c.b16 %v3724, %v3716
    %v4069 = vpack.c.b16 %v3733, %v3725
    %v4070 = vpack.c.b16 %v3734, %v3726
    %v4071 = vpack.c.b16 %v3735, %v3727
    %v4072 = vpack.c.b16 %v3736, %v3728
    %v4073 = vpack.c.b16 %v3737, %v3729
    %v4074 = vpack.c.b16 %v3738, %v3730
    %v4075 = vpack.c.b16 %v3739, %v3731
    %v4076 = vpack.c.b16 %v3740, %v3732
    %v4077 = vpack.c.b16 %v3749, %v3741
    %v4078 = vpack.c.b16 %v3750, %v3742
    %v4079 = vpack.c.b16 %v3751, %v3743
    %v4080 = vpack.c.b16 %v3752, %v3744
    %v4081 = vpack.c.b16 %v3753, %v3745
    %v4082 = vpack.c.b16 %v3754, %v3746
    %v4083 = vpack.c.b16 %v3755, %v3747
    %v4084 = vpack.c.b16 %v3756, %v3748
    %v4085 = vpack.c.b16 %v3765, %v3757
    %v4086 = vpack.c.b16 %v3766, %v3758
    %v4087 = vpack.c.b16 %v3767, %v3759
    %v4088 = vpack.c.b16 %v3768, %v3760
    %v4089 = vpack.c.b16 %v3769, %v3761
    %v4090 = vpack.c.b16 %v3770, %v3762
    %v4091 = vpack.c.b16 %v3771, %v3763
    %v4092 = vpack.c.b16 %v3772, %v3764
    %v4093 = vpack.c.b16 %v3781, %v3773
    %v4094 = vpack.c.b16 %v3782, %v3774
    %v4095 = vpack.c.b16 %v3783, %v3775
    %v4096 = vpack.c.b16 %v3784, %v3776
    %v4097 = vpack.c.b16 %v3785, %v3777
    %v4098 = vpack.c.b16 %v3786, %v3778
    %v4099 = vpack.c.b16 %v3787, %v3779
    %v4100 = vpack.c.b16 %v3788, %v3780
    %v4101 = vpack.c.b16 %v3797, %v3789
    %v4102 = vpack.c.b16 %v3798, %v3790
    %v4103 = vpack.c.b16 %v3799, %v3791
    %v4104 = vpack.c.b16 %v3800, %v3792
    %v4105 = vpack.c.b16 %v3801, %v3793
    %v4106 = vpack.c.b16 %v3802, %v3794
    %v4107 = vpack.c.b16 %v3803, %v3795
    %v4108 = vpack.c.b16 %v3804, %v3796
    %v4109 = vpack.c.b16 %v3813, %v3805
    %v4110 = vpack.c.b16 %v3814, %v3806
    %v4111 = vpack.c.b16 %v3815, %v3807
    %v4112 = vpack.c.b16 %v3816, %v3808
    %v4113 = vpack.c.b16 %v3817, %v3809
    %v4114 = vpack.c.b16 %v3818, %v3810
    %v4115 = vpack.c.b16 %v3819, %v3811
    %v4116 = vpack.c.b16 %v3820, %v3812
    %v4117 = vpack.c.b16 %v3829, %v3821
    %v4118 = vpack.c.b16 %v3830, %v3822
    %v4119 = vpack.c.b16 %v3831, %v3823
    %v4120 = vpack.c.b16 %v3832, %v3824
    %v4121 = vpack.c.b16 %v3833, %v3825
    %v4122 = vpack.c.b16 %v3834, %v3826
    %v4123 = vpack.c.b16 %v3835, %v3827
    %v4124 = vpack.c.b16 %v3836, %v3828
    %v4125 = vpack.c.b16 %v3845, %v3837
    %v4126 = vpack.c.b16 %v3846, %v3838
    %v4127 = vpack.c.b16 %v3847, %v3839
    %v4128 = vpack.c.b16 %v3848, %v3840
    %v4129 = vpack.c.b16 %v3849, %v3841
    %v4130 = vpack.c.b16 %v3850, %v3842
    %v4131 = vpack.c.b16 %v3851, %v3843
    %v4132 = vpack.c.b16 %v3852, %v3844
    %v4133 = vpack.c.b16 %v3861, %v3853
    %v4134 = vpack.c.b16 %v3862, %v3854
    %v4135 = vpack.c.b16 %v3863, %v3855
    %v4136 = vpack.c.b16 %v3864, %v3856
    %v4137 = vpack.c.b16 %v3865, %v3857
    %v4138 = vpack.c.b16 %v3866, %v3858
    %v4139 = vpack.c.b16 %v3867, %v3859
    %v4140 = vpack.c.b16 %v3868, %v3860
    %v4141 = vpack.c.b16 %v3877, %v3869
    %v4142 = vpack.c.b16 %v3878, %v3870
    %v4143 = vpack.c.b16 %v3879, %v3871
    %v4144 = vpack.c.b16 %v3880, %v3872
    %v4145 = vpack.c.b16 %v3881, %v3873
    %v4146 = vpack.c.b16 %v3882, %v3874
    %v4147 = vpack.c.b16 %v3883, %v3875
    %v4148 = vpack.c.b16 %v3884, %v3876
    %v4149 = vpack.c.b16 %v3893, %v3885
    %v4150 = vpack.c.b16 %v3894, %v3886
    %v4151 = vpack.c.b16 %v3895, %v3887
    %v4152 = vpack.c.b16 %v3896, %v3888
    %v4153 = vpack.c.b16 %v3897, %v3889
    %v4154 = vpack.c.b16 %v3898, %v3890
    %v4155 = vpack.c.b16 %v3899, %v3891
    %v4156 = vpack.c.b16 %v3900, %v3892
    %4413 = vmatprep.subr.bf16.mxu0 %v3902
    %4414 = vmatpush1.bf16.msra.mxu0 %v3901
    %4415 = vmatprep.subr.bf16.mxu0 %v3910
    %4416 = vmatpush1.bf16.msra.mxu0 %v3909
    %4417 = vmatprep.subr.bf16.mxu0 %v3918
    %4418 = vmatpush1.bf16.msra.mxu0 %v3917
    %4419 = vmatprep.subr.bf16.mxu0 %v3926
    %4420 = vmatpush1.bf16.msra.mxu0 %v3925
    %4421 = vmatprep.subr.bf16.mxu0 %v3934
    %4422 = vmatpush1.bf16.msra.mxu0 %v3933
    %4423 = vmatprep.subr.bf16.mxu0 %v3942
    %4424 = vmatpush1.bf16.msra.mxu0 %v3941
    %4425 = vmatprep.subr.bf16.mxu0 %v3950
    %4426 = vmatpush1.bf16.msra.mxu0 %v3949
    %4427 = vmatprep.subr.bf16.mxu0 %v3958
    %4428 = vmatpush1.bf16.msra.mxu0 %v3957
    %4429 = vmatprep.subr.bf16.mxu0 %v3966
    %4430 = vmatpush1.bf16.msra.mxu0 %v3965
    %4431 = vmatprep.subr.bf16.mxu0 %v3974
    %4432 = vmatpush1.bf16.msra.mxu0 %v3973
    %4433 = vmatprep.subr.bf16.mxu0 %v3982
    %4434 = vmatpush1.bf16.msra.mxu0 %v3981
    %4435 = vmatprep.subr.bf16.mxu0 %v3990
    %4436 = vmatpush1.bf16.msra.mxu0 %v3989
    %4437 = vmatprep.subr.bf16.mxu0 %v3998
    %4438 = vmatpush1.bf16.msra.mxu0 %v3997
    %4439 = vmatprep.subr.bf16.mxu0 %v4006
    %4440 = vmatpush1.bf16.msra.mxu0 %v4005
    %4441 = vmatprep.subr.bf16.mxu0 %v4014
    %4442 = vmatpush1.bf16.msra.mxu0 %v4013
    %4443 = vmatprep.subr.bf16.mxu0 %v4022
    %4444 = vmatpush1.bf16.msra.mxu0 %v4021
    %4445 = vmatprep.mubr.bf16.mxu0 %v2832
    %4446 = vmatmul.mubr.bf16.gmra.mrb[0].mxu0 %v2831
    %v4447 = vpop.f32.mrb[0].mxu0
    %v4448 = vadd.f32 %v3096, %v4447
    %v4449 = vpop.f32.mrb[0].mxu0
    %v4450 = vadd.f32 %v3100, %v4449
    %v4451 = vpop.f32.mrb[0].mxu0
    %v4452 = vpop.f32.mrb[0].mxu0
    %4453 = vdwg.mxu0
    %4454 = vmatprep.subr.bf16.mxu0 %v4030
    %4455 = vmatpush1.bf16.msra.mxu0 %v4029
    %4456 = vmatprep.subr.bf16.mxu0 %v4038
    %4457 = vmatpush1.bf16.msra.mxu0 %v4037
    %4458 = vmatprep.subr.bf16.mxu0 %v4046
    %4459 = vmatpush1.bf16.msra.mxu0 %v4045
    %4460 = vmatprep.subr.bf16.mxu0 %v4054
    %4461 = vmatpush1.bf16.msra.mxu0 %v4053
    %4462 = vmatprep.subr.bf16.mxu0 %v4062
    %4463 = vmatpush1.bf16.msra.mxu0 %v4061
    %4464 = vmatprep.subr.bf16.mxu0 %v4070
    %4465 = vmatpush1.bf16.msra.mxu0 %v4069
    %4466 = vmatprep.subr.bf16.mxu0 %v4078
    %4467 = vmatpush1.bf16.msra.mxu0 %v4077
    %4468 = vmatprep.subr.bf16.mxu0 %v4086
    %4469 = vmatpush1.bf16.msra.mxu0 %v4085
    %4470 = vmatprep.subr.bf16.mxu0 %v4094
    %4471 = vmatpush1.bf16.msra.mxu0 %v4093
    %4472 = vmatprep.subr.bf16.mxu0 %v4102
    %4473 = vmatpush1.bf16.msra.mxu0 %v4101
    %4474 = vmatprep.subr.bf16.mxu0 %v4110
    %4475 = vmatpush1.bf16.msra.mxu0 %v4109
    %4476 = vmatprep.subr.bf16.mxu0 %v4118
    %4477 = vmatpush1.bf16.msra.mxu0 %v4117
    %4478 = vmatprep.subr.bf16.mxu0 %v4126
    %4479 = vmatpush1.bf16.msra.mxu0 %v4125
    %4480 = vmatprep.subr.bf16.mxu0 %v4134
    %4481 = vmatpush1.bf16.msra.mxu0 %v4133
    %4482 = vmatprep.subr.bf16.mxu0 %v4142
    %4483 = vmatpush1.bf16.msra.mxu0 %v4141
    %4484 = vmatprep.subr.bf16.mxu0 %v4150
    %4485 = vmatpush1.bf16.msra.mxu0 %v4149
    %4486 = vmatprep.mubr.bf16.mxu0 %v2834
    %4487 = vmatmul.mubr.bf16.gmra.mrb[0].mxu0 %v2833
    %v4488 = vpop.f32.mrb[0].mxu0
    %v4489 = vadd.f32 %v4448, %v4488
    %v4490 = vpop.f32.mrb[0].mxu0
    %v4491 = vadd.f32 %v4450, %v4490
    %v4492 = vpop.f32.mrb[0].mxu0
    %v4493 = vpop.f32.mrb[0].mxu0
    %4494 = vdwg.mxu0
    %4495 = vmatprep.subr.bf16.mxu0 %v3904
    %4496 = vmatpush1.bf16.msra.mxu0 %v3903
    %4497 = vmatprep.subr.bf16.mxu0 %v3912
    %4498 = vmatpush1.bf16.msra.mxu0 %v3911
    %4499 = vmatprep.subr.bf16.mxu0 %v3920
    %4500 = vmatpush1.bf16.msra.mxu0 %v3919
    %4501 = vmatprep.subr.bf16.mxu0 %v3928
    %4502 = vmatpush1.bf16.msra.mxu0 %v3927
    %4503 = vmatprep.subr.bf16.mxu0 %v3936
    %4504 = vmatpush1.bf16.msra.mxu0 %v3935
    %4505 = vmatprep.subr.bf16.mxu0 %v3944
    %4506 = vmatpush1.bf16.msra.mxu0 %v3943
    %4507 = vmatprep.subr.bf16.mxu0 %v3952
    %4508 = vmatpush1.bf16.msra.mxu0 %v3951
    %4509 = vmatprep.subr.bf16.mxu0 %v3960
    %4510 = vmatpush1.bf16.msra.mxu0 %v3959
    %4511 = vmatprep.subr.bf16.mxu0 %v3968
    %4512 = vmatpush1.bf16.msra.mxu0 %v3967
    %4513 = vmatprep.subr.bf16.mxu0 %v3976
    %4514 = vmatpush1.bf16.msra.mxu0 %v3975
    %4515 = vmatprep.subr.bf16.mxu0 %v3984
    %4516 = vmatpush1.bf16.msra.mxu0 %v3983
    %4517 = vmatprep.subr.bf16.mxu0 %v3992
    %4518 = vmatpush1.bf16.msra.mxu0 %v3991
    %4519 = vmatprep.subr.bf16.mxu0 %v4000
    %4520 = vmatpush1.bf16.msra.mxu0 %v3999
    %4521 = vmatprep.subr.bf16.mxu0 %v4008
    %4522 = vmatpush1.bf16.msra.mxu0 %v4007
    %4523 = vmatprep.subr.bf16.mxu0 %v4016
    %4524 = vmatpush1.bf16.msra.mxu0 %v4015
    %4525 = vmatprep.subr.bf16.mxu0 %v4024
    %4526 = vmatpush1.bf16.msra.mxu0 %v4023
    %4527 = vmatprep.mubr.bf16.mxu0 %v2832
    %4528 = vmatmul.mubr.bf16.gmra.mrb[0].mxu0 %v2831
    %v4529 = vpop.f32.mrb[0].mxu0
    %v4530 = vadd.f32 %v3104, %v4529
    %v4531 = vpop.f32.mrb[0].mxu0
    %v4532 = vadd.f32 %v3108, %v4531
    %v4533 = vpop.f32.mrb[0].mxu0
    %v4534 = vpop.f32.mrb[0].mxu0
    %4535 = vdwg.mxu0
    %4536 = vmatprep.subr.bf16.mxu0 %v4032
    %4537 = vmatpush1.bf16.msra.mxu0 %v4031
    %4538 = vmatprep.subr.bf16.mxu0 %v4040
    %4539 = vmatpush1.bf16.msra.mxu0 %v4039
    %4540 = vmatprep.subr.bf16.mxu0 %v4048
    %4541 = vmatpush1.bf16.msra.mxu0 %v4047
    %4542 = vmatprep.subr.bf16.mxu0 %v4056
    %4543 = vmatpush1.bf16.msra.mxu0 %v4055
    %4544 = vmatprep.subr.bf16.mxu0 %v4064
    %4545 = vmatpush1.bf16.msra.mxu0 %v4063
    %4546 = vmatprep.subr.bf16.mxu0 %v4072
    %4547 = vmatpush1.bf16.msra.mxu0 %v4071
    %4548 = vmatprep.subr.bf16.mxu0 %v4080
    %4549 = vmatpush1.bf16.msra.mxu0 %v4079
    %4550 = vmatprep.subr.bf16.mxu0 %v4088
    %4551 = vmatpush1.bf16.msra.mxu0 %v4087
    %4552 = vmatprep.subr.bf16.mxu0 %v4096
    %4553 = vmatpush1.bf16.msra.mxu0 %v4095
    %4554 = vmatprep.subr.bf16.mxu0 %v4104
    %4555 = vmatpush1.bf16.msra.mxu0 %v4103
    %4556 = vmatprep.subr.bf16.mxu0 %v4112
    %4557 = vmatpush1.bf16.msra.mxu0 %v4111
    %4558 = vmatprep.subr.bf16.mxu0 %v4120
    %4559 = vmatpush1.bf16.msra.mxu0 %v4119
    %4560 = vmatprep.subr.bf16.mxu0 %v4128
    %4561 = vmatpush1.bf16.msra.mxu0 %v4127
    %4562 = vmatprep.subr.bf16.mxu0 %v4136
    %4563 = vmatpush1.bf16.msra.mxu0 %v4135
    %4564 = vmatprep.subr.bf16.mxu0 %v4144
    %4565 = vmatpush1.bf16.msra.mxu0 %v4143
    %4566 = vmatprep.subr.bf16.mxu0 %v4152
    %4567 = vmatpush1.bf16.msra.mxu0 %v4151
    %4568 = vmatprep.mubr.bf16.mxu0 %v2834
    %4569 = vmatmul.mubr.bf16.gmra.mrb[0].mxu0 %v2833
    %v4570 = vpop.f32.mrb[0].mxu0
    %v4571 = vadd.f32 %v4530, %v4570
    %v4572 = vpop.f32.mrb[0].mxu0
    %v4573 = vadd.f32 %v4532, %v4572
    %v4574 = vpop.f32.mrb[0].mxu0
    %v4575 = vpop.f32.mrb[0].mxu0
    %4576 = vdwg.mxu0
    %4577 = vmatprep.subr.bf16.mxu0 %v3906
    %4578 = vmatpush1.bf16.msra.mxu0 %v3905
    %4579 = vmatprep.subr.bf16.mxu0 %v3914
    %4580 = vmatpush1.bf16.msra.mxu0 %v3913
    %4581 = vmatprep.subr.bf16.mxu0 %v3922
    %4582 = vmatpush1.bf16.msra.mxu0 %v3921
    %4583 = vmatprep.subr.bf16.mxu0 %v3930
    %4584 = vmatpush1.bf16.msra.mxu0 %v3929
    %4585 = vmatprep.subr.bf16.mxu0 %v3938
    %4586 = vmatpush1.bf16.msra.mxu0 %v3937
    %4587 = vmatprep.subr.bf16.mxu0 %v3946
    %4588 = vmatpush1.bf16.msra.mxu0 %v3945
    %4589 = vmatprep.subr.bf16.mxu0 %v3954
    %4590 = vmatpush1.bf16.msra.mxu0 %v3953
    %4591 = vmatprep.subr.bf16.mxu0 %v3962
    %4592 = vmatpush1.bf16.msra.mxu0 %v3961
    %4593 = vmatprep.subr.bf16.mxu0 %v3970
    %4594 = vmatpush1.bf16.msra.mxu0 %v3969
    %4595 = vmatprep.subr.bf16.mxu0 %v3978
    %4596 = vmatpush1.bf16.msra.mxu0 %v3977
    %4597 = vmatprep.subr.bf16.mxu0 %v3986
    %4598 = vmatpush1.bf16.msra.mxu0 %v3985
    %4599 = vmatprep.subr.bf16.mxu0 %v3994
    %4600 = vmatpush1.bf16.msra.mxu0 %v3993
    %4601 = vmatprep.subr.bf16.mxu0 %v4002
    %4602 = vmatpush1.bf16.msra.mxu0 %v4001
    %4603 = vmatprep.subr.bf16.mxu0 %v4010
    %4604 = vmatpush1.bf16.msra.mxu0 %v4009
    %4605 = vmatprep.subr.bf16.mxu0 %v4018
    %4606 = vmatpush1.bf16.msra.mxu0 %v4017
    %4607 = vmatprep.subr.bf16.mxu0 %v4026
    %4608 = vmatpush1.bf16.msra.mxu0 %v4025
    %4609 = vmatprep.mubr.bf16.mxu0 %v2832
    %4610 = vmatmul.mubr.bf16.gmra.mrb[0].mxu0 %v2831
    %v4611 = vpop.f32.mrb[0].mxu0
    %v4612 = vadd.f32 %v3112, %v4611
    %v4613 = vpop.f32.mrb[0].mxu0
    %v4614 = vadd.f32 %v3116, %v4613
    %v4615 = vpop.f32.mrb[0].mxu0
    %v4616 = vpop.f32.mrb[0].mxu0
    %4617 = vdwg.mxu0
    %4618 = vmatprep.subr.bf16.mxu0 %v4034
    %4619 = vmatpush1.bf16.msra.mxu0 %v4033
    %4620 = vmatprep.subr.bf16.mxu0 %v4042
    %4621 = vmatpush1.bf16.msra.mxu0 %v4041
    %4622 = vmatprep.subr.bf16.mxu0 %v4050
    %4623 = vmatpush1.bf16.msra.mxu0 %v4049
    %4624 = vmatprep.subr.bf16.mxu0 %v4058
    %4625 = vmatpush1.bf16.msra.mxu0 %v4057
    %4626 = vmatprep.subr.bf16.mxu0 %v4066
    %4627 = vmatpush1.bf16.msra.mxu0 %v4065
    %4628 = vmatprep.subr.bf16.mxu0 %v4074
    %4629 = vmatpush1.bf16.msra.mxu0 %v4073
    %4630 = vmatprep.subr.bf16.mxu0 %v4082
    %4631 = vmatpush1.bf16.msra.mxu0 %v4081
    %4632 = vmatprep.subr.bf16.mxu0 %v4090
    %4633 = vmatpush1.bf16.msra.mxu0 %v4089
    %4634 = vmatprep.subr.bf16.mxu0 %v4098
    %4635 = vmatpush1.bf16.msra.mxu0 %v4097
    %4636 = vmatprep.subr.bf16.mxu0 %v4106
    %4637 = vmatpush1.bf16.msra.mxu0 %v4105
    %4638 = vmatprep.subr.bf16.mxu0 %v4114
    %4639 = vmatpush1.bf16.msra.mxu0 %v4113
    %4640 = vmatprep.subr.bf16.mxu0 %v4122
    %4641 = vmatpush1.bf16.msra.mxu0 %v4121
    %4642 = vmatprep.subr.bf16.mxu0 %v4130
    %4643 = vmatpush1.bf16.msra.mxu0 %v4129
    %4644 = vmatprep.subr.bf16.mxu0 %v4138
    %4645 = vmatpush1.bf16.msra.mxu0 %v4137
    %4646 = vmatprep.subr.bf16.mxu0 %v4146
    %4647 = vmatpush1.bf16.msra.mxu0 %v4145
    %4648 = vmatprep.subr.bf16.mxu0 %v4154
    %4649 = vmatpush1.bf16.msra.mxu0 %v4153
    %4650 = vmatprep.mubr.bf16.mxu0 %v2834
    %4651 = vmatmul.mubr.bf16.gmra.mrb[0].mxu0 %v2833
    %v4652 = vpop.f32.mrb[0].mxu0
    %v4653 = vadd.f32 %v4612, %v4652
    %v4654 = vpop.f32.mrb[0].mxu0
    %v4655 = vadd.f32 %v4614, %v4654
    %v4656 = vpop.f32.mrb[0].mxu0
    %v4657 = vpop.f32.mrb[0].mxu0
    %4658 = vdwg.mxu0
    %4659 = vmatprep.subr.bf16.mxu0 %v3908
    %4660 = vmatpush1.bf16.msra.mxu0 %v3907
    %4661 = vmatprep.subr.bf16.mxu0 %v3916
    %4662 = vmatpush1.bf16.msra.mxu0 %v3915
    %4663 = vmatprep.subr.bf16.mxu0 %v3924
    %4664 = vmatpush1.bf16.msra.mxu0 %v3923
    %4665 = vmatprep.subr.bf16.mxu0 %v3932
    %4666 = vmatpush1.bf16.msra.mxu0 %v3931
    %4667 = vmatprep.subr.bf16.mxu0 %v3940
    %4668 = vmatpush1.bf16.msra.mxu0 %v3939
    %4669 = vmatprep.subr.bf16.mxu0 %v3948
    %4670 = vmatpush1.bf16.msra.mxu0 %v3947
    %4671 = vmatprep.subr.bf16.mxu0 %v3956
    %4672 = vmatpush1.bf16.msra.mxu0 %v3955
    %4673 = vmatprep.subr.bf16.mxu0 %v3964
    %4674 = vmatpush1.bf16.msra.mxu0 %v3963
    %4675 = vmatprep.subr.bf16.mxu0 %v3972
    %4676 = vmatpush1.bf16.msra.mxu0 %v3971
    %4677 = vmatprep.subr.bf16.mxu0 %v3980
    %4678 = vmatpush1.bf16.msra.mxu0 %v3979
    %4679 = vmatprep.subr.bf16.mxu0 %v3988
    %4680 = vmatpush1.bf16.msra.mxu0 %v3987
    %4681 = vmatprep.subr.bf16.mxu0 %v3996
    %4682 = vmatpush1.bf16.msra.mxu0 %v3995
    %4683 = vmatprep.subr.bf16.mxu0 %v4004
    %4684 = vmatpush1.bf16.msra.mxu0 %v4003
    %4685 = vmatprep.subr.bf16.mxu0 %v4012
    %4686 = vmatpush1.bf16.msra.mxu0 %v4011
    %4687 = vmatprep.subr.bf16.mxu0 %v4020
    %4688 = vmatpush1.bf16.msra.mxu0 %v4019
    %4689 = vmatprep.subr.bf16.mxu0 %v4028
    %4690 = vmatpush1.bf16.msra.mxu0 %v4027
    %4691 = vmatprep.mubr.bf16.mxu0 %v2832
    %4692 = vmatmul.mubr.bf16.gmra.mrb[0].mxu0 %v2831
    %v4693 = vpop.f32.mrb[0].mxu0
    %v4694 = vadd.f32 %v3120, %v4693
    %v4695 = vpop.f32.mrb[0].mxu0
    %v4696 = vadd.f32 %v3124, %v4695
    %v4697 = vpop.f32.mrb[0].mxu0
    %v4698 = vpop.f32.mrb[0].mxu0
    %4699 = vdwg.mxu0
    %4700 = vmatprep.subr.bf16.mxu0 %v4036
    %4701 = vmatpush1.bf16.msra.mxu0 %v4035
    %4702 = vmatprep.subr.bf16.mxu0 %v4044
    %4703 = vmatpush1.bf16.msra.mxu0 %v4043
    %4704 = vmatprep.subr.bf16.mxu0 %v4052
    %4705 = vmatpush1.bf16.msra.mxu0 %v4051
    %4706 = vmatprep.subr.bf16.mxu0 %v4060
    %4707 = vmatpush1.bf16.msra.mxu0 %v4059
    %4708 = vmatprep.subr.bf16.mxu0 %v4068
    %4709 = vmatpush1.bf16.msra.mxu0 %v4067
    %4710 = vmatprep.subr.bf16.mxu0 %v4076
    %4711 = vmatpush1.bf16.msra.mxu0 %v4075
    %4712 = vmatprep.subr.bf16.mxu0 %v4084
    %4713 = vmatpush1.bf16.msra.mxu0 %v4083
    %4714 = vmatprep.subr.bf16.mxu0 %v4092
    %4715 = vmatpush1.bf16.msra.mxu0 %v4091
    %4716 = vmatprep.subr.bf16.mxu0 %v4100
    %4717 = vmatpush1.bf16.msra.mxu0 %v4099
    %4718 = vmatprep.subr.bf16.mxu0 %v4108
    %4719 = vmatpush1.bf16.msra.mxu0 %v4107
    %4720 = vmatprep.subr.bf16.mxu0 %v4116
    %4721 = vmatpush1.bf16.msra.mxu0 %v4115
    %4722 = vmatprep.subr.bf16.mxu0 %v4124
    %4723 = vmatpush1.bf16.msra.mxu0 %v4123
    %4724 = vmatprep.subr.bf16.mxu0 %v4132
    %4725 = vmatpush1.bf16.msra.mxu0 %v4131
    %4726 = vmatprep.subr.bf16.mxu0 %v4140
    %4727 = vmatpush1.bf16.msra.mxu0 %v4139
    %4728 = vmatprep.subr.bf16.mxu0 %v4148
    %4729 = vmatpush1.bf16.msra.mxu0 %v4147
    %4730 = vmatprep.subr.bf16.mxu0 %v4156
    %4731 = vmatpush1.bf16.msra.mxu0 %v4155
    %4732 = vmatprep.mubr.bf16.mxu0 %v2834
    %4733 = vmatmul.mubr.bf16.gmra.mrb[0].mxu0 %v2833
    %v4734 = vpop.f32.mrb[0].mxu0
    %v4735 = vadd.f32 %v4694, %v4734
    %v4736 = vpop.f32.mrb[0].mxu0
    %v4737 = vadd.f32 %v4696, %v4736
    %v4738 = vpop.f32.mrb[0].mxu0
    %v4739 = vpop.f32.mrb[0].mxu0
    %4740 = vdwg.mxu0
    %v4741 = vsub.f32 0.0, %v4489
    %v4742 = vsub.f32 0.0, %v4491
    %v4743 = vsub.f32 0.0, %v4571
    %v4744 = vsub.f32 0.0, %v4573
    %v4745 = vsub.f32 0.0, %v4653
    %v4746 = vsub.f32 0.0, %v4655
    %v4747 = vsub.f32 0.0, %v4735
    %v4748 = vsub.f32 0.0, %v4737
    %v4749 = vmul.f32 %v4741, 1.442695
    %v4750 = vpow.pop %v4749
    %v4751 = vmul.f32 %v4742, 1.442695
    %v4752 = vpow.pop %v4751
    %v4753 = vmul.f32 %v4743, 1.442695
    %v4754 = vpow.pop %v4753
    %v4755 = vmul.f32 %v4744, 1.442695
    %v4756 = vpow.pop %v4755
    %v4757 = vmul.f32 %v4745, 1.442695
    %v4758 = vpow.pop %v4757
    %v4759 = vmul.f32 %v4746, 1.442695
    %v4760 = vpow.pop %v4759
    %v4761 = vmul.f32 %v4747, 1.442695
    %v4762 = vpow.pop %v4761
    %v4763 = vmul.f32 %v4748, 1.442695
    %v4764 = vpow.pop %v4763
    %v4765 = vadd.f32 %v4750, 1.0
    %v4766 = vadd.f32 %v4752, 1.0
    %v4767 = vadd.f32 %v4754, 1.0
    %v4768 = vadd.f32 %v4756, 1.0
    %v4769 = vadd.f32 %v4758, 1.0
    %v4770 = vadd.f32 %v4760, 1.0
    %v4771 = vadd.f32 %v4762, 1.0
    %v4772 = vadd.f32 %v4764, 1.0
    %v4773 = vrcp.pop %v4765
    %v4774 = vrcp.pop %v4766
    %v4775 = vrcp.pop %v4767
    %v4776 = vrcp.pop %v4768
    %v4777 = vrcp.pop %v4769
    %v4778 = vrcp.pop %v4770
    %v4779 = vrcp.pop %v4771
    %v4780 = vrcp.pop %v4772
    %4781 = vst [vmem:[#allocation7] sm:$0xff] %v4773
    %4782 = vst [vmem:[#allocation7 + $0x8] sm:$0xff] %v4774
    %4783 = vst [vmem:[#allocation7 + $0x10] sm:$0xff] %v4775
    %4784 = vst [vmem:[#allocation7 + $0x18] sm:$0xff] %v4776
    %4785 = vst [vmem:[#allocation7 + $0x20] sm:$0xff] %v4777
    %4786 = vst [vmem:[#allocation7 + $0x28] sm:$0xff] %v4778
    %4787 = vst [vmem:[#allocation7 + $0x30] sm:$0xff] %v4779
    %4788 = vst [vmem:[#allocation7 + $0x38] sm:$0xff] %v4780
    %4789 = vst [vmem:[#allocation8] sm:$0xff] %v2420
    %4790 = vst [vmem:[#allocation10] sm:$0xff] %v2499
    // Predicated region
    $region74: #{vae_forward.1} parent=1 // pred_check
      _
    $region75: #{vae_forward.1} parent=1 // pred_check_branch
      %4792 = sbr.rel (0) target = $region77
    $region76: #{vae_forward.1} parent=1 // pred_region
      %s4794 = ssub.s32 1024, 1024
      %4795 = vsyncadd [#allocation4], %s4794
      %s4797 = sshll.u32 [#allocation7], 4
      %s4798 = int_to_ptr.vmem [resolvable:$true] %s4797
      %4800 = dma.vmem_to_hbm [thread:$0]  %s4798, 1024, %s16, [#allocation4]
    $region77: #{vae_forward.1} parent=1 // pred_fallthru
      _
    // Predicated region
    $region78: #{vae_forward.1} parent=1 // pred_check
      _
    $region79: #{vae_forward.1} parent=1 // pred_check_branch
      %4802 = sbr.rel (0) target = $region81
    $region80: #{vae_forward.1} parent=1 // pred_region
      %s4804 = ssub.s32 128, 128
      %4805 = vsyncadd [#allocation9], %s4804
      %s4807 = sshll.u32 [#allocation8], 4
      %s4808 = int_to_ptr.vmem [resolvable:$true] %s4807
      %4810 = dma.vmem_to_hbm [thread:$0]  %s4808, 128, %s17, [#allocation9]
    $region81: #{vae_forward.1} parent=1 // pred_fallthru
      _
    // Predicated region
    $region82: #{vae_forward.1} parent=1 // pred_check
      _
    $region83: #{vae_forward.1} parent=1 // pred_check_branch
      %4812 = sbr.rel (0) target = $region85
    $region84: #{vae_forward.1} parent=1 // pred_region
      %s4814 = ssub.s32 128, 128
      %4815 = vsyncadd [#allocation9], %s4814
      %s4817 = sshll.u32 [#allocation10], 4
      %s4818 = int_to_ptr.vmem [resolvable:$true] %s4817
      %4820 = dma.vmem_to_hbm [thread:$0]  %s4818, 128, %s18, [#allocation9]
    $region85: #{vae_forward.1} parent=1 // pred_fallthru
      _
    // Predicated region
    $region86: #{vae_forward.1} parent=1 // pred_check
      _
    $region87: #{vae_forward.1} parent=1 // pred_check_branch
      %4822 = sbr.rel (0) target = $region89
    $region88: #{vae_forward.1} parent=1 // pred_region
      %4823 = dma.done [#allocation4], 1024
    $region89: #{vae_forward.1} parent=1 // pred_fallthru
      _
    // Predicated region
    $region90: #{vae_forward.1} parent=1 // pred_check
      _
    $region91: #{vae_forward.1} parent=1 // pred_check_branch
      %4825 = sbr.rel (0) target = $region93
    $region92: #{vae_forward.1} parent=1 // pred_region
      %4826 = dma.done [#allocation9], 128
    $region93: #{vae_forward.1} parent=1 // pred_fallthru
      _
    // Predicated region
    $region94: #{vae_forward.1} parent=1 // pred_check
      _
    $region95: #{vae_forward.1} parent=1 // pred_check_branch
      %4828 = sbr.rel (0) target = $region97
    $region96: #{vae_forward.1} parent=1 // pred_region
      %4829 = dma.done [#allocation9], 128
    $region97: #{vae_forward.1} parent=1 // pred_fallthru
      _
    %4830 = vsyncpa [#allocation3], 1
    %4831 = vsyncpa [#allocation6], 1
    %4832 = vsyncpa [#allocation4], 1
    %4833 = vsyncpa [#allocation9], 1

</llo_original>
